<compile_context>
chip_gen: v7x
topology: tpu7x:2x2x1
jax: 0.10.0
libtpu: 0.0.40
codegen_flags: <defaults>
</compile_context>

<pallas_src>
import jax
import jax.numpy as jnp
import numpy as np
from jax import lax
from jax.experimental import pallas as pl
from jax.experimental.pallas import tpu as pltpu

# Static problem sizes. H0=3, W0=80 yields exactly the 300-feature flatten the
# module's Linear(300, 200) requires: 20 ch * 1 * 15 = 300.
N_BATCH, CIN, H0, W0 = 2, 1, 3, 80
K1, C1 = 5, 50            # conv1: (1,5) valid, 1 -> 50
K2 = 3                    # conv2: (1,3) same,  50 -> 50
K3, C3 = 5, 40            # conv3: (1,5) valid, 50 -> 40
K4, C4 = 3, 20            # conv4: (1,3) valid, 40 -> 20
W1 = W0 - (K1 - 1)                 # 76
WP1 = (W1 - 1) // 2 + 1            # 38  (pool-1 width)
HP1 = (H0 - 1) // 2 + 1            # 2
W3 = WP1 - (K3 - 1)                # 34
WP2 = (W3 - 1) // 2 + 1            # 17  (pool-2 width)
HP2 = (HP1 - 1) // 2 + 1           # 1
W4 = WP2 - (K4 - 1)                # 15
FEAT = C4 * HP2 * W4               # 300
FC1, FC2 = 200, 50
BN_EPS = 1e-5
SH_ROWS = WP1 + 10                 # conv2 shift scratch (8-aligned store @ row 8)
assert FEAT == 300


# -----------------------------------------------------------------------------
# Pallas kernel: one batch sample per grid step (only the live H row h=0).
# -----------------------------------------------------------------------------
def v1_backbone_kernel(x_ref, w1_ref, b1_ref, w2_ref, b2_ref, w3_ref, b3_ref,
                       w4_ref, b4_ref, wc_ref, bc_ref, out_ref,
                       sh_ref, p1_ref):
    f32 = jnp.float32

    # ---- conv1 (1,5) valid, 1->50, BN1 folded, ReLU.  Only the W positions
    # that survive MaxPool2d(1,2) are computed: even (a1_even) and odd
    # (a1_odd) output columns, via stride-2 reads of the input row.  Cin=1 so
    # each tap is an outer product on the VPU (no MXU needed).
    acc_e = jnp.zeros((WP1, C1), f32)
    acc_o = jnp.zeros((WP1, C1), f32)
    for dw in range(K1):
        tap = w1_ref[dw:dw + 1, :]                                     # (1,50)
        acc_e = acc_e + x_ref[pl.ds(dw, WP1, stride=2), :] * tap       # (38,1)*(1,50)
        acc_o = acc_o + x_ref[pl.ds(dw + 1, WP1, stride=2), :] * tap
    a1_even = jnp.maximum(acc_e + b1_ref[...], 0.0)                    # a1[2j]
    a1_odd = jnp.maximum(acc_o + b1_ref[...], 0.0)                     # a1[2j+1]

    # ---- conv2 (1,3) 'same', BN2 folded, ReLU, fused with MaxPool2d(1,2):
    #   pooled[j] = relu(a1[2j-1] @ W_t0 + a1[2j] @ W_t1 + a1[2j+1] @ W_t2 + b2)
    # with a1[-1] = 0 ('same' left pad).  The shifted odd phase comes from one
    # 8-aligned scratch store plus a 1-row-offset reload.
    sh_ref[7:8, :] = jnp.zeros((1, C1), f32)
    sh_ref[8:8 + WP1, :] = a1_odd
    a1_oddm = sh_ref[7:7 + WP1, :]                                     # [0, a1_odd[:-1]]
    p1 = jnp.dot(a1_oddm, w2_ref[0], preferred_element_type=f32)
    p1 = p1 + jnp.dot(a1_even, w2_ref[1], preferred_element_type=f32)
    p1 = p1 + jnp.dot(a1_odd, w2_ref[2], preferred_element_type=f32)
    p1 = jnp.maximum(p1 + b2_ref[...], 0.0)                            # (38,50)
    p1_ref[...] = p1

    # ---- conv3 (1,5) valid 50->40 + ReLU, fused with the second
    # MaxPool2d(1,2): only the even conv3 outputs are computed, via stride-2
    # reads of the pooled activation held in VMEM scratch.
    acc3 = jnp.zeros((WP2, C3), f32)
    for dw in range(K3):
        acc3 = acc3 + jnp.dot(p1_ref[pl.ds(dw, WP2, stride=2), :], w3_ref[dw],
                              preferred_element_type=f32)
    p2 = jnp.maximum(acc3 + b3_ref[...], 0.0)                          # (17,40)

    # ---- conv4 (1,3) valid 40->20 + ReLU.
    acc4 = jnp.zeros((W4, C4), f32)
    for dw in range(K4):
        acc4 = acc4 + jnp.dot(p2[dw:dw + W4, :], w4_ref[dw],
                              preferred_element_type=f32)
    h4 = jnp.maximum(acc4 + b4_ref[...], 0.0)                          # (15,20)

    # ---- flatten + Linear(300,200) + Linear(200,50): the two eval-mode
    # Linear layers are pre-folded into a single (W4, C4, 50) weight.
    # TODO(synk): a single (1,300)@(300,50) dot needs a sublane->lane flatten
    # of h4 (a reshape Mosaic may not lower); kept as a per-w accumulation.
    y = bc_ref[...]                                                    # (1,50)
    for w in range(W4):
        y = y + jnp.dot(h4[w:w + 1, :], wc_ref[w],
                        preferred_element_type=f32)
    out_ref[...] = y                                                   # (1,50)


# -----------------------------------------------------------------------------
# Parameter init (deterministic, PyTorch-format shapes) and kernel packing.
# -----------------------------------------------------------------------------
def init_params(key):
    ks = jax.random.split(key, 20)

    def conv_w(k, shape):
        fan_in = shape[1] * shape[2] * shape[3]
        return jax.random.normal(k, shape, jnp.float32) / jnp.sqrt(jnp.float32(fan_in))

    def lin_w(k, shape):
        return jax.random.normal(k, shape, jnp.float32) / jnp.sqrt(jnp.float32(shape[1]))

    p = {}
    p['w1'] = conv_w(ks[0], (C1, CIN, 1, K1)); p['b1'] = 0.1 * jax.random.normal(ks[1], (C1,))
    p['g1'] = 1.0 + 0.1 * jax.random.normal(ks[2], (C1,)); p['be1'] = 0.1 * jax.random.normal(ks[3], (C1,))
    p['m1'] = 0.1 * jax.random.normal(ks[4], (C1,)); p['v1'] = 0.5 + jax.random.uniform(ks[5], (C1,))
    p['w2'] = conv_w(ks[6], (C1, C1, 1, K2)); p['b2'] = 0.1 * jax.random.normal(ks[7], (C1,))
    p['g2'] = 1.0 + 0.1 * jax.random.normal(ks[8], (C1,)); p['be2'] = 0.1 * jax.random.normal(ks[9], (C1,))
    p['m2'] = 0.1 * jax.random.normal(ks[10], (C1,)); p['v2'] = 0.5 + jax.random.uniform(ks[11], (C1,))
    p['w3'] = conv_w(ks[12], (C3, C1, 1, K3)); p['b3'] = 0.1 * jax.random.normal(ks[13], (C3,))
    p['w4'] = conv_w(ks[14], (C4, C3, 1, K4)); p['b4'] = 0.1 * jax.random.normal(ks[15], (C4,))
    p['wf1'] = lin_w(ks[16], (FC1, FEAT)); p['bf1'] = 0.1 * jax.random.normal(ks[17], (FC1,))
    p['wf2'] = lin_w(ks[18], (FC2, FC1)); p['bf2'] = 0.1 * jax.random.normal(ks[19], (FC2,))
    return p


def prepare_kernel_params(p):
    """Fold BN into convs, fold fc1+fc2, re-layout for the (W, C) kernel tiles."""
    prec = lax.Precision.HIGHEST

    def fold(w, b, g, be, m, v):
        s = g / jnp.sqrt(v + BN_EPS)
        return w * s[:, None, None, None], (b - m) * s + be

    w1f, b1f = fold(p['w1'], p['b1'], p['g1'], p['be1'], p['m1'], p['v1'])
    w2f, b2f = fold(p['w2'], p['b2'], p['g2'], p['be2'], p['m2'], p['v2'])

    w1k = jnp.transpose(w1f[:, 0, 0, :], (1, 0))                    # (K1, C1)
    w2k = jnp.transpose(w2f[:, :, 0, :], (2, 1, 0))                 # (K2, C1, C1)
    w3k = jnp.transpose(p['w3'][:, :, 0, :], (2, 1, 0))             # (K3, C1, C3)
    w4k = jnp.transpose(p['w4'][:, :, 0, :], (2, 1, 0))             # (K4, C3, C4)

    # fc1+fc2 collapse (no nonlinearity / eval-mode dropout between them):
    #   y = flat @ (Wf2 @ Wf1).T + (Wf2 @ bf1 + bf2)
    wc = jnp.matmul(p['wf2'], p['wf1'], precision=prec)             # (FC2, 300)
    bc = jnp.matmul(p['wf2'], p['bf1'], precision=prec) + p['bf2']  # (FC2,)
    # PyTorch flatten order is (c, h=0, w); permute to (w, c, FC2) so the
    # kernel consumes the (W4, C4) feature tile directly.
    wck = jnp.transpose(wc.reshape(FC2, C4, HP2 * W4), (2, 1, 0))   # (W4, C4, FC2)

    return [w1k, b1f[None, :], w2k, b2f[None, :],
            w3k, p['b3'][None, :], w4k, p['b4'][None, :],
            wck, bc[None, :]]


# -----------------------------------------------------------------------------
# Wrapper around pallas_call.
# -----------------------------------------------------------------------------
def v1_backbone_forward(x_nchw, params):
    x = jnp.transpose(x_nchw.astype(jnp.float32), (0, 2, 3, 1))     # NCHW -> NHWC
    kparams = prepare_kernel_params(params)
    n = x.shape[0]

    def full_spec(a):
        nd = a.ndim

        def imap(i):
            return (0,) * nd
        return pl.BlockSpec(a.shape, imap)

    # Only H row 0 of each sample can influence the output (1-high conv
    # kernels + MaxPool2d(1,2) on H), so the BlockSpec DMAs just that row.
    in_specs = [pl.BlockSpec((None, None, W0, CIN), lambda i: (i, 0, 0, 0))]
    in_specs += [full_spec(a) for a in kparams]
    out_spec = pl.BlockSpec((None, 1, FC2), lambda i: (i, 0, 0))

    out = pl.pallas_call(
        v1_backbone_kernel,
        out_shape=jax.ShapeDtypeStruct((n, 1, FC2), jnp.float32),
        grid_spec=pltpu.PrefetchScalarGridSpec(
            num_scalar_prefetch=0,
            grid=(n,),
            in_specs=in_specs,
            out_specs=out_spec,
            scratch_shapes=[
                pltpu.VMEM((SH_ROWS, C1), jnp.float32),  # conv2 shifted-odd pad
                pltpu.VMEM((WP1, C1), jnp.float32),      # pooled conv2 output
            ],
        ),
        compiler_params=pltpu.CompilerParams(dimension_semantics=("parallel",)),
    )(x, *kparams)
    return out.reshape(n, FC2)


# -----------------------------------------------------------------------------
# Pure-JAX reference (eval-mode PyTorch semantics) for verification.
# -----------------------------------------------------------------------------
def reference_forward(x_nchw, p):
    dn = ('NCHW', 'OIHW', 'NCHW')
    prec = lax.Precision.HIGHEST

    def bn(y, g, be, m, v):
        s = g / jnp.sqrt(v + BN_EPS)
        return (y - m[None, :, None, None]) * s[None, :, None, None] + be[None, :, None, None]

    y = lax.conv_general_dilated(x_nchw, p['w1'], (1, 1), 'VALID',
                                 dimension_numbers=dn, precision=prec)
    y = jax.nn.relu(bn(y + p['b1'][None, :, None, None], p['g1'], p['be1'], p['m1'], p['v1']))
    y = lax.conv_general_dilated(y, p['w2'], (1, 1), [(0, 0), (1, 1)],
                                 dimension_numbers=dn, precision=prec)
    y = jax.nn.relu(bn(y + p['b2'][None, :, None, None], p['g2'], p['be2'], p['m2'], p['v2']))
    y = y[:, :, ::2, ::2]                                            # MaxPool2d(1,2)
    y = lax.conv_general_dilated(y, p['w3'], (1, 1), 'VALID',
                                 dimension_numbers=dn, precision=prec)
    y = jax.nn.relu(y + p['b3'][None, :, None, None])
    y = y[:, :, ::2, ::2]                                            # MaxPool2d(1,2)
    y = lax.conv_general_dilated(y, p['w4'], (1, 1), 'VALID',
                                 dimension_numbers=dn, precision=prec)
    y = jax.nn.relu(y + p['b4'][None, :, None, None])
    y = y.reshape(y.shape[0], -1)
    y = jnp.matmul(y, p['wf1'].T, precision=prec) + p['bf1'][None, :]
    y = jnp.matmul(y, p['wf2'].T, precision=prec) + p['bf2'][None, :]
    return y


if __name__ == "__main__":
    key = jax.random.PRNGKey(0)
    kx, kp = jax.random.split(key)
    params = init_params(kp)
    x = jax.random.normal(kx, (N_BATCH, CIN, H0, W0), jnp.float32)   # NCHW like PyTorch

    out = jax.block_until_ready(v1_backbone_forward(x, params))
    ref = jax.block_until_ready(reference_forward(x, params))

    assert out.shape == (N_BATCH, FC2), out.shape
    if not np.allclose(np.asarray(out), np.asarray(ref), rtol=2e-2, atol=2e-2):
        raise AssertionError("Pallas kernel output mismatches reference")
    print("KERNEL_OK")
</pallas_src>

<mosaic_0001>
module attributes {stable_mosaic.version = 11 : i64} {
  func.func @v1_backbone_kernel(%arg0: i32, %arg1: memref<1x1x80x1xf32, #tpu.memory_space<vmem>>, %arg2: memref<5x50xf32, #tpu.memory_space<vmem>>, %arg3: memref<1x50xf32, #tpu.memory_space<vmem>>, %arg4: memref<3x50x50xf32, #tpu.memory_space<vmem>>, %arg5: memref<1x50xf32, #tpu.memory_space<vmem>>, %arg6: memref<5x50x40xf32, #tpu.memory_space<vmem>>, %arg7: memref<1x40xf32, #tpu.memory_space<vmem>>, %arg8: memref<3x40x20xf32, #tpu.memory_space<vmem>>, %arg9: memref<1x20xf32, #tpu.memory_space<vmem>>, %arg10: memref<15x20x50xf32, #tpu.memory_space<vmem>>, %arg11: memref<1x50xf32, #tpu.memory_space<vmem>>, %arg12: memref<1x1x50xf32, #tpu.memory_space<vmem>>, %arg13: memref<48x50xf32, #tpu.memory_space<vmem>>, %arg14: memref<38x50xf32, #tpu.memory_space<vmem>>) attributes {dimension_semantics = [#tpu.dimension_semantics<parallel>], iteration_bounds = array<i64: 2>, scalar_prefetch = 0 : i64, scratch_operands = 2 : i64, tpu.core_type = #tpu.core_type<tc>, window_params = [{transform_indices = @transform_0, window_bounds = array<i64: 1, 1, 80, 1>}, {pipeline_mode = #tpu.pipeline_mode<synchronous>, transform_indices = @transform_1, window_bounds = array<i64: 5, 50>}, {pipeline_mode = #tpu.pipeline_mode<synchronous>, transform_indices = @transform_2, window_bounds = array<i64: 1, 50>}, {pipeline_mode = #tpu.pipeline_mode<synchronous>, transform_indices = @transform_3, window_bounds = array<i64: 3, 50, 50>}, {pipeline_mode = #tpu.pipeline_mode<synchronous>, transform_indices = @transform_4, window_bounds = array<i64: 1, 50>}, {pipeline_mode = #tpu.pipeline_mode<synchronous>, transform_indices = @transform_5, window_bounds = array<i64: 5, 50, 40>}, {pipeline_mode = #tpu.pipeline_mode<synchronous>, transform_indices = @transform_6, window_bounds = array<i64: 1, 40>}, {pipeline_mode = #tpu.pipeline_mode<synchronous>, transform_indices = @transform_7, window_bounds = array<i64: 3, 40, 20>}, {pipeline_mode = #tpu.pipeline_mode<synchronous>, transform_indices = @transform_8, window_bounds = array<i64: 1, 20>}, {pipeline_mode = #tpu.pipeline_mode<synchronous>, transform_indices = @transform_9, window_bounds = array<i64: 15, 20, 50>}, {pipeline_mode = #tpu.pipeline_mode<synchronous>, transform_indices = @transform_10, window_bounds = array<i64: 1, 50>}, {transform_indices = @transform_11, window_bounds = array<i64: 1, 1, 50>}]} {
    %cst = arith.constant 0.000000e+00 : f32
    %0 = vector.broadcast %cst : f32 to vector<38x50xf32>
    %cst_0 = arith.constant 0.000000e+00 : f32
    %1 = vector.broadcast %cst_0 : f32 to vector<38x50xf32>
    %c0 = arith.constant 0 : index
    %c0_1 = arith.constant 0 : index
    %2 = vector.load %arg2[%c0, %c0_1] : memref<5x50xf32, #tpu.memory_space<vmem>>, vector<1x50xf32>
    %c0_2 = arith.constant 0 : index
    %c0_3 = arith.constant 0 : index
    %c0_4 = arith.constant 0 : index
    %c0_5 = arith.constant 0 : index
    %3 = tpu.strided_load %arg1[%c0_2, %c0_3, %c0_4, %c0_5] {strides = array<i32: 1, 1, 2, 1>} : memref<1x1x80x1xf32, #tpu.memory_space<vmem>>, vector<1x1x38x1xf32>
    %4 = vector.shape_cast %3 : vector<1x1x38x1xf32> to vector<38x1xf32>
    %5 = vector.broadcast %4 : vector<38x1xf32> to vector<38x50xf32>
    %6 = vector.broadcast %2 : vector<1x50xf32> to vector<38x50xf32>
    %7 = arith.mulf %5, %6 : vector<38x50xf32>
    %8 = arith.addf %0, %7 : vector<38x50xf32>
    %c0_6 = arith.constant 0 : index
    %c0_7 = arith.constant 0 : index
    %c1 = arith.constant 1 : index
    %c0_8 = arith.constant 0 : index
    %9 = tpu.strided_load %arg1[%c0_6, %c0_7, %c1, %c0_8] {strides = array<i32: 1, 1, 2, 1>} : memref<1x1x80x1xf32, #tpu.memory_space<vmem>>, vector<1x1x38x1xf32>
    %10 = vector.shape_cast %9 : vector<1x1x38x1xf32> to vector<38x1xf32>
    %11 = vector.broadcast %10 : vector<38x1xf32> to vector<38x50xf32>
    %12 = vector.broadcast %2 : vector<1x50xf32> to vector<38x50xf32>
    %13 = arith.mulf %11, %12 : vector<38x50xf32>
    %14 = arith.addf %1, %13 : vector<38x50xf32>
    %c1_9 = arith.constant 1 : index
    %c0_10 = arith.constant 0 : index
    %15 = vector.load %arg2[%c1_9, %c0_10] : memref<5x50xf32, #tpu.memory_space<vmem>>, vector<1x50xf32>
    %c0_11 = arith.constant 0 : index
    %c0_12 = arith.constant 0 : index
    %c1_13 = arith.constant 1 : index
    %c0_14 = arith.constant 0 : index
    %16 = tpu.strided_load %arg1[%c0_11, %c0_12, %c1_13, %c0_14] {strides = array<i32: 1, 1, 2, 1>} : memref<1x1x80x1xf32, #tpu.memory_space<vmem>>, vector<1x1x38x1xf32>
    %17 = vector.shape_cast %16 : vector<1x1x38x1xf32> to vector<38x1xf32>
    %18 = vector.broadcast %17 : vector<38x1xf32> to vector<38x50xf32>
    %19 = vector.broadcast %15 : vector<1x50xf32> to vector<38x50xf32>
    %20 = arith.mulf %18, %19 : vector<38x50xf32>
    %21 = arith.addf %8, %20 : vector<38x50xf32>
    %c0_15 = arith.constant 0 : index
    %c0_16 = arith.constant 0 : index
    %c2 = arith.constant 2 : index
    %c0_17 = arith.constant 0 : index
    %22 = tpu.strided_load %arg1[%c0_15, %c0_16, %c2, %c0_17] {strides = array<i32: 1, 1, 2, 1>} : memref<1x1x80x1xf32, #tpu.memory_space<vmem>>, vector<1x1x38x1xf32>
    %23 = vector.shape_cast %22 : vector<1x1x38x1xf32> to vector<38x1xf32>
    %24 = vector.broadcast %23 : vector<38x1xf32> to vector<38x50xf32>
    %25 = vector.broadcast %15 : vector<1x50xf32> to vector<38x50xf32>
    %26 = arith.mulf %24, %25 : vector<38x50xf32>
    %27 = arith.addf %14, %26 : vector<38x50xf32>
    %c2_18 = arith.constant 2 : index
    %c0_19 = arith.constant 0 : index
    %28 = vector.load %arg2[%c2_18, %c0_19] : memref<5x50xf32, #tpu.memory_space<vmem>>, vector<1x50xf32>
    %c0_20 = arith.constant 0 : index
    %c0_21 = arith.constant 0 : index
    %c2_22 = arith.constant 2 : index
    %c0_23 = arith.constant 0 : index
    %29 = tpu.strided_load %arg1[%c0_20, %c0_21, %c2_22, %c0_23] {strides = array<i32: 1, 1, 2, 1>} : memref<1x1x80x1xf32, #tpu.memory_space<vmem>>, vector<1x1x38x1xf32>
    %30 = vector.shape_cast %29 : vector<1x1x38x1xf32> to vector<38x1xf32>
    %31 = vector.broadcast %30 : vector<38x1xf32> to vector<38x50xf32>
    %32 = vector.broadcast %28 : vector<1x50xf32> to vector<38x50xf32>
    %33 = arith.mulf %31, %32 : vector<38x50xf32>
    %34 = arith.addf %21, %33 : vector<38x50xf32>
    %c0_24 = arith.constant 0 : index
    %c0_25 = arith.constant 0 : index
    %c3 = arith.constant 3 : index
    %c0_26 = arith.constant 0 : index
    %35 = tpu.strided_load %arg1[%c0_24, %c0_25, %c3, %c0_26] {strides = array<i32: 1, 1, 2, 1>} : memref<1x1x80x1xf32, #tpu.memory_space<vmem>>, vector<1x1x38x1xf32>
    %36 = vector.shape_cast %35 : vector<1x1x38x1xf32> to vector<38x1xf32>
    %37 = vector.broadcast %36 : vector<38x1xf32> to vector<38x50xf32>
    %38 = vector.broadcast %28 : vector<1x50xf32> to vector<38x50xf32>
    %39 = arith.mulf %37, %38 : vector<38x50xf32>
    %40 = arith.addf %27, %39 : vector<38x50xf32>
    %c3_27 = arith.constant 3 : index
    %c0_28 = arith.constant 0 : index
    %41 = vector.load %arg2[%c3_27, %c0_28] : memref<5x50xf32, #tpu.memory_space<vmem>>, vector<1x50xf32>
    %c0_29 = arith.constant 0 : index
    %c0_30 = arith.constant 0 : index
    %c3_31 = arith.constant 3 : index
    %c0_32 = arith.constant 0 : index
    %42 = tpu.strided_load %arg1[%c0_29, %c0_30, %c3_31, %c0_32] {strides = array<i32: 1, 1, 2, 1>} : memref<1x1x80x1xf32, #tpu.memory_space<vmem>>, vector<1x1x38x1xf32>
    %43 = vector.shape_cast %42 : vector<1x1x38x1xf32> to vector<38x1xf32>
    %44 = vector.broadcast %43 : vector<38x1xf32> to vector<38x50xf32>
    %45 = vector.broadcast %41 : vector<1x50xf32> to vector<38x50xf32>
    %46 = arith.mulf %44, %45 : vector<38x50xf32>
    %47 = arith.addf %34, %46 : vector<38x50xf32>
    %c0_33 = arith.constant 0 : index
    %c0_34 = arith.constant 0 : index
    %c4 = arith.constant 4 : index
    %c0_35 = arith.constant 0 : index
    %48 = tpu.strided_load %arg1[%c0_33, %c0_34, %c4, %c0_35] {strides = array<i32: 1, 1, 2, 1>} : memref<1x1x80x1xf32, #tpu.memory_space<vmem>>, vector<1x1x38x1xf32>
    %49 = vector.shape_cast %48 : vector<1x1x38x1xf32> to vector<38x1xf32>
    %50 = vector.broadcast %49 : vector<38x1xf32> to vector<38x50xf32>
    %51 = vector.broadcast %41 : vector<1x50xf32> to vector<38x50xf32>
    %52 = arith.mulf %50, %51 : vector<38x50xf32>
    %53 = arith.addf %40, %52 : vector<38x50xf32>
    %c4_36 = arith.constant 4 : index
    %c0_37 = arith.constant 0 : index
    %54 = vector.load %arg2[%c4_36, %c0_37] : memref<5x50xf32, #tpu.memory_space<vmem>>, vector<1x50xf32>
    %c0_38 = arith.constant 0 : index
    %c0_39 = arith.constant 0 : index
    %c4_40 = arith.constant 4 : index
    %c0_41 = arith.constant 0 : index
    %55 = tpu.strided_load %arg1[%c0_38, %c0_39, %c4_40, %c0_41] {strides = array<i32: 1, 1, 2, 1>} : memref<1x1x80x1xf32, #tpu.memory_space<vmem>>, vector<1x1x38x1xf32>
    %56 = vector.shape_cast %55 : vector<1x1x38x1xf32> to vector<38x1xf32>
    %57 = vector.broadcast %56 : vector<38x1xf32> to vector<38x50xf32>
    %58 = vector.broadcast %54 : vector<1x50xf32> to vector<38x50xf32>
    %59 = arith.mulf %57, %58 : vector<38x50xf32>
    %60 = arith.addf %47, %59 : vector<38x50xf32>
    %c0_42 = arith.constant 0 : index
    %c0_43 = arith.constant 0 : index
    %c5 = arith.constant 5 : index
    %c0_44 = arith.constant 0 : index
    %61 = tpu.strided_load %arg1[%c0_42, %c0_43, %c5, %c0_44] {strides = array<i32: 1, 1, 2, 1>} : memref<1x1x80x1xf32, #tpu.memory_space<vmem>>, vector<1x1x38x1xf32>
    %62 = vector.shape_cast %61 : vector<1x1x38x1xf32> to vector<38x1xf32>
    %63 = vector.broadcast %62 : vector<38x1xf32> to vector<38x50xf32>
    %64 = vector.broadcast %54 : vector<1x50xf32> to vector<38x50xf32>
    %65 = arith.mulf %63, %64 : vector<38x50xf32>
    %66 = arith.addf %53, %65 : vector<38x50xf32>
    %c0_45 = arith.constant 0 : index
    %c0_46 = arith.constant 0 : index
    %67 = vector.load %arg3[%c0_45, %c0_46] : memref<1x50xf32, #tpu.memory_space<vmem>>, vector<1x50xf32>
    %68 = vector.broadcast %67 : vector<1x50xf32> to vector<38x50xf32>
    %69 = arith.addf %60, %68 : vector<38x50xf32>
    %cst_47 = arith.constant 0.000000e+00 : f32
    %70 = vector.broadcast %cst_47 : f32 to vector<38x50xf32>
    %71 = arith.maximumf %69, %70 : vector<38x50xf32>
    %c0_48 = arith.constant 0 : index
    %c0_49 = arith.constant 0 : index
    %72 = vector.load %arg3[%c0_48, %c0_49] : memref<1x50xf32, #tpu.memory_space<vmem>>, vector<1x50xf32>
    %73 = vector.broadcast %72 : vector<1x50xf32> to vector<38x50xf32>
    %74 = arith.addf %66, %73 : vector<38x50xf32>
    %cst_50 = arith.constant 0.000000e+00 : f32
    %75 = vector.broadcast %cst_50 : f32 to vector<38x50xf32>
    %76 = arith.maximumf %74, %75 : vector<38x50xf32>
    %cst_51 = arith.constant 0.000000e+00 : f32
    %77 = vector.broadcast %cst_51 : f32 to vector<1x50xf32>
    %c7 = arith.constant 7 : index
    %c0_52 = arith.constant 0 : index
    %78 = vector.load %arg13[%c7, %c0_52] : memref<48x50xf32, #tpu.memory_space<vmem>>, vector<1x50xf32>
    tpu.vector_store %arg13[%c7, %c0_52], %77 {strides = array<i32>} : memref<48x50xf32, #tpu.memory_space<vmem>>, vector<1x50xf32>,
    %c8 = arith.constant 8 : index
    %c0_53 = arith.constant 0 : index
    %79 = vector.load %arg13[%c8, %c0_53] : memref<48x50xf32, #tpu.memory_space<vmem>>, vector<38x50xf32>
    tpu.vector_store %arg13[%c8, %c0_53], %76 {strides = array<i32>} : memref<48x50xf32, #tpu.memory_space<vmem>>, vector<38x50xf32>,
    %c7_54 = arith.constant 7 : index
    %c0_55 = arith.constant 0 : index
    %80 = vector.load %arg13[%c7_54, %c0_55] : memref<48x50xf32, #tpu.memory_space<vmem>>, vector<38x50xf32>
    %c0_56 = arith.constant 0 : index
    %c0_57 = arith.constant 0 : index
    %c0_58 = arith.constant 0 : index
    %81 = vector.load %arg4[%c0_56, %c0_57, %c0_58] : memref<3x50x50xf32, #tpu.memory_space<vmem>>, vector<1x50x50xf32>
    %82 = vector.shape_cast %81 : vector<1x50x50xf32> to vector<50x50xf32>
    %cst_59 = arith.constant dense<0.000000e+00> : vector<38x50xf32>
    %83 = tpu.matmul %80, %82, %cst_59 {dimension_numbers = #tpu.dot_dimension_numbers<[1], [0], [0], [1], [0, 0, 1, 1], [], []>} : vector<38x50xf32>, vector<50x50xf32>, vector<38x50xf32> -> vector<38x50xf32>
    %c1_60 = arith.constant 1 : index
    %c0_61 = arith.constant 0 : index
    %c0_62 = arith.constant 0 : index
    %84 = vector.load %arg4[%c1_60, %c0_61, %c0_62] : memref<3x50x50xf32, #tpu.memory_space<vmem>>, vector<1x50x50xf32>
    %85 = vector.shape_cast %84 : vector<1x50x50xf32> to vector<50x50xf32>
    %cst_63 = arith.constant dense<0.000000e+00> : vector<38x50xf32>
    %86 = tpu.matmul %71, %85, %cst_63 {dimension_numbers = #tpu.dot_dimension_numbers<[1], [0], [0], [1], [0, 0, 1, 1], [], []>} : vector<38x50xf32>, vector<50x50xf32>, vector<38x50xf32> -> vector<38x50xf32>
    %87 = arith.addf %83, %86 : vector<38x50xf32>
    %c2_64 = arith.constant 2 : index
    %c0_65 = arith.constant 0 : index
    %c0_66 = arith.constant 0 : index
    %88 = vector.load %arg4[%c2_64, %c0_65, %c0_66] : memref<3x50x50xf32, #tpu.memory_space<vmem>>, vector<1x50x50xf32>
    %89 = vector.shape_cast %88 : vector<1x50x50xf32> to vector<50x50xf32>
    %cst_67 = arith.constant dense<0.000000e+00> : vector<38x50xf32>
    %90 = tpu.matmul %76, %89, %cst_67 {dimension_numbers = #tpu.dot_dimension_numbers<[1], [0], [0], [1], [0, 0, 1, 1], [], []>} : vector<38x50xf32>, vector<50x50xf32>, vector<38x50xf32> -> vector<38x50xf32>
    %91 = arith.addf %87, %90 : vector<38x50xf32>
    %c0_68 = arith.constant 0 : index
    %c0_69 = arith.constant 0 : index
    %92 = vector.load %arg5[%c0_68, %c0_69] : memref<1x50xf32, #tpu.memory_space<vmem>>, vector<1x50xf32>
    %93 = vector.broadcast %92 : vector<1x50xf32> to vector<38x50xf32>
    %94 = arith.addf %91, %93 : vector<38x50xf32>
    %cst_70 = arith.constant 0.000000e+00 : f32
    %95 = vector.broadcast %cst_70 : f32 to vector<38x50xf32>
    %96 = arith.maximumf %94, %95 : vector<38x50xf32>
    %c0_71 = arith.constant 0 : index
    %c0_72 = arith.constant 0 : index
    %97 = vector.load %arg14[%c0_71, %c0_72] : memref<38x50xf32, #tpu.memory_space<vmem>>, vector<38x50xf32>
    tpu.vector_store %arg14[%c0_71, %c0_72], %96 {strides = array<i32>} : memref<38x50xf32, #tpu.memory_space<vmem>>, vector<38x50xf32>,
    %cst_73 = arith.constant 0.000000e+00 : f32
    %98 = vector.broadcast %cst_73 : f32 to vector<17x40xf32>
    %c0_74 = arith.constant 0 : index
    %c0_75 = arith.constant 0 : index
    %99 = tpu.strided_load %arg14[%c0_74, %c0_75] {strides = array<i32: 2, 1>} : memref<38x50xf32, #tpu.memory_space<vmem>>, vector<17x50xf32>
    %c0_76 = arith.constant 0 : index
    %c0_77 = arith.constant 0 : index
    %c0_78 = arith.constant 0 : index
    %100 = vector.load %arg6[%c0_76, %c0_77, %c0_78] : memref<5x50x40xf32, #tpu.memory_space<vmem>>, vector<1x50x40xf32>
    %101 = vector.shape_cast %100 : vector<1x50x40xf32> to vector<50x40xf32>
    %cst_79 = arith.constant dense<0.000000e+00> : vector<17x40xf32>
    %102 = tpu.matmul %99, %101, %cst_79 {dimension_numbers = #tpu.dot_dimension_numbers<[1], [0], [0], [1], [0, 0, 1, 1], [], []>} : vector<17x50xf32>, vector<50x40xf32>, vector<17x40xf32> -> vector<17x40xf32>
    %103 = arith.addf %98, %102 : vector<17x40xf32>
    %c1_80 = arith.constant 1 : index
    %c0_81 = arith.constant 0 : index
    %104 = tpu.strided_load %arg14[%c1_80, %c0_81] {strides = array<i32: 2, 1>} : memref<38x50xf32, #tpu.memory_space<vmem>>, vector<17x50xf32>
    %c1_82 = arith.constant 1 : index
    %c0_83 = arith.constant 0 : index
    %c0_84 = arith.constant 0 : index
    %105 = vector.load %arg6[%c1_82, %c0_83, %c0_84] : memref<5x50x40xf32, #tpu.memory_space<vmem>>, vector<1x50x40xf32>
    %106 = vector.shape_cast %105 : vector<1x50x40xf32> to vector<50x40xf32>
    %cst_85 = arith.constant dense<0.000000e+00> : vector<17x40xf32>
    %107 = tpu.matmul %104, %106, %cst_85 {dimension_numbers = #tpu.dot_dimension_numbers<[1], [0], [0], [1], [0, 0, 1, 1], [], []>} : vector<17x50xf32>, vector<50x40xf32>, vector<17x40xf32> -> vector<17x40xf32>
    %108 = arith.addf %103, %107 : vector<17x40xf32>
    %c2_86 = arith.constant 2 : index
    %c0_87 = arith.constant 0 : index
    %109 = tpu.strided_load %arg14[%c2_86, %c0_87] {strides = array<i32: 2, 1>} : memref<38x50xf32, #tpu.memory_space<vmem>>, vector<17x50xf32>
    %c2_88 = arith.constant 2 : index
    %c0_89 = arith.constant 0 : index
    %c0_90 = arith.constant 0 : index
    %110 = vector.load %arg6[%c2_88, %c0_89, %c0_90] : memref<5x50x40xf32, #tpu.memory_space<vmem>>, vector<1x50x40xf32>
    %111 = vector.shape_cast %110 : vector<1x50x40xf32> to vector<50x40xf32>
    %cst_91 = arith.constant dense<0.000000e+00> : vector<17x40xf32>
    %112 = tpu.matmul %109, %111, %cst_91 {dimension_numbers = #tpu.dot_dimension_numbers<[1], [0], [0], [1], [0, 0, 1, 1], [], []>} : vector<17x50xf32>, vector<50x40xf32>, vector<17x40xf32> -> vector<17x40xf32>
    %113 = arith.addf %108, %112 : vector<17x40xf32>
    %c3_92 = arith.constant 3 : index
    %c0_93 = arith.constant 0 : index
    %114 = tpu.strided_load %arg14[%c3_92, %c0_93] {strides = array<i32: 2, 1>} : memref<38x50xf32, #tpu.memory_space<vmem>>, vector<17x50xf32>
    %c3_94 = arith.constant 3 : index
    %c0_95 = arith.constant 0 : index
    %c0_96 = arith.constant 0 : index
    %115 = vector.load %arg6[%c3_94, %c0_95, %c0_96] : memref<5x50x40xf32, #tpu.memory_space<vmem>>, vector<1x50x40xf32>
    %116 = vector.shape_cast %115 : vector<1x50x40xf32> to vector<50x40xf32>
    %cst_97 = arith.constant dense<0.000000e+00> : vector<17x40xf32>
    %117 = tpu.matmul %114, %116, %cst_97 {dimension_numbers = #tpu.dot_dimension_numbers<[1], [0], [0], [1], [0, 0, 1, 1], [], []>} : vector<17x50xf32>, vector<50x40xf32>, vector<17x40xf32> -> vector<17x40xf32>
    %118 = arith.addf %113, %117 : vector<17x40xf32>
    %c4_98 = arith.constant 4 : index
    %c0_99 = arith.constant 0 : index
    %119 = tpu.strided_load %arg14[%c4_98, %c0_99] {strides = array<i32: 2, 1>} : memref<38x50xf32, #tpu.memory_space<vmem>>, vector<17x50xf32>
    %c4_100 = arith.constant 4 : index
    %c0_101 = arith.constant 0 : index
    %c0_102 = arith.constant 0 : index
    %120 = vector.load %arg6[%c4_100, %c0_101, %c0_102] : memref<5x50x40xf32, #tpu.memory_space<vmem>>, vector<1x50x40xf32>
    %121 = vector.shape_cast %120 : vector<1x50x40xf32> to vector<50x40xf32>
    %cst_103 = arith.constant dense<0.000000e+00> : vector<17x40xf32>
    %122 = tpu.matmul %119, %121, %cst_103 {dimension_numbers = #tpu.dot_dimension_numbers<[1], [0], [0], [1], [0, 0, 1, 1], [], []>} : vector<17x50xf32>, vector<50x40xf32>, vector<17x40xf32> -> vector<17x40xf32>
    %123 = arith.addf %118, %122 : vector<17x40xf32>
    %c0_104 = arith.constant 0 : index
    %c0_105 = arith.constant 0 : index
    %124 = vector.load %arg7[%c0_104, %c0_105] : memref<1x40xf32, #tpu.memory_space<vmem>>, vector<1x40xf32>
    %125 = vector.broadcast %124 : vector<1x40xf32> to vector<17x40xf32>
    %126 = arith.addf %123, %125 : vector<17x40xf32>
    %cst_106 = arith.constant 0.000000e+00 : f32
    %127 = vector.broadcast %cst_106 : f32 to vector<17x40xf32>
    %128 = arith.maximumf %126, %127 : vector<17x40xf32>
    %cst_107 = arith.constant 0.000000e+00 : f32
    %129 = vector.broadcast %cst_107 : f32 to vector<15x20xf32>
    %130 = vector.extract_strided_slice %128 {offsets = [0, 0], sizes = [15, 40], strides = [1, 1]} : vector<17x40xf32> to vector<15x40xf32>
    %c0_108 = arith.constant 0 : index
    %c0_109 = arith.constant 0 : index
    %c0_110 = arith.constant 0 : index
    %131 = vector.load %arg8[%c0_108, %c0_109, %c0_110] : memref<3x40x20xf32, #tpu.memory_space<vmem>>, vector<1x40x20xf32>
    %132 = vector.shape_cast %131 : vector<1x40x20xf32> to vector<40x20xf32>
    %cst_111 = arith.constant dense<0.000000e+00> : vector<15x20xf32>
    %133 = tpu.matmul %130, %132, %cst_111 {dimension_numbers = #tpu.dot_dimension_numbers<[1], [0], [0], [1], [0, 0, 1, 1], [], []>} : vector<15x40xf32>, vector<40x20xf32>, vector<15x20xf32> -> vector<15x20xf32>
    %134 = arith.addf %129, %133 : vector<15x20xf32>
    %135 = vector.extract_strided_slice %128 {offsets = [1, 0], sizes = [15, 40], strides = [1, 1]} : vector<17x40xf32> to vector<15x40xf32>
    %c1_112 = arith.constant 1 : index
    %c0_113 = arith.constant 0 : index
    %c0_114 = arith.constant 0 : index
    %136 = vector.load %arg8[%c1_112, %c0_113, %c0_114] : memref<3x40x20xf32, #tpu.memory_space<vmem>>, vector<1x40x20xf32>
    %137 = vector.shape_cast %136 : vector<1x40x20xf32> to vector<40x20xf32>
    %cst_115 = arith.constant dense<0.000000e+00> : vector<15x20xf32>
    %138 = tpu.matmul %135, %137, %cst_115 {dimension_numbers = #tpu.dot_dimension_numbers<[1], [0], [0], [1], [0, 0, 1, 1], [], []>} : vector<15x40xf32>, vector<40x20xf32>, vector<15x20xf32> -> vector<15x20xf32>
    %139 = arith.addf %134, %138 : vector<15x20xf32>
    %140 = vector.extract_strided_slice %128 {offsets = [2, 0], sizes = [15, 40], strides = [1, 1]} : vector<17x40xf32> to vector<15x40xf32>
    %c2_116 = arith.constant 2 : index
    %c0_117 = arith.constant 0 : index
    %c0_118 = arith.constant 0 : index
    %141 = vector.load %arg8[%c2_116, %c0_117, %c0_118] : memref<3x40x20xf32, #tpu.memory_space<vmem>>, vector<1x40x20xf32>
    %142 = vector.shape_cast %141 : vector<1x40x20xf32> to vector<40x20xf32>
    %cst_119 = arith.constant dense<0.000000e+00> : vector<15x20xf32>
    %143 = tpu.matmul %140, %142, %cst_119 {dimension_numbers = #tpu.dot_dimension_numbers<[1], [0], [0], [1], [0, 0, 1, 1], [], []>} : vector<15x40xf32>, vector<40x20xf32>, vector<15x20xf32> -> vector<15x20xf32>
    %144 = arith.addf %139, %143 : vector<15x20xf32>
    %c0_120 = arith.constant 0 : index
    %c0_121 = arith.constant 0 : index
    %145 = vector.load %arg9[%c0_120, %c0_121] : memref<1x20xf32, #tpu.memory_space<vmem>>, vector<1x20xf32>
    %146 = vector.broadcast %145 : vector<1x20xf32> to vector<15x20xf32>
    %147 = arith.addf %144, %146 : vector<15x20xf32>
    %cst_122 = arith.constant 0.000000e+00 : f32
    %148 = vector.broadcast %cst_122 : f32 to vector<15x20xf32>
    %149 = arith.maximumf %147, %148 : vector<15x20xf32>
    %c0_123 = arith.constant 0 : index
    %c0_124 = arith.constant 0 : index
    %150 = vector.load %arg11[%c0_123, %c0_124] : memref<1x50xf32, #tpu.memory_space<vmem>>, vector<1x50xf32>
    %151 = vector.extract_strided_slice %149 {offsets = [0, 0], sizes = [1, 20], strides = [1, 1]} : vector<15x20xf32> to vector<1x20xf32>
    %c0_125 = arith.constant 0 : index
    %c0_126 = arith.constant 0 : index
    %c0_127 = arith.constant 0 : index
    %152 = vector.load %arg10[%c0_125, %c0_126, %c0_127] : memref<15x20x50xf32, #tpu.memory_space<vmem>>, vector<1x20x50xf32>
    %153 = vector.shape_cast %152 : vector<1x20x50xf32> to vector<20x50xf32>
    %cst_128 = arith.constant dense<0.000000e+00> : vector<1x50xf32>
    %154 = tpu.matmul %151, %153, %cst_128 {dimension_numbers = #tpu.dot_dimension_numbers<[1], [0], [0], [1], [0, 0, 1, 1], [], []>} : vector<1x20xf32>, vector<20x50xf32>, vector<1x50xf32> -> vector<1x50xf32>
    %155 = arith.addf %150, %154 : vector<1x50xf32>
    %156 = vector.extract_strided_slice %149 {offsets = [1, 0], sizes = [1, 20], strides = [1, 1]} : vector<15x20xf32> to vector<1x20xf32>
    %c1_129 = arith.constant 1 : index
    %c0_130 = arith.constant 0 : index
    %c0_131 = arith.constant 0 : index
    %157 = vector.load %arg10[%c1_129, %c0_130, %c0_131] : memref<15x20x50xf32, #tpu.memory_space<vmem>>, vector<1x20x50xf32>
    %158 = vector.shape_cast %157 : vector<1x20x50xf32> to vector<20x50xf32>
    %cst_132 = arith.constant dense<0.000000e+00> : vector<1x50xf32>
    %159 = tpu.matmul %156, %158, %cst_132 {dimension_numbers = #tpu.dot_dimension_numbers<[1], [0], [0], [1], [0, 0, 1, 1], [], []>} : vector<1x20xf32>, vector<20x50xf32>, vector<1x50xf32> -> vector<1x50xf32>
    %160 = arith.addf %155, %159 : vector<1x50xf32>
    %161 = vector.extract_strided_slice %149 {offsets = [2, 0], sizes = [1, 20], strides = [1, 1]} : vector<15x20xf32> to vector<1x20xf32>
    %c2_133 = arith.constant 2 : index
    %c0_134 = arith.constant 0 : index
    %c0_135 = arith.constant 0 : index
    %162 = vector.load %arg10[%c2_133, %c0_134, %c0_135] : memref<15x20x50xf32, #tpu.memory_space<vmem>>, vector<1x20x50xf32>
    %163 = vector.shape_cast %162 : vector<1x20x50xf32> to vector<20x50xf32>
    %cst_136 = arith.constant dense<0.000000e+00> : vector<1x50xf32>
    %164 = tpu.matmul %161, %163, %cst_136 {dimension_numbers = #tpu.dot_dimension_numbers<[1], [0], [0], [1], [0, 0, 1, 1], [], []>} : vector<1x20xf32>, vector<20x50xf32>, vector<1x50xf32> -> vector<1x50xf32>
    %165 = arith.addf %160, %164 : vector<1x50xf32>
    %166 = vector.extract_strided_slice %149 {offsets = [3, 0], sizes = [1, 20], strides = [1, 1]} : vector<15x20xf32> to vector<1x20xf32>
    %c3_137 = arith.constant 3 : index
    %c0_138 = arith.constant 0 : index
    %c0_139 = arith.constant 0 : index
    %167 = vector.load %arg10[%c3_137, %c0_138, %c0_139] : memref<15x20x50xf32, #tpu.memory_space<vmem>>, vector<1x20x50xf32>
    %168 = vector.shape_cast %167 : vector<1x20x50xf32> to vector<20x50xf32>
    %cst_140 = arith.constant dense<0.000000e+00> : vector<1x50xf32>
    %169 = tpu.matmul %166, %168, %cst_140 {dimension_numbers = #tpu.dot_dimension_numbers<[1], [0], [0], [1], [0, 0, 1, 1], [], []>} : vector<1x20xf32>, vector<20x50xf32>, vector<1x50xf32> -> vector<1x50xf32>
    %170 = arith.addf %165, %169 : vector<1x50xf32>
    %171 = vector.extract_strided_slice %149 {offsets = [4, 0], sizes = [1, 20], strides = [1, 1]} : vector<15x20xf32> to vector<1x20xf32>
    %c4_141 = arith.constant 4 : index
    %c0_142 = arith.constant 0 : index
    %c0_143 = arith.constant 0 : index
    %172 = vector.load %arg10[%c4_141, %c0_142, %c0_143] : memref<15x20x50xf32, #tpu.memory_space<vmem>>, vector<1x20x50xf32>
    %173 = vector.shape_cast %172 : vector<1x20x50xf32> to vector<20x50xf32>
    %cst_144 = arith.constant dense<0.000000e+00> : vector<1x50xf32>
    %174 = tpu.matmul %171, %173, %cst_144 {dimension_numbers = #tpu.dot_dimension_numbers<[1], [0], [0], [1], [0, 0, 1, 1], [], []>} : vector<1x20xf32>, vector<20x50xf32>, vector<1x50xf32> -> vector<1x50xf32>
    %175 = arith.addf %170, %174 : vector<1x50xf32>
    %176 = vector.extract_strided_slice %149 {offsets = [5, 0], sizes = [1, 20], strides = [1, 1]} : vector<15x20xf32> to vector<1x20xf32>
    %c5_145 = arith.constant 5 : index
    %c0_146 = arith.constant 0 : index
    %c0_147 = arith.constant 0 : index
    %177 = vector.load %arg10[%c5_145, %c0_146, %c0_147] : memref<15x20x50xf32, #tpu.memory_space<vmem>>, vector<1x20x50xf32>
    %178 = vector.shape_cast %177 : vector<1x20x50xf32> to vector<20x50xf32>
    %cst_148 = arith.constant dense<0.000000e+00> : vector<1x50xf32>
    %179 = tpu.matmul %176, %178, %cst_148 {dimension_numbers = #tpu.dot_dimension_numbers<[1], [0], [0], [1], [0, 0, 1, 1], [], []>} : vector<1x20xf32>, vector<20x50xf32>, vector<1x50xf32> -> vector<1x50xf32>
    %180 = arith.addf %175, %179 : vector<1x50xf32>
    %181 = vector.extract_strided_slice %149 {offsets = [6, 0], sizes = [1, 20], strides = [1, 1]} : vector<15x20xf32> to vector<1x20xf32>
    %c6 = arith.constant 6 : index
    %c0_149 = arith.constant 0 : index
    %c0_150 = arith.constant 0 : index
    %182 = vector.load %arg10[%c6, %c0_149, %c0_150] : memref<15x20x50xf32, #tpu.memory_space<vmem>>, vector<1x20x50xf32>
    %183 = vector.shape_cast %182 : vector<1x20x50xf32> to vector<20x50xf32>
    %cst_151 = arith.constant dense<0.000000e+00> : vector<1x50xf32>
    %184 = tpu.matmul %181, %183, %cst_151 {dimension_numbers = #tpu.dot_dimension_numbers<[1], [0], [0], [1], [0, 0, 1, 1], [], []>} : vector<1x20xf32>, vector<20x50xf32>, vector<1x50xf32> -> vector<1x50xf32>
    %185 = arith.addf %180, %184 : vector<1x50xf32>
    %186 = vector.extract_strided_slice %149 {offsets = [7, 0], sizes = [1, 20], strides = [1, 1]} : vector<15x20xf32> to vector<1x20xf32>
    %c7_152 = arith.constant 7 : index
    %c0_153 = arith.constant 0 : index
    %c0_154 = arith.constant 0 : index
    %187 = vector.load %arg10[%c7_152, %c0_153, %c0_154] : memref<15x20x50xf32, #tpu.memory_space<vmem>>, vector<1x20x50xf32>
    %188 = vector.shape_cast %187 : vector<1x20x50xf32> to vector<20x50xf32>
    %cst_155 = arith.constant dense<0.000000e+00> : vector<1x50xf32>
    %189 = tpu.matmul %186, %188, %cst_155 {dimension_numbers = #tpu.dot_dimension_numbers<[1], [0], [0], [1], [0, 0, 1, 1], [], []>} : vector<1x20xf32>, vector<20x50xf32>, vector<1x50xf32> -> vector<1x50xf32>
    %190 = arith.addf %185, %189 : vector<1x50xf32>
    %191 = vector.extract_strided_slice %149 {offsets = [8, 0], sizes = [1, 20], strides = [1, 1]} : vector<15x20xf32> to vector<1x20xf32>
    %c8_156 = arith.constant 8 : index
    %c0_157 = arith.constant 0 : index
    %c0_158 = arith.constant 0 : index
    %192 = vector.load %arg10[%c8_156, %c0_157, %c0_158] : memref<15x20x50xf32, #tpu.memory_space<vmem>>, vector<1x20x50xf32>
    %193 = vector.shape_cast %192 : vector<1x20x50xf32> to vector<20x50xf32>
    %cst_159 = arith.constant dense<0.000000e+00> : vector<1x50xf32>
    %194 = tpu.matmul %191, %193, %cst_159 {dimension_numbers = #tpu.dot_dimension_numbers<[1], [0], [0], [1], [0, 0, 1, 1], [], []>} : vector<1x20xf32>, vector<20x50xf32>, vector<1x50xf32> -> vector<1x50xf32>
    %195 = arith.addf %190, %194 : vector<1x50xf32>
    %196 = vector.extract_strided_slice %149 {offsets = [9, 0], sizes = [1, 20], strides = [1, 1]} : vector<15x20xf32> to vector<1x20xf32>
    %c9 = arith.constant 9 : index
    %c0_160 = arith.constant 0 : index
    %c0_161 = arith.constant 0 : index
    %197 = vector.load %arg10[%c9, %c0_160, %c0_161] : memref<15x20x50xf32, #tpu.memory_space<vmem>>, vector<1x20x50xf32>
    %198 = vector.shape_cast %197 : vector<1x20x50xf32> to vector<20x50xf32>
    %cst_162 = arith.constant dense<0.000000e+00> : vector<1x50xf32>
    %199 = tpu.matmul %196, %198, %cst_162 {dimension_numbers = #tpu.dot_dimension_numbers<[1], [0], [0], [1], [0, 0, 1, 1], [], []>} : vector<1x20xf32>, vector<20x50xf32>, vector<1x50xf32> -> vector<1x50xf32>
    %200 = arith.addf %195, %199 : vector<1x50xf32>
    %201 = vector.extract_strided_slice %149 {offsets = [10, 0], sizes = [1, 20], strides = [1, 1]} : vector<15x20xf32> to vector<1x20xf32>
    %c10 = arith.constant 10 : index
    %c0_163 = arith.constant 0 : index
    %c0_164 = arith.constant 0 : index
    %202 = vector.load %arg10[%c10, %c0_163, %c0_164] : memref<15x20x50xf32, #tpu.memory_space<vmem>>, vector<1x20x50xf32>
    %203 = vector.shape_cast %202 : vector<1x20x50xf32> to vector<20x50xf32>
    %cst_165 = arith.constant dense<0.000000e+00> : vector<1x50xf32>
    %204 = tpu.matmul %201, %203, %cst_165 {dimension_numbers = #tpu.dot_dimension_numbers<[1], [0], [0], [1], [0, 0, 1, 1], [], []>} : vector<1x20xf32>, vector<20x50xf32>, vector<1x50xf32> -> vector<1x50xf32>
    %205 = arith.addf %200, %204 : vector<1x50xf32>
    %206 = vector.extract_strided_slice %149 {offsets = [11, 0], sizes = [1, 20], strides = [1, 1]} : vector<15x20xf32> to vector<1x20xf32>
    %c11 = arith.constant 11 : index
    %c0_166 = arith.constant 0 : index
    %c0_167 = arith.constant 0 : index
    %207 = vector.load %arg10[%c11, %c0_166, %c0_167] : memref<15x20x50xf32, #tpu.memory_space<vmem>>, vector<1x20x50xf32>
    %208 = vector.shape_cast %207 : vector<1x20x50xf32> to vector<20x50xf32>
    %cst_168 = arith.constant dense<0.000000e+00> : vector<1x50xf32>
    %209 = tpu.matmul %206, %208, %cst_168 {dimension_numbers = #tpu.dot_dimension_numbers<[1], [0], [0], [1], [0, 0, 1, 1], [], []>} : vector<1x20xf32>, vector<20x50xf32>, vector<1x50xf32> -> vector<1x50xf32>
    %210 = arith.addf %205, %209 : vector<1x50xf32>
    %211 = vector.extract_strided_slice %149 {offsets = [12, 0], sizes = [1, 20], strides = [1, 1]} : vector<15x20xf32> to vector<1x20xf32>
    %c12 = arith.constant 12 : index
    %c0_169 = arith.constant 0 : index
    %c0_170 = arith.constant 0 : index
    %212 = vector.load %arg10[%c12, %c0_169, %c0_170] : memref<15x20x50xf32, #tpu.memory_space<vmem>>, vector<1x20x50xf32>
    %213 = vector.shape_cast %212 : vector<1x20x50xf32> to vector<20x50xf32>
    %cst_171 = arith.constant dense<0.000000e+00> : vector<1x50xf32>
    %214 = tpu.matmul %211, %213, %cst_171 {dimension_numbers = #tpu.dot_dimension_numbers<[1], [0], [0], [1], [0, 0, 1, 1], [], []>} : vector<1x20xf32>, vector<20x50xf32>, vector<1x50xf32> -> vector<1x50xf32>
    %215 = arith.addf %210, %214 : vector<1x50xf32>
    %216 = vector.extract_strided_slice %149 {offsets = [13, 0], sizes = [1, 20], strides = [1, 1]} : vector<15x20xf32> to vector<1x20xf32>
    %c13 = arith.constant 13 : index
    %c0_172 = arith.constant 0 : index
    %c0_173 = arith.constant 0 : index
    %217 = vector.load %arg10[%c13, %c0_172, %c0_173] : memref<15x20x50xf32, #tpu.memory_space<vmem>>, vector<1x20x50xf32>
    %218 = vector.shape_cast %217 : vector<1x20x50xf32> to vector<20x50xf32>
    %cst_174 = arith.constant dense<0.000000e+00> : vector<1x50xf32>
    %219 = tpu.matmul %216, %218, %cst_174 {dimension_numbers = #tpu.dot_dimension_numbers<[1], [0], [0], [1], [0, 0, 1, 1], [], []>} : vector<1x20xf32>, vector<20x50xf32>, vector<1x50xf32> -> vector<1x50xf32>
    %220 = arith.addf %215, %219 : vector<1x50xf32>
    %221 = vector.extract_strided_slice %149 {offsets = [14, 0], sizes = [1, 20], strides = [1, 1]} : vector<15x20xf32> to vector<1x20xf32>
    %c14 = arith.constant 14 : index
    %c0_175 = arith.constant 0 : index
    %c0_176 = arith.constant 0 : index
    %222 = vector.load %arg10[%c14, %c0_175, %c0_176] : memref<15x20x50xf32, #tpu.memory_space<vmem>>, vector<1x20x50xf32>
    %223 = vector.shape_cast %222 : vector<1x20x50xf32> to vector<20x50xf32>
    %cst_177 = arith.constant dense<0.000000e+00> : vector<1x50xf32>
    %224 = tpu.matmul %221, %223, %cst_177 {dimension_numbers = #tpu.dot_dimension_numbers<[1], [0], [0], [1], [0, 0, 1, 1], [], []>} : vector<1x20xf32>, vector<20x50xf32>, vector<1x50xf32> -> vector<1x50xf32>
    %225 = arith.addf %220, %224 : vector<1x50xf32>
    %c0_178 = arith.constant 0 : index
    %c0_179 = arith.constant 0 : index
    %c0_180 = arith.constant 0 : index
    %226 = vector.load %arg12[%c0_178, %c0_179, %c0_180] : memref<1x1x50xf32, #tpu.memory_space<vmem>>, vector<1x1x50xf32>
    %227 = vector.shape_cast %226 : vector<1x1x50xf32> to vector<1x50xf32>
    %228 = vector.shape_cast %225 : vector<1x50xf32> to vector<1x1x50xf32>
    tpu.vector_store %arg12[%c0_178, %c0_179, %c0_180], %228 {strides = array<i32>} : memref<1x1x50xf32, #tpu.memory_space<vmem>>, vector<1x1x50xf32>,
    return
  }
  func.func @transform_0(%arg0: i32) -> (i32, i32, i32, i32) {
    %c0_i32 = arith.constant 0 : i32
    %c0_i32_0 = arith.constant 0 : i32
    %c0_i32_1 = arith.constant 0 : i32
    %c0_i32_2 = arith.constant 0 : i32
    return %arg0, %c0_i32, %c0_i32_0, %c0_i32_1 : i32, i32, i32, i32
  }
  func.func @transform_1(%arg0: i32) -> (i32, i32) {
    %c0_i32 = arith.constant 0 : i32
    %c0_i32_0 = arith.constant 0 : i32
    %c0_i32_1 = arith.constant 0 : i32
    return %c0_i32, %c0_i32_0 : i32, i32
  }
  func.func @transform_2(%arg0: i32) -> (i32, i32) {
    %c0_i32 = arith.constant 0 : i32
    %c0_i32_0 = arith.constant 0 : i32
    %c0_i32_1 = arith.constant 0 : i32
    return %c0_i32, %c0_i32_0 : i32, i32
  }
  func.func @transform_3(%arg0: i32) -> (i32, i32, i32) {
    %c0_i32 = arith.constant 0 : i32
    %c0_i32_0 = arith.constant 0 : i32
    %c0_i32_1 = arith.constant 0 : i32
    %c0_i32_2 = arith.constant 0 : i32
    return %c0_i32, %c0_i32_0, %c0_i32_1 : i32, i32, i32
  }
  func.func @transform_4(%arg0: i32) -> (i32, i32) {
    %c0_i32 = arith.constant 0 : i32
    %c0_i32_0 = arith.constant 0 : i32
    %c0_i32_1 = arith.constant 0 : i32
    return %c0_i32, %c0_i32_0 : i32, i32
  }
  func.func @transform_5(%arg0: i32) -> (i32, i32, i32) {
    %c0_i32 = arith.constant 0 : i32
    %c0_i32_0 = arith.constant 0 : i32
    %c0_i32_1 = arith.constant 0 : i32
    %c0_i32_2 = arith.constant 0 : i32
    return %c0_i32, %c0_i32_0, %c0_i32_1 : i32, i32, i32
  }
  func.func @transform_6(%arg0: i32) -> (i32, i32) {
    %c0_i32 = arith.constant 0 : i32
    %c0_i32_0 = arith.constant 0 : i32
    %c0_i32_1 = arith.constant 0 : i32
    return %c0_i32, %c0_i32_0 : i32, i32
  }
  func.func @transform_7(%arg0: i32) -> (i32, i32, i32) {
    %c0_i32 = arith.constant 0 : i32
    %c0_i32_0 = arith.constant 0 : i32
    %c0_i32_1 = arith.constant 0 : i32
    %c0_i32_2 = arith.constant 0 : i32
    return %c0_i32, %c0_i32_0, %c0_i32_1 : i32, i32, i32
  }
  func.func @transform_8(%arg0: i32) -> (i32, i32) {
    %c0_i32 = arith.constant 0 : i32
    %c0_i32_0 = arith.constant 0 : i32
    %c0_i32_1 = arith.constant 0 : i32
    return %c0_i32, %c0_i32_0 : i32, i32
  }
  func.func @transform_9(%arg0: i32) -> (i32, i32, i32) {
    %c0_i32 = arith.constant 0 : i32
    %c0_i32_0 = arith.constant 0 : i32
    %c0_i32_1 = arith.constant 0 : i32
    %c0_i32_2 = arith.constant 0 : i32
    return %c0_i32, %c0_i32_0, %c0_i32_1 : i32, i32, i32
  }
  func.func @transform_10(%arg0: i32) -> (i32, i32) {
    %c0_i32 = arith.constant 0 : i32
    %c0_i32_0 = arith.constant 0 : i32
    %c0_i32_1 = arith.constant 0 : i32
    return %c0_i32, %c0_i32_0 : i32, i32
  }
  func.func @transform_11(%arg0: i32) -> (i32, i32, i32) {
    %c0_i32 = arith.constant 0 : i32
    %c0_i32_0 = arith.constant 0 : i32
    %c0_i32_1 = arith.constant 0 : i32
    return %arg0, %c0_i32, %c0_i32_0 : i32, i32, i32
  }
}

</mosaic_0001>

<llo_original>
// kernel: tpu_custom_call.1
$region0: #{tpu_custom_call.1}
  #allocation0 [shape = 'u32[]', space=smem, size = 0x4, offset = 0x4, fixed_abs, tag = 'smem constant byte address 0x4 - core index']
  #allocation1 [shape = 'u32[144,128]{1,0:T(1,128)}', space=vmem, size = 0x12000, scoped, tag = 'internal scratch']
  #allocation2 [shape = 'f32[48,50]{1,0:T(8,128)}', space=vmem, size = 0x6000, scoped, tag = 'scratch operand']
  #allocation3 [shape = 'f32[38,50]{1,0:T(8,128)}', space=vmem, size = 0x5000, scoped, tag = 'scratch operand']
  %s0 = inlined_call_operand.vmem [shape: f32[2,3,80,1], index: 0, kind: input, shape index: {}]
  %s1 = inlined_call_operand.vmem [shape: f32[5,50], index: 1, kind: input, shape index: {}]
  %s2 = inlined_call_operand.vmem [shape: f32[1,50], index: 2, kind: input, shape index: {}]
  %s3 = inlined_call_operand.vmem [shape: f32[3,50,50], index: 3, kind: input, shape index: {}]
  %s4 = inlined_call_operand.vmem [shape: f32[1,50], index: 4, kind: input, shape index: {}]
  %s5 = inlined_call_operand.vmem [shape: f32[5,50,40], index: 5, kind: input, shape index: {}]
  %s6 = inlined_call_operand.vmem [shape: f32[1,40], index: 6, kind: input, shape index: {}]
  %s7 = inlined_call_operand.vmem [shape: f32[3,40,20], index: 7, kind: input, shape index: {}]
  %s8 = inlined_call_operand.vmem [shape: f32[1,20], index: 8, kind: input, shape index: {}]
  %s9 = inlined_call_operand.vmem [shape: f32[15,20,50], index: 9, kind: input, shape index: {}]
  %s10 = inlined_call_operand.vmem [shape: f32[1,50], index: 10, kind: input, shape index: {}]
  %s11 = inlined_call_operand.hbm [shape: f32[2,1,50], index: 11, kind: output, shape index: {}]
  %s12 = sld [smem:[#allocation0]]
  $region77: #{tpu_custom_call.1} parent=0
    _
  %s14 = ssub.s32 1, %s12
  %s15 = scalar_select 0, %s14, %s12
  $region1: #{tpu_custom_call.1} parent=0
    #allocation4 [shape = 'u8[1024]{0}', space=vmem, size = 0x400, scoped, tag = 'output window, operand 0']
    #allocation5 [shape = 's32[2]{0}', space=sflag, size = 0x8, scoped, tag = 'scoped memory for tpu_custom_call.1']
    %16 = vsyncpa [#allocation5], 0
    %s17 = scalar_lea.sflag [#allocation5], 1
    %18 = vsyncpa %s17, 0
    loop: start=0, step=1, limit=4
    $region2: #{tpu_custom_call.1} parent=1 // loop_pre_header
      _
    $region3: #{tpu_custom_call.1} parent=1 // loop_header
      %s20 = sphi 0, %s24
      %p21 = scmp.ge.s32.totalorder %s20, 4
      %s30 = sphi 0, %s32
      %s33 = sphi 0, %s30
      %s34 = sphi 0, %s33
      %s50 = sphi 0, %s34
      %s54 = sphi 0, %s54
      %s56 = sphi 0, %s54
      %s57 = sphi 0, %s56
      %s71 = sphi 0, %s57
      %s75 = sphi 0, %s75
      %s77 = sphi 0, %s75
      %s78 = sphi 0, %s77
      %s92 = sphi 0, %s78
      %s96 = sphi 0, %s96
      %s98 = sphi 0, %s96
      %s99 = sphi 0, %s98
      %s113 = sphi 0, %s99
      %s117 = sphi 0, %s117
      %s119 = sphi 0, %s117
      %s120 = sphi 0, %s119
      %s134 = sphi 0, %s120
      %s138 = sphi 0, %s138
      %s140 = sphi 0, %s138
      %s141 = sphi 0, %s140
      %s155 = sphi 0, %s141
      %s159 = sphi 0, %s159
      %s161 = sphi 0, %s159
      %s162 = sphi 0, %s161
      %s176 = sphi 0, %s162
      %s180 = sphi 0, %s180
      %s182 = sphi 0, %s180
      %s183 = sphi 0, %s182
      %s197 = sphi 0, %s183
      %s201 = sphi 0, %s201
      %s203 = sphi 0, %s201
      %s204 = sphi 0, %s203
      %s218 = sphi 0, %s204
      %s222 = sphi 0, %s222
      %s224 = sphi 0, %s222
      %s225 = sphi 0, %s224
      %s239 = sphi 0, %s225
      %s243 = sphi 0, %s243
      %s245 = sphi 0, %s243
      %s246 = sphi 0, %s245
      %s260 = sphi 0, %s246
      %s266 = sphi 0, %s268
      %s269 = sphi 0, %s266
      %s270 = sphi 0, %s269
      %s286 = sphi 0, %s270
    $region4: #{tpu_custom_call.1} parent=1 // loop_header_branch
      %23 = sbr.rel (%p21) target = $region8
    $region5: #{tpu_custom_call.1} parent=1 // loop_body
      %s25 = ssub.s32 %s20, 1
      %s26 = ssub.s32 %s20, 2
      %s27 = sadd.s32 %s20, 1
      %s28 = ssub.s32 %s20, %s27
      %p29 = scmp.eq.s32.totalorder %s28, 0
      %s31 = sadd.s32 %s30, 1
      %s32 = scalar_select %p29, %s30, %s31
      %p35 = pneg %p29
      %p36 = scmp.eq.s32.totalorder %s20, 1
      %p37 = por %p35, %p36
      %p38 = scmp.ne.s32.totalorder %s30, %s33
      %p39 = scmp.eq.s32.totalorder %s20, 0
      %p40 = por %p38, %p39
      %p41 = scmp.ne.s32.totalorder %s30, %s33
      %p42 = scmp.eq.s32.totalorder %s25, 1
      %p43 = por %p41, %p42
      %p44 = scmp.ne.s32.totalorder %s33, %s34
      %p45 = scmp.eq.s32.totalorder %s25, 0
      %p46 = por %p44, %p45
      %p47 = scmp.ne.s32.totalorder %s33, %s34
      %p48 = scmp.eq.s32.totalorder %s26, 1
      %p49 = por %p47, %p48
      %p51 = scmp.ne.s32.totalorder %s34, %s50
      %p52 = scmp.eq.s32.totalorder %s26, 0
      %p53 = por %p51, %p52
      %s55 = sadd.s32 %s54, 1
      %p58 = scmp.eq.s32.totalorder %s20, 1
      %p59 = scmp.ne.s32.totalorder %s54, %s56
      %p60 = scmp.eq.s32.totalorder %s20, 0
      %p61 = por %p59, %p60
      %p62 = scmp.ne.s32.totalorder %s54, %s56
      %p63 = scmp.eq.s32.totalorder %s25, 1
      %p64 = por %p62, %p63
      %p65 = scmp.ne.s32.totalorder %s56, %s57
      %p66 = scmp.eq.s32.totalorder %s25, 0
      %p67 = por %p65, %p66
      %p68 = scmp.ne.s32.totalorder %s56, %s57
      %p69 = scmp.eq.s32.totalorder %s26, 1
      %p70 = por %p68, %p69
      %p72 = scmp.ne.s32.totalorder %s57, %s71
      %p73 = scmp.eq.s32.totalorder %s26, 0
      %p74 = por %p72, %p73
      %s76 = sadd.s32 %s75, 1
      %p79 = scmp.eq.s32.totalorder %s20, 1
      %p80 = scmp.ne.s32.totalorder %s75, %s77
      %p81 = scmp.eq.s32.totalorder %s20, 0
      %p82 = por %p80, %p81
      %p83 = scmp.ne.s32.totalorder %s75, %s77
      %p84 = scmp.eq.s32.totalorder %s25, 1
      %p85 = por %p83, %p84
      %p86 = scmp.ne.s32.totalorder %s77, %s78
      %p87 = scmp.eq.s32.totalorder %s25, 0
      %p88 = por %p86, %p87
      %p89 = scmp.ne.s32.totalorder %s77, %s78
      %p90 = scmp.eq.s32.totalorder %s26, 1
      %p91 = por %p89, %p90
      %p93 = scmp.ne.s32.totalorder %s78, %s92
      %p94 = scmp.eq.s32.totalorder %s26, 0
      %p95 = por %p93, %p94
      %s97 = sadd.s32 %s96, 1
      %p100 = scmp.eq.s32.totalorder %s20, 1
      %p101 = scmp.ne.s32.totalorder %s96, %s98
      %p102 = scmp.eq.s32.totalorder %s20, 0
      %p103 = por %p101, %p102
      %p104 = scmp.ne.s32.totalorder %s96, %s98
      %p105 = scmp.eq.s32.totalorder %s25, 1
      %p106 = por %p104, %p105
      %p107 = scmp.ne.s32.totalorder %s98, %s99
      %p108 = scmp.eq.s32.totalorder %s25, 0
      %p109 = por %p107, %p108
      %p110 = scmp.ne.s32.totalorder %s98, %s99
      %p111 = scmp.eq.s32.totalorder %s26, 1
      %p112 = por %p110, %p111
      %p114 = scmp.ne.s32.totalorder %s99, %s113
      %p115 = scmp.eq.s32.totalorder %s26, 0
      %p116 = por %p114, %p115
      %s118 = sadd.s32 %s117, 1
      %p121 = scmp.eq.s32.totalorder %s20, 1
      %p122 = scmp.ne.s32.totalorder %s117, %s119
      %p123 = scmp.eq.s32.totalorder %s20, 0
      %p124 = por %p122, %p123
      %p125 = scmp.ne.s32.totalorder %s117, %s119
      %p126 = scmp.eq.s32.totalorder %s25, 1
      %p127 = por %p125, %p126
      %p128 = scmp.ne.s32.totalorder %s119, %s120
      %p129 = scmp.eq.s32.totalorder %s25, 0
      %p130 = por %p128, %p129
      %p131 = scmp.ne.s32.totalorder %s119, %s120
      %p132 = scmp.eq.s32.totalorder %s26, 1
      %p133 = por %p131, %p132
      %p135 = scmp.ne.s32.totalorder %s120, %s134
      %p136 = scmp.eq.s32.totalorder %s26, 0
      %p137 = por %p135, %p136
      %s139 = sadd.s32 %s138, 1
      %p142 = scmp.eq.s32.totalorder %s20, 1
      %p143 = scmp.ne.s32.totalorder %s138, %s140
      %p144 = scmp.eq.s32.totalorder %s20, 0
      %p145 = por %p143, %p144
      %p146 = scmp.ne.s32.totalorder %s138, %s140
      %p147 = scmp.eq.s32.totalorder %s25, 1
      %p148 = por %p146, %p147
      %p149 = scmp.ne.s32.totalorder %s140, %s141
      %p150 = scmp.eq.s32.totalorder %s25, 0
      %p151 = por %p149, %p150
      %p152 = scmp.ne.s32.totalorder %s140, %s141
      %p153 = scmp.eq.s32.totalorder %s26, 1
      %p154 = por %p152, %p153
      %p156 = scmp.ne.s32.totalorder %s141, %s155
      %p157 = scmp.eq.s32.totalorder %s26, 0
      %p158 = por %p156, %p157
      %s160 = sadd.s32 %s159, 1
      %p163 = scmp.eq.s32.totalorder %s20, 1
      %p164 = scmp.ne.s32.totalorder %s159, %s161
      %p165 = scmp.eq.s32.totalorder %s20, 0
      %p166 = por %p164, %p165
      %p167 = scmp.ne.s32.totalorder %s159, %s161
      %p168 = scmp.eq.s32.totalorder %s25, 1
      %p169 = por %p167, %p168
      %p170 = scmp.ne.s32.totalorder %s161, %s162
      %p171 = scmp.eq.s32.totalorder %s25, 0
      %p172 = por %p170, %p171
      %p173 = scmp.ne.s32.totalorder %s161, %s162
      %p174 = scmp.eq.s32.totalorder %s26, 1
      %p175 = por %p173, %p174
      %p177 = scmp.ne.s32.totalorder %s162, %s176
      %p178 = scmp.eq.s32.totalorder %s26, 0
      %p179 = por %p177, %p178
      %s181 = sadd.s32 %s180, 1
      %p184 = scmp.eq.s32.totalorder %s20, 1
      %p185 = scmp.ne.s32.totalorder %s180, %s182
      %p186 = scmp.eq.s32.totalorder %s20, 0
      %p187 = por %p185, %p186
      %p188 = scmp.ne.s32.totalorder %s180, %s182
      %p189 = scmp.eq.s32.totalorder %s25, 1
      %p190 = por %p188, %p189
      %p191 = scmp.ne.s32.totalorder %s182, %s183
      %p192 = scmp.eq.s32.totalorder %s25, 0
      %p193 = por %p191, %p192
      %p194 = scmp.ne.s32.totalorder %s182, %s183
      %p195 = scmp.eq.s32.totalorder %s26, 1
      %p196 = por %p194, %p195
      %p198 = scmp.ne.s32.totalorder %s183, %s197
      %p199 = scmp.eq.s32.totalorder %s26, 0
      %p200 = por %p198, %p199
      %s202 = sadd.s32 %s201, 1
      %p205 = scmp.eq.s32.totalorder %s20, 1
      %p206 = scmp.ne.s32.totalorder %s201, %s203
      %p207 = scmp.eq.s32.totalorder %s20, 0
      %p208 = por %p206, %p207
      %p209 = scmp.ne.s32.totalorder %s201, %s203
      %p210 = scmp.eq.s32.totalorder %s25, 1
      %p211 = por %p209, %p210
      %p212 = scmp.ne.s32.totalorder %s203, %s204
      %p213 = scmp.eq.s32.totalorder %s25, 0
      %p214 = por %p212, %p213
      %p215 = scmp.ne.s32.totalorder %s203, %s204
      %p216 = scmp.eq.s32.totalorder %s26, 1
      %p217 = por %p215, %p216
      %p219 = scmp.ne.s32.totalorder %s204, %s218
      %p220 = scmp.eq.s32.totalorder %s26, 0
      %p221 = por %p219, %p220
      %s223 = sadd.s32 %s222, 1
      %p226 = scmp.eq.s32.totalorder %s20, 1
      %p227 = scmp.ne.s32.totalorder %s222, %s224
      %p228 = scmp.eq.s32.totalorder %s20, 0
      %p229 = por %p227, %p228
      %p230 = scmp.ne.s32.totalorder %s222, %s224
      %p231 = scmp.eq.s32.totalorder %s25, 1
      %p232 = por %p230, %p231
      %p233 = scmp.ne.s32.totalorder %s224, %s225
      %p234 = scmp.eq.s32.totalorder %s25, 0
      %p235 = por %p233, %p234
      %p236 = scmp.ne.s32.totalorder %s224, %s225
      %p237 = scmp.eq.s32.totalorder %s26, 1
      %p238 = por %p236, %p237
      %p240 = scmp.ne.s32.totalorder %s225, %s239
      %p241 = scmp.eq.s32.totalorder %s26, 0
      %p242 = por %p240, %p241
      %s244 = sadd.s32 %s243, 1
      %p247 = scmp.eq.s32.totalorder %s20, 1
      %p248 = scmp.ne.s32.totalorder %s243, %s245
      %p249 = scmp.eq.s32.totalorder %s20, 0
      %p250 = por %p248, %p249
      %p251 = scmp.ne.s32.totalorder %s243, %s245
      %p252 = scmp.eq.s32.totalorder %s25, 1
      %p253 = por %p251, %p252
      %p254 = scmp.ne.s32.totalorder %s245, %s246
      %p255 = scmp.eq.s32.totalorder %s25, 0
      %p256 = por %p254, %p255
      %p257 = scmp.ne.s32.totalorder %s245, %s246
      %p258 = scmp.eq.s32.totalorder %s26, 1
      %p259 = por %p257, %p258
      %p261 = scmp.ne.s32.totalorder %s246, %s260
      %p262 = scmp.eq.s32.totalorder %s26, 0
      %p263 = por %p261, %p262
      %s264 = ssub.s32 %s20, %s27
      %p265 = scmp.eq.s32.totalorder %s264, 0
      %s267 = sadd.s32 %s266, 1
      %s268 = scalar_select %p265, %s266, %s267
      %p271 = pneg %p265
      %p272 = scmp.eq.s32.totalorder %s20, 1
      %p273 = por %p271, %p272
      %p274 = scmp.ne.s32.totalorder %s266, %s269
      %p275 = scmp.eq.s32.totalorder %s20, 0
      %p276 = por %p274, %p275
      %p277 = scmp.ne.s32.totalorder %s266, %s269
      %p278 = scmp.eq.s32.totalorder %s25, 1
      %p279 = por %p277, %p278
      %p280 = scmp.ne.s32.totalorder %s269, %s270
      %p281 = scmp.eq.s32.totalorder %s25, 0
      %p282 = por %p280, %p281
      %p283 = scmp.ne.s32.totalorder %s269, %s270
      %p284 = scmp.eq.s32.totalorder %s26, 1
      %p285 = por %p283, %p284
      %p287 = scmp.ne.s32.totalorder %s270, %s286
      %p288 = scmp.eq.s32.totalorder %s26, 0
      %p289 = por %p287, %p288
      %p290 = scmp.le.s32.totalorder 1, %s20
      %p291 = scmp.lt.s32.totalorder %s20, 3
      %p292 = pnand %p290, %p291
      %p293 = pneg %p292
      // Predicated region
      $region9: #{tpu_custom_call.1} parent=5 // pred_check
        _
      $region10: #{tpu_custom_call.1} parent=5 // pred_check_branch
        %295 = sbr.rel (%p292) target = $region12
      $region11: #{tpu_custom_call.1} parent=5 // pred_region
        %s296 = ssub.s32 %s20, 1
        // Predicated region
        $region13: #{tpu_custom_call.1} parent=11 // pred_check
          %p297 = pneg %p67
        $region14: #{tpu_custom_call.1} parent=11 // pred_check_branch
          %299 = sbr.rel (%p297) target = $region16
        $region15: #{tpu_custom_call.1} parent=11 // pred_region
          _
        $region16: #{tpu_custom_call.1} parent=11 // pred_fallthru
          _
        // Predicated region
        $region17: #{tpu_custom_call.1} parent=11 // pred_check
          %p300 = pneg %p88
        $region18: #{tpu_custom_call.1} parent=11 // pred_check_branch
          %302 = sbr.rel (%p300) target = $region20
        $region19: #{tpu_custom_call.1} parent=11 // pred_region
          _
        $region20: #{tpu_custom_call.1} parent=11 // pred_fallthru
          _
        // Predicated region
        $region21: #{tpu_custom_call.1} parent=11 // pred_check
          %p303 = pneg %p109
        $region22: #{tpu_custom_call.1} parent=11 // pred_check_branch
          %305 = sbr.rel (%p303) target = $region24
        $region23: #{tpu_custom_call.1} parent=11 // pred_region
          _
        $region24: #{tpu_custom_call.1} parent=11 // pred_fallthru
          _
        // Predicated region
        $region25: #{tpu_custom_call.1} parent=11 // pred_check
          %p306 = pneg %p130
        $region26: #{tpu_custom_call.1} parent=11 // pred_check_branch
          %308 = sbr.rel (%p306) target = $region28
        $region27: #{tpu_custom_call.1} parent=11 // pred_region
          _
        $region28: #{tpu_custom_call.1} parent=11 // pred_fallthru
          _
        // Predicated region
        $region29: #{tpu_custom_call.1} parent=11 // pred_check
          %p309 = pneg %p151
        $region30: #{tpu_custom_call.1} parent=11 // pred_check_branch
          %311 = sbr.rel (%p309) target = $region32
        $region31: #{tpu_custom_call.1} parent=11 // pred_region
          _
        $region32: #{tpu_custom_call.1} parent=11 // pred_fallthru
          _
        // Predicated region
        $region33: #{tpu_custom_call.1} parent=11 // pred_check
          %p312 = pneg %p172
        $region34: #{tpu_custom_call.1} parent=11 // pred_check_branch
          %314 = sbr.rel (%p312) target = $region36
        $region35: #{tpu_custom_call.1} parent=11 // pred_region
          _
        $region36: #{tpu_custom_call.1} parent=11 // pred_fallthru
          _
        // Predicated region
        $region37: #{tpu_custom_call.1} parent=11 // pred_check
          %p315 = pneg %p193
        $region38: #{tpu_custom_call.1} parent=11 // pred_check_branch
          %317 = sbr.rel (%p315) target = $region40
        $region39: #{tpu_custom_call.1} parent=11 // pred_region
          _
        $region40: #{tpu_custom_call.1} parent=11 // pred_fallthru
          _
        // Predicated region
        $region41: #{tpu_custom_call.1} parent=11 // pred_check
          %p318 = pneg %p214
        $region42: #{tpu_custom_call.1} parent=11 // pred_check_branch
          %320 = sbr.rel (%p318) target = $region44
        $region43: #{tpu_custom_call.1} parent=11 // pred_region
          _
        $region44: #{tpu_custom_call.1} parent=11 // pred_fallthru
          _
        // Predicated region
        $region45: #{tpu_custom_call.1} parent=11 // pred_check
          %p321 = pneg %p235
        $region46: #{tpu_custom_call.1} parent=11 // pred_check_branch
          %323 = sbr.rel (%p321) target = $region48
        $region47: #{tpu_custom_call.1} parent=11 // pred_region
          _
        $region48: #{tpu_custom_call.1} parent=11 // pred_fallthru
          _
        // Predicated region
        $region49: #{tpu_custom_call.1} parent=11 // pred_check
          %p324 = pneg %p256
        $region50: #{tpu_custom_call.1} parent=11 // pred_check_branch
          %326 = sbr.rel (%p324) target = $region52
        $region51: #{tpu_custom_call.1} parent=11 // pred_region
          _
        $region52: #{tpu_custom_call.1} parent=11 // pred_fallthru
          _
      $region12: #{tpu_custom_call.1} parent=5 // pred_fallthru
        _
      %p327 = scmp.lt.s32.totalorder %s20, 2
      // Predicated region
      $region53: #{tpu_custom_call.1} parent=5 // pred_check
        %p328 = pneg %p327
      $region54: #{tpu_custom_call.1} parent=5 // pred_check_branch
        %330 = sbr.rel (%p328) target = $region56
      $region55: #{tpu_custom_call.1} parent=5 // pred_region
        // Predicated region
        $region57: #{tpu_custom_call.1} parent=55 // pred_check
          %p331 = pneg %p40
        $region58: #{tpu_custom_call.1} parent=55 // pred_check_branch
          %333 = sbr.rel (%p331) target = $region60
        $region59: #{tpu_custom_call.1} parent=55 // pred_region
          %p334 = scmp.lt.s32.totalorder %s20, 1
          %s335 = scalar_select %p334, %s20, 1
          %s336 = smul.addr %s335, 30
          %s337 = smul.addr %s336, 8
          %s338 = scalar_lea.vmem %s0, %s337
        $region60: #{tpu_custom_call.1} parent=55 // pred_fallthru
          _
      $region56: #{tpu_custom_call.1} parent=5 // pred_fallthru
        _
      %p339 = scmp.le.s32.totalorder 1, %s20
      %p340 = scmp.lt.s32.totalorder %s20, 3
      %p341 = pnand %p339, %p340
      %p342 = pneg %p341
      // Predicated region
      $region61: #{tpu_custom_call.1} parent=5 // pred_check
        _
      $region62: #{tpu_custom_call.1} parent=5 // pred_check_branch
        %344 = sbr.rel (%p341) target = $region64
      $region63: #{tpu_custom_call.1} parent=5 // pred_region
        %s345 = ssub.s32 %s20, 1
        %p346 = scmp.lt.s32.totalorder %s25, 1
        %s347 = scalar_select %p346, %s25, 1
        %s348 = smul.addr %s347, 30
        %s349 = smul.addr %s348, 8
        %s350 = scalar_lea.vmem %s0, %s349
        %p351 = pneg %p46
        %p352 = pneg %p43
        %p353 = pneg %p67
        %p354 = pneg %p64
        %p355 = pneg %p88
        %p356 = pneg %p85
        %p357 = pneg %p109
        %p358 = pneg %p106
        %p359 = pneg %p130
        %p360 = pneg %p127
        %p361 = pneg %p151
        %p362 = pneg %p148
        %p363 = pneg %p172
        %p364 = pneg %p169
        %p365 = pneg %p193
        %p366 = pneg %p190
        %p367 = pneg %p214
        %p368 = pneg %p211
        %p369 = pneg %p235
        %p370 = pneg %p232
        %p371 = pneg %p256
        %p372 = pneg %p253
        %p373 = pneg %p282
        %p374 = pneg %p279
        %s375 = sand.u32 %s269, 1
        %s376 = scalar_lea.sflag [#allocation5], %s375
        %s377 = sand.u32 %s269, 1
        %s378 = scalar_lea.vmem [#allocation4], %s377
        %p379 = scmp.lt.s32.totalorder %s25, 1
        %s380 = scalar_select %p379, %s25, 1
        %s381 = smul.addr %s380, 30
        %s382 = smul.addr %s381, 8
        %s383 = scalar_lea.vmem %s0, %s382
        %v384 = vld [vmem:[%s1] sm:$0x1]
        %v385 = vld [vmem:[%s383] ss:$2 sm:$0xff]
        %s386 = scalar_lea.vmem %s383, 16
        %v387 = vld [vmem:[%s386] ss:$2 sm:$0xff]
        %s388 = scalar_lea.vmem %s383, 32
        %v389 = vld [vmem:[%s388] ss:$2 sm:$0xff]
        %s390 = scalar_lea.vmem %s383, 48
        %v391 = vld [vmem:[%s390] ss:$2 sm:$0xff]
        %s392 = scalar_lea.vmem %s383, 64
        %v393 = vld [vmem:[%s392] ss:$2 sm:$0x3f]
        %395 = vset.pattern.permute.xlu0 0
        %396 = vperm.xlu0 %395, %v385
        %v397 = vpop.permute.xlu0 %396
        %400 = vset.pattern.permute.xlu0 0
        %401 = vperm.xlu0 %400, %v387
        %v402 = vpop.permute.xlu0 %401
        %405 = vset.pattern.permute.xlu0 0
        %406 = vperm.xlu0 %405, %v389
        %v407 = vpop.permute.xlu0 %406
        %410 = vset.pattern.permute.xlu0 0
        %411 = vperm.xlu0 %410, %v391
        %v412 = vpop.permute.xlu0 %411
        %415 = vset.pattern.permute.xlu0 0
        %416 = vperm.xlu0 %415, %v393
        %v417 = vpop.permute.xlu0 %416
        %v419 = vlaneseq
        %v420 = vshrl.u32 %v419, 7
        %v421 = vsub.s32 0, %v420
        %v422 = vrot.slane %v384, %v421
        %v423 = vmul.f32 %v397, %v422
        %v424 = vmul.f32 %v402, %v422
        %v425 = vmul.f32 %v407, %v422
        %v426 = vmul.f32 %v412, %v422
        %v427 = vmul.f32 %v417, %v422
        %v428 = vadd.f32 %v423, 0.0
        %v429 = vadd.f32 %v424, 0.0
        %v430 = vadd.f32 %v425, 0.0
        %v431 = vadd.f32 %v426, 0.0
        %v432 = vadd.f32 %v427, 0.0
        %s433 = scalar_lea.vmem %s383, 1
        %v434 = vld [vmem:[%s433] ss:$2 sm:$0xff]
        %s435 = scalar_lea.vmem %s383, 17
        %v436 = vld [vmem:[%s435] ss:$2 sm:$0xff]
        %s437 = scalar_lea.vmem %s383, 33
        %v438 = vld [vmem:[%s437] ss:$2 sm:$0xff]
        %s439 = scalar_lea.vmem %s383, 49
        %v440 = vld [vmem:[%s439] ss:$2 sm:$0xff]
        %s441 = scalar_lea.vmem %s383, 65
        %v442 = vld [vmem:[%s441] ss:$2 sm:$0x3f]
        %444 = vset.pattern.permute.xlu0 0
        %445 = vperm.xlu0 %444, %v434
        %v446 = vpop.permute.xlu0 %445
        %449 = vset.pattern.permute.xlu0 0
        %450 = vperm.xlu0 %449, %v436
        %v451 = vpop.permute.xlu0 %450
        %454 = vset.pattern.permute.xlu0 0
        %455 = vperm.xlu0 %454, %v438
        %v456 = vpop.permute.xlu0 %455
        %459 = vset.pattern.permute.xlu0 0
        %460 = vperm.xlu0 %459, %v440
        %v461 = vpop.permute.xlu0 %460
        %464 = vset.pattern.permute.xlu0 0
        %465 = vperm.xlu0 %464, %v442
        %v466 = vpop.permute.xlu0 %465
        %v468 = vmul.f32 %v446, %v422
        %v469 = vmul.f32 %v451, %v422
        %v470 = vmul.f32 %v456, %v422
        %v471 = vmul.f32 %v461, %v422
        %v472 = vmul.f32 %v466, %v422
        %v473 = vadd.f32 %v468, 0.0
        %v474 = vadd.f32 %v469, 0.0
        %v475 = vadd.f32 %v470, 0.0
        %v476 = vadd.f32 %v471, 0.0
        %v477 = vadd.f32 %v472, 0.0
        %v478 = vld [vmem:[%s1 + $0x1] sm:$0x1]
        %v479 = vlaneseq
        %v480 = vshrl.u32 %v479, 7
        %v481 = vsub.s32 0, %v480
        %v482 = vrot.slane %v478, %v481
        %v483 = vmul.f32 %v446, %v482
        %v484 = vmul.f32 %v451, %v482
        %v485 = vmul.f32 %v456, %v482
        %v486 = vmul.f32 %v461, %v482
        %v487 = vmul.f32 %v466, %v482
        %v488 = vadd.f32 %v428, %v483
        %v489 = vadd.f32 %v429, %v484
        %v490 = vadd.f32 %v430, %v485
        %v491 = vadd.f32 %v431, %v486
        %v492 = vadd.f32 %v432, %v487
        %s493 = scalar_lea.vmem %s383, 2
        %v494 = vld [vmem:[%s493] ss:$2 sm:$0xff]
        %s495 = scalar_lea.vmem %s383, 18
        %v496 = vld [vmem:[%s495] ss:$2 sm:$0xff]
        %s497 = scalar_lea.vmem %s383, 34
        %v498 = vld [vmem:[%s497] ss:$2 sm:$0xff]
        %s499 = scalar_lea.vmem %s383, 50
        %v500 = vld [vmem:[%s499] ss:$2 sm:$0xff]
        %s501 = scalar_lea.vmem %s383, 66
        %v502 = vld [vmem:[%s501] ss:$2 sm:$0x3f]
        %504 = vset.pattern.permute.xlu0 0
        %505 = vperm.xlu0 %504, %v494
        %v506 = vpop.permute.xlu0 %505
        %509 = vset.pattern.permute.xlu0 0
        %510 = vperm.xlu0 %509, %v496
        %v511 = vpop.permute.xlu0 %510
        %514 = vset.pattern.permute.xlu0 0
        %515 = vperm.xlu0 %514, %v498
        %v516 = vpop.permute.xlu0 %515
        %519 = vset.pattern.permute.xlu0 0
        %520 = vperm.xlu0 %519, %v500
        %v521 = vpop.permute.xlu0 %520
        %524 = vset.pattern.permute.xlu0 0
        %525 = vperm.xlu0 %524, %v502
        %v526 = vpop.permute.xlu0 %525
        %v528 = vmul.f32 %v506, %v482
        %v529 = vmul.f32 %v511, %v482
        %v530 = vmul.f32 %v516, %v482
        %v531 = vmul.f32 %v521, %v482
        %v532 = vmul.f32 %v526, %v482
        %v533 = vadd.f32 %v473, %v528
        %v534 = vadd.f32 %v474, %v529
        %v535 = vadd.f32 %v475, %v530
        %v536 = vadd.f32 %v476, %v531
        %v537 = vadd.f32 %v477, %v532
        %v538 = vld [vmem:[%s1 + $0x2] sm:$0x1]
        %v539 = vlaneseq
        %v540 = vshrl.u32 %v539, 7
        %v541 = vsub.s32 0, %v540
        %v542 = vrot.slane %v538, %v541
        %v543 = vmul.f32 %v506, %v542
        %v544 = vmul.f32 %v511, %v542
        %v545 = vmul.f32 %v516, %v542
        %v546 = vmul.f32 %v521, %v542
        %v547 = vmul.f32 %v526, %v542
        %v548 = vadd.f32 %v488, %v543
        %v549 = vadd.f32 %v489, %v544
        %v550 = vadd.f32 %v490, %v545
        %v551 = vadd.f32 %v491, %v546
        %v552 = vadd.f32 %v492, %v547
        %s553 = scalar_lea.vmem %s383, 3
        %v554 = vld [vmem:[%s553] ss:$2 sm:$0xff]
        %s555 = scalar_lea.vmem %s383, 19
        %v556 = vld [vmem:[%s555] ss:$2 sm:$0xff]
        %s557 = scalar_lea.vmem %s383, 35
        %v558 = vld [vmem:[%s557] ss:$2 sm:$0xff]
        %s559 = scalar_lea.vmem %s383, 51
        %v560 = vld [vmem:[%s559] ss:$2 sm:$0xff]
        %s561 = scalar_lea.vmem %s383, 67
        %v562 = vld [vmem:[%s561] ss:$2 sm:$0x3f]
        %564 = vset.pattern.permute.xlu0 0
        %565 = vperm.xlu0 %564, %v554
        %v566 = vpop.permute.xlu0 %565
        %569 = vset.pattern.permute.xlu0 0
        %570 = vperm.xlu0 %569, %v556
        %v571 = vpop.permute.xlu0 %570
        %574 = vset.pattern.permute.xlu0 0
        %575 = vperm.xlu0 %574, %v558
        %v576 = vpop.permute.xlu0 %575
        %579 = vset.pattern.permute.xlu0 0
        %580 = vperm.xlu0 %579, %v560
        %v581 = vpop.permute.xlu0 %580
        %584 = vset.pattern.permute.xlu0 0
        %585 = vperm.xlu0 %584, %v562
        %v586 = vpop.permute.xlu0 %585
        %v588 = vmul.f32 %v566, %v542
        %v589 = vmul.f32 %v571, %v542
        %v590 = vmul.f32 %v576, %v542
        %v591 = vmul.f32 %v581, %v542
        %v592 = vmul.f32 %v586, %v542
        %v593 = vadd.f32 %v533, %v588
        %v594 = vadd.f32 %v534, %v589
        %v595 = vadd.f32 %v535, %v590
        %v596 = vadd.f32 %v536, %v591
        %v597 = vadd.f32 %v537, %v592
        %v598 = vld [vmem:[%s1 + $0x3] sm:$0x1]
        %v599 = vlaneseq
        %v600 = vshrl.u32 %v599, 7
        %v601 = vsub.s32 0, %v600
        %v602 = vrot.slane %v598, %v601
        %v603 = vmul.f32 %v566, %v602
        %v604 = vmul.f32 %v571, %v602
        %v605 = vmul.f32 %v576, %v602
        %v606 = vmul.f32 %v581, %v602
        %v607 = vmul.f32 %v586, %v602
        %v608 = vadd.f32 %v548, %v603
        %v609 = vadd.f32 %v549, %v604
        %v610 = vadd.f32 %v550, %v605
        %v611 = vadd.f32 %v551, %v606
        %v612 = vadd.f32 %v552, %v607
        %s613 = scalar_lea.vmem %s383, 4
        %v614 = vld [vmem:[%s613] ss:$2 sm:$0xff]
        %s615 = scalar_lea.vmem %s383, 20
        %v616 = vld [vmem:[%s615] ss:$2 sm:$0xff]
        %s617 = scalar_lea.vmem %s383, 36
        %v618 = vld [vmem:[%s617] ss:$2 sm:$0xff]
        %s619 = scalar_lea.vmem %s383, 52
        %v620 = vld [vmem:[%s619] ss:$2 sm:$0xff]
        %s621 = scalar_lea.vmem %s383, 68
        %v622 = vld [vmem:[%s621] ss:$2 sm:$0x3f]
        %624 = vset.pattern.permute.xlu0 0
        %625 = vperm.xlu0 %624, %v614
        %v626 = vpop.permute.xlu0 %625
        %629 = vset.pattern.permute.xlu0 0
        %630 = vperm.xlu0 %629, %v616
        %v631 = vpop.permute.xlu0 %630
        %634 = vset.pattern.permute.xlu0 0
        %635 = vperm.xlu0 %634, %v618
        %v636 = vpop.permute.xlu0 %635
        %639 = vset.pattern.permute.xlu0 0
        %640 = vperm.xlu0 %639, %v620
        %v641 = vpop.permute.xlu0 %640
        %644 = vset.pattern.permute.xlu0 0
        %645 = vperm.xlu0 %644, %v622
        %v646 = vpop.permute.xlu0 %645
        %v648 = vmul.f32 %v626, %v602
        %v649 = vmul.f32 %v631, %v602
        %v650 = vmul.f32 %v636, %v602
        %v651 = vmul.f32 %v641, %v602
        %v652 = vmul.f32 %v646, %v602
        %v653 = vadd.f32 %v593, %v648
        %v654 = vadd.f32 %v594, %v649
        %v655 = vadd.f32 %v595, %v650
        %v656 = vadd.f32 %v596, %v651
        %v657 = vadd.f32 %v597, %v652
        %v658 = vld [vmem:[%s1 + $0x4] sm:$0x1]
        %v659 = vlaneseq
        %v660 = vshrl.u32 %v659, 7
        %v661 = vsub.s32 0, %v660
        %v662 = vrot.slane %v658, %v661
        %v663 = vmul.f32 %v626, %v662
        %v664 = vmul.f32 %v631, %v662
        %v665 = vmul.f32 %v636, %v662
        %v666 = vmul.f32 %v641, %v662
        %v667 = vmul.f32 %v646, %v662
        %v668 = vadd.f32 %v608, %v663
        %v669 = vadd.f32 %v609, %v664
        %v670 = vadd.f32 %v610, %v665
        %v671 = vadd.f32 %v611, %v666
        %v672 = vadd.f32 %v612, %v667
        %s673 = scalar_lea.vmem %s383, 5
        %v674 = vld [vmem:[%s673] ss:$2 sm:$0xff]
        %s675 = scalar_lea.vmem %s383, 21
        %v676 = vld [vmem:[%s675] ss:$2 sm:$0xff]
        %s677 = scalar_lea.vmem %s383, 37
        %v678 = vld [vmem:[%s677] ss:$2 sm:$0xff]
        %s679 = scalar_lea.vmem %s383, 53
        %v680 = vld [vmem:[%s679] ss:$2 sm:$0xff]
        %s681 = scalar_lea.vmem %s383, 69
        %v682 = vld [vmem:[%s681] ss:$2 sm:$0x3f]
        %684 = vset.pattern.permute.xlu0 0
        %685 = vperm.xlu0 %684, %v674
        %v686 = vpop.permute.xlu0 %685
        %689 = vset.pattern.permute.xlu0 0
        %690 = vperm.xlu0 %689, %v676
        %v691 = vpop.permute.xlu0 %690
        %694 = vset.pattern.permute.xlu0 0
        %695 = vperm.xlu0 %694, %v678
        %v696 = vpop.permute.xlu0 %695
        %699 = vset.pattern.permute.xlu0 0
        %700 = vperm.xlu0 %699, %v680
        %v701 = vpop.permute.xlu0 %700
        %704 = vset.pattern.permute.xlu0 0
        %705 = vperm.xlu0 %704, %v682
        %v706 = vpop.permute.xlu0 %705
        %v708 = vmul.f32 %v686, %v662
        %v709 = vmul.f32 %v691, %v662
        %v710 = vmul.f32 %v696, %v662
        %v711 = vmul.f32 %v701, %v662
        %v712 = vmul.f32 %v706, %v662
        %v713 = vadd.f32 %v653, %v708
        %v714 = vadd.f32 %v654, %v709
        %v715 = vadd.f32 %v655, %v710
        %v716 = vadd.f32 %v656, %v711
        %v717 = vadd.f32 %v657, %v712
        %v718 = vld [vmem:[%s2] sm:$0x1]
        %v720 = vlaneseq
        %v721 = vshrl.u32 %v720, 7
        %v722 = vsub.s32 0, %v721
        %v723 = vrot.slane %v718, %v722
        %v725 = vadd.f32 %v668, %v723
        %v726 = vadd.f32 %v669, %v723
        %v727 = vadd.f32 %v670, %v723
        %v728 = vadd.f32 %v671, %v723
        %v729 = vadd.f32 %v672, %v723
        %v730 = vmax.f32 %v725, 0.0
        %v731 = vmax.f32 %v726, 0.0
        %v732 = vmax.f32 %v727, 0.0
        %v733 = vmax.f32 %v728, 0.0
        %v734 = vmax.f32 %v729, 0.0
        %v735 = vadd.f32 %v713, %v723
        %v736 = vadd.f32 %v714, %v723
        %v737 = vadd.f32 %v715, %v723
        %v738 = vadd.f32 %v716, %v723
        %v739 = vadd.f32 %v717, %v723
        %v740 = vmax.f32 %v735, 0.0
        %v741 = vmax.f32 %v736, 0.0
        %v742 = vmax.f32 %v737, 0.0
        %v743 = vmax.f32 %v738, 0.0
        %v744 = vmax.f32 %v739, 0.0
        %vm745 = vcmask 401408
        %746 = vst.msk [vmem:[#allocation2 + $0x7] sm:$0x1] %vm745, 0.0
        %vm747 = vcmask 408576
        %748 = vst.msk [vmem:[#allocation2 + $0x8] sm:$0xff] %vm747, %v740
        %749 = vst.msk [vmem:[#allocation2 + $0x10] sm:$0xff] %vm747, %v741
        %750 = vst.msk [vmem:[#allocation2 + $0x18] sm:$0xff] %vm747, %v742
        %751 = vst.msk [vmem:[#allocation2 + $0x20] sm:$0xff] %vm747, %v743
        %vm752 = vcmask 406528
        %753 = vst.msk [vmem:[#allocation2 + $0x28] sm:$0x3f] %vm752, %v744
        %v754 = vld [vmem:[#allocation2 + $0x7] sm:$0xff]
        %v755 = vld [vmem:[#allocation2 + $0xf] sm:$0xff]
        %v756 = vld [vmem:[#allocation2 + $0x17] sm:$0xff]
        %v757 = vld [vmem:[#allocation2 + $0x1f] sm:$0xff]
        %v758 = vld [vmem:[#allocation2 + $0x27] sm:$0x3f]
        %v759 = vld [vmem:[%s3] sm:$0xff]
        %v760 = vld [vmem:[%s3 + $0x8] sm:$0xff]
        %v761 = vld [vmem:[%s3 + $0x10] sm:$0xff]
        %v762 = vld [vmem:[%s3 + $0x18] sm:$0xff]
        %v763 = vld [vmem:[%s3 + $0x20] sm:$0xff]
        %v764 = vld [vmem:[%s3 + $0x28] sm:$0xff]
        %v765 = vld [vmem:[%s3 + $0x30] sm:$0x3]
        %s766 = scalar_lea.vmem %s3, 56
        %v767 = vld [vmem:[%s766] sm:$0xff]
        %v768 = vld [vmem:[%s766 + $0x8] sm:$0xff]
        %v769 = vld [vmem:[%s766 + $0x10] sm:$0xff]
        %v770 = vld [vmem:[%s766 + $0x18] sm:$0xff]
        %v771 = vld [vmem:[%s766 + $0x20] sm:$0xff]
        %v772 = vld [vmem:[%s766 + $0x28] sm:$0xff]
        %v773 = vld [vmem:[%s766 + $0x30] sm:$0x3]
        %v775 = vsel %vm747, %v730, 0
        %v778 = vsel %vm747, %v731, 0
        %v781 = vsel %vm747, %v732, 0
        %v784 = vsel %vm747, %v733, 0
        %v787 = vsel %vm747, %v734, 0
        %vm789 = vcmask 1041408
        %v791 = vsel %vm789, %v773, 0
        %793 = vmatprep.subr.mxu0 0.0
        %794 = vmatpush1.msra.mxu0 %v767
        %795 = vmatprep.subr.mxu0 0.0
        %796 = vmatpush1.msra.mxu0 %v768
        %797 = vmatprep.subr.mxu0 0.0
        %798 = vmatpush1.msra.mxu0 %v769
        %799 = vmatprep.subr.mxu0 0.0
        %800 = vmatpush1.msra.mxu0 %v770
        %801 = vmatprep.subr.mxu0 0.0
        %802 = vmatpush1.msra.mxu0 %v771
        %803 = vmatprep.subr.mxu0 0.0
        %804 = vmatpush1.msra.mxu0 %v772
        %805 = vmatprep.subr.mxu0 0.0
        %806 = vmatpush1.msra.mxu0 %v791
        %807 = vmatprep.subr.mxu0 0.0
        %808 = vmatpush1.msra.mxu0 0.0
        %809 = vmatprep.subr.mxu0 0.0
        %810 = vmatpush1.msra.mxu0 0.0
        %811 = vmatprep.subr.mxu0 0.0
        %812 = vmatpush1.msra.mxu0 0.0
        %813 = vmatprep.subr.mxu0 0.0
        %814 = vmatpush1.msra.mxu0 0.0
        %815 = vmatprep.subr.mxu0 0.0
        %816 = vmatpush1.msra.mxu0 0.0
        %817 = vmatprep.subr.mxu0 0.0
        %818 = vmatpush1.msra.mxu0 0.0
        %819 = vmatprep.subr.mxu0 0.0
        %820 = vmatpush1.msra.mxu0 0.0
        %821 = vmatprep.subr.mxu0 0.0
        %822 = vmatpush1.msra.mxu0 0.0
        %823 = vmatprep.subr.mxu0 0.0
        %824 = vmatpush1.msra.mxu0 0.0
        %825 = vmatprep.subr.mxu0 0.0
        %826 = vmatpush1.msra.mxu0 0.0
        %827 = vmatprep.subr.mxu0 0.0
        %828 = vmatpush1.msra.mxu0 0.0
        %829 = vmatprep.subr.mxu0 0.0
        %830 = vmatpush1.msra.mxu0 0.0
        %831 = vmatprep.subr.mxu0 0.0
        %832 = vmatpush1.msra.mxu0 0.0
        %833 = vmatprep.subr.mxu0 0.0
        %834 = vmatpush1.msra.mxu0 0.0
        %835 = vmatprep.subr.mxu0 0.0
        %836 = vmatpush1.msra.mxu0 0.0
        %837 = vmatprep.subr.mxu0 0.0
        %838 = vmatpush1.msra.mxu0 0.0
        %839 = vmatprep.subr.mxu0 0.0
        %840 = vmatpush1.msra.mxu0 0.0
        %841 = vmatprep.subr.mxu0 0.0
        %842 = vmatpush1.msra.mxu0 0.0
        %843 = vmatprep.subr.mxu0 0.0
        %844 = vmatpush1.msra.mxu0 0.0
        %845 = vmatprep.subr.mxu0 0.0
        %846 = vmatpush1.msra.mxu0 0.0
        %847 = vmatprep.subr.mxu0 0.0
        %848 = vmatpush1.msra.mxu0 0.0
        %849 = vmatprep.subr.mxu0 0.0
        %850 = vmatpush1.msra.mxu0 0.0
        %851 = vmatprep.subr.mxu0 0.0
        %852 = vmatpush1.msra.mxu0 0.0
        %853 = vmatprep.subr.mxu0 0.0
        %854 = vmatpush1.msra.mxu0 0.0
        %855 = vmatprep.subr.mxu0 0.0
        %856 = vmatpush1.msra.mxu0 0.0
        %857 = vmatprep.mubr.f32.mxu0 0.0
        %858 = vmatmul.mubr.f32.gmra.mrb[0].mxu0 %v775
        %v859 = vpop.f32.mrb[0].mxu0
        %v860 = vadd.f32 0.0, %v859
        %v861 = vpop.f32.mrb[0].mxu0
        %862 = vmatprep.mubr.f32.mxu0 0.0
        %863 = vmatmul.mubr.f32.gmra.mrb[0].mxu0 %v778
        %v864 = vpop.f32.mrb[0].mxu0
        %v865 = vadd.f32 0.0, %v864
        %v866 = vpop.f32.mrb[0].mxu0
        %867 = vmatprep.mubr.f32.mxu0 0.0
        %868 = vmatmul.mubr.f32.gmra.mrb[0].mxu0 %v781
        %v869 = vpop.f32.mrb[0].mxu0
        %v870 = vadd.f32 0.0, %v869
        %v871 = vpop.f32.mrb[0].mxu0
        %872 = vmatprep.mubr.f32.mxu0 0.0
        %873 = vmatmul.mubr.f32.gmra.mrb[0].mxu0 %v784
        %v874 = vpop.f32.mrb[0].mxu0
        %v875 = vadd.f32 0.0, %v874
        %v876 = vpop.f32.mrb[0].mxu0
        %877 = vmatprep.mubr.f32.mxu0 0.0
        %878 = vmatmul.mubr.f32.gmra.mrb[0].mxu0 %v787
        %v879 = vpop.f32.mrb[0].mxu0
        %v880 = vadd.f32 0.0, %v879
        %v881 = vpop.f32.mrb[0].mxu0
        %882 = vdwg.mxu0
        %v884 = vsel %vm747, %v754, 0
        %v887 = vsel %vm747, %v755, 0
        %v890 = vsel %vm747, %v756, 0
        %v893 = vsel %vm747, %v757, 0
        %v896 = vsel %vm747, %v758, 0
        %v899 = vsel %vm789, %v765, 0
        %901 = vmatprep.subr.mxu0 0.0
        %902 = vmatpush1.msra.mxu0 %v759
        %903 = vmatprep.subr.mxu0 0.0
        %904 = vmatpush1.msra.mxu0 %v760
        %905 = vmatprep.subr.mxu0 0.0
        %906 = vmatpush1.msra.mxu0 %v761
        %907 = vmatprep.subr.mxu0 0.0
        %908 = vmatpush1.msra.mxu0 %v762
        %909 = vmatprep.subr.mxu0 0.0
        %910 = vmatpush1.msra.mxu0 %v763
        %911 = vmatprep.subr.mxu0 0.0
        %912 = vmatpush1.msra.mxu0 %v764
        %913 = vmatprep.subr.mxu0 0.0
        %914 = vmatpush1.msra.mxu0 %v899
        %915 = vmatprep.subr.mxu0 0.0
        %916 = vmatpush1.msra.mxu0 0.0
        %917 = vmatprep.subr.mxu0 0.0
        %918 = vmatpush1.msra.mxu0 0.0
        %919 = vmatprep.subr.mxu0 0.0
        %920 = vmatpush1.msra.mxu0 0.0
        %921 = vmatprep.subr.mxu0 0.0
        %922 = vmatpush1.msra.mxu0 0.0
        %923 = vmatprep.subr.mxu0 0.0
        %924 = vmatpush1.msra.mxu0 0.0
        %925 = vmatprep.subr.mxu0 0.0
        %926 = vmatpush1.msra.mxu0 0.0
        %927 = vmatprep.subr.mxu0 0.0
        %928 = vmatpush1.msra.mxu0 0.0
        %929 = vmatprep.subr.mxu0 0.0
        %930 = vmatpush1.msra.mxu0 0.0
        %931 = vmatprep.subr.mxu0 0.0
        %932 = vmatpush1.msra.mxu0 0.0
        %933 = vmatprep.subr.mxu0 0.0
        %934 = vmatpush1.msra.mxu0 0.0
        %935 = vmatprep.subr.mxu0 0.0
        %936 = vmatpush1.msra.mxu0 0.0
        %937 = vmatprep.subr.mxu0 0.0
        %938 = vmatpush1.msra.mxu0 0.0
        %939 = vmatprep.subr.mxu0 0.0
        %940 = vmatpush1.msra.mxu0 0.0
        %941 = vmatprep.subr.mxu0 0.0
        %942 = vmatpush1.msra.mxu0 0.0
        %943 = vmatprep.subr.mxu0 0.0
        %944 = vmatpush1.msra.mxu0 0.0
        %945 = vmatprep.subr.mxu0 0.0
        %946 = vmatpush1.msra.mxu0 0.0
        %947 = vmatprep.subr.mxu0 0.0
        %948 = vmatpush1.msra.mxu0 0.0
        %949 = vmatprep.subr.mxu0 0.0
        %950 = vmatpush1.msra.mxu0 0.0
        %951 = vmatprep.subr.mxu0 0.0
        %952 = vmatpush1.msra.mxu0 0.0
        %953 = vmatprep.subr.mxu0 0.0
        %954 = vmatpush1.msra.mxu0 0.0
        %955 = vmatprep.subr.mxu0 0.0
        %956 = vmatpush1.msra.mxu0 0.0
        %957 = vmatprep.subr.mxu0 0.0
        %958 = vmatpush1.msra.mxu0 0.0
        %959 = vmatprep.subr.mxu0 0.0
        %960 = vmatpush1.msra.mxu0 0.0
        %961 = vmatprep.subr.mxu0 0.0
        %962 = vmatpush1.msra.mxu0 0.0
        %963 = vmatprep.subr.mxu0 0.0
        %964 = vmatpush1.msra.mxu0 0.0
        %965 = vmatprep.mubr.f32.mxu0 0.0
        %966 = vmatmul.mubr.f32.gmra.mrb[0].mxu0 %v884
        %v967 = vpop.f32.mrb[0].mxu0
        %v968 = vadd.f32 %v860, %v967
        %v969 = vpop.f32.mrb[0].mxu0
        %970 = vmatprep.mubr.f32.mxu0 0.0
        %971 = vmatmul.mubr.f32.gmra.mrb[0].mxu0 %v887
        %v972 = vpop.f32.mrb[0].mxu0
        %v973 = vadd.f32 %v865, %v972
        %v974 = vpop.f32.mrb[0].mxu0
        %975 = vmatprep.mubr.f32.mxu0 0.0
        %976 = vmatmul.mubr.f32.gmra.mrb[0].mxu0 %v890
        %v977 = vpop.f32.mrb[0].mxu0
        %v978 = vadd.f32 %v870, %v977
        %v979 = vpop.f32.mrb[0].mxu0
        %980 = vmatprep.mubr.f32.mxu0 0.0
        %981 = vmatmul.mubr.f32.gmra.mrb[0].mxu0 %v893
        %v982 = vpop.f32.mrb[0].mxu0
        %v983 = vadd.f32 %v875, %v982
        %v984 = vpop.f32.mrb[0].mxu0
        %985 = vmatprep.mubr.f32.mxu0 0.0
        %986 = vmatmul.mubr.f32.gmra.mrb[0].mxu0 %v896
        %v987 = vpop.f32.mrb[0].mxu0
        %v988 = vadd.f32 %v880, %v987
        %v989 = vpop.f32.mrb[0].mxu0
        %990 = vdwg.mxu0
        %s991 = scalar_lea.vmem %s3, 112
        %v992 = vld [vmem:[%s991] sm:$0xff]
        %v993 = vld [vmem:[%s991 + $0x8] sm:$0xff]
        %v994 = vld [vmem:[%s991 + $0x10] sm:$0xff]
        %v995 = vld [vmem:[%s991 + $0x18] sm:$0xff]
        %v996 = vld [vmem:[%s991 + $0x20] sm:$0xff]
        %v997 = vld [vmem:[%s991 + $0x28] sm:$0xff]
        %v998 = vld [vmem:[%s991 + $0x30] sm:$0x3]
        %v1000 = vsel %vm747, %v740, 0
        %v1003 = vsel %vm747, %v741, 0
        %v1006 = vsel %vm747, %v742, 0
        %v1009 = vsel %vm747, %v743, 0
        %v1012 = vsel %vm747, %v744, 0
        %v1015 = vsel %vm789, %v998, 0
        %1017 = vmatprep.subr.mxu0 0.0
        %1018 = vmatpush1.msra.mxu0 %v992
        %1019 = vmatprep.subr.mxu0 0.0
        %1020 = vmatpush1.msra.mxu0 %v993
        %1021 = vmatprep.subr.mxu0 0.0
        %1022 = vmatpush1.msra.mxu0 %v994
        %1023 = vmatprep.subr.mxu0 0.0
        %1024 = vmatpush1.msra.mxu0 %v995
        %1025 = vmatprep.subr.mxu0 0.0
        %1026 = vmatpush1.msra.mxu0 %v996
        %1027 = vmatprep.subr.mxu0 0.0
        %1028 = vmatpush1.msra.mxu0 %v997
        %1029 = vmatprep.subr.mxu0 0.0
        %1030 = vmatpush1.msra.mxu0 %v1015
        %1031 = vmatprep.subr.mxu0 0.0
        %1032 = vmatpush1.msra.mxu0 0.0
        %1033 = vmatprep.subr.mxu0 0.0
        %1034 = vmatpush1.msra.mxu0 0.0
        %1035 = vmatprep.subr.mxu0 0.0
        %1036 = vmatpush1.msra.mxu0 0.0
        %1037 = vmatprep.subr.mxu0 0.0
        %1038 = vmatpush1.msra.mxu0 0.0
        %1039 = vmatprep.subr.mxu0 0.0
        %1040 = vmatpush1.msra.mxu0 0.0
        %1041 = vmatprep.subr.mxu0 0.0
        %1042 = vmatpush1.msra.mxu0 0.0
        %1043 = vmatprep.subr.mxu0 0.0
        %1044 = vmatpush1.msra.mxu0 0.0
        %1045 = vmatprep.subr.mxu0 0.0
        %1046 = vmatpush1.msra.mxu0 0.0
        %1047 = vmatprep.subr.mxu0 0.0
        %1048 = vmatpush1.msra.mxu0 0.0
        %1049 = vmatprep.subr.mxu0 0.0
        %1050 = vmatpush1.msra.mxu0 0.0
        %1051 = vmatprep.subr.mxu0 0.0
        %1052 = vmatpush1.msra.mxu0 0.0
        %1053 = vmatprep.subr.mxu0 0.0
        %1054 = vmatpush1.msra.mxu0 0.0
        %1055 = vmatprep.subr.mxu0 0.0
        %1056 = vmatpush1.msra.mxu0 0.0
        %1057 = vmatprep.subr.mxu0 0.0
        %1058 = vmatpush1.msra.mxu0 0.0
        %1059 = vmatprep.subr.mxu0 0.0
        %1060 = vmatpush1.msra.mxu0 0.0
        %1061 = vmatprep.subr.mxu0 0.0
        %1062 = vmatpush1.msra.mxu0 0.0
        %1063 = vmatprep.subr.mxu0 0.0
        %1064 = vmatpush1.msra.mxu0 0.0
        %1065 = vmatprep.subr.mxu0 0.0
        %1066 = vmatpush1.msra.mxu0 0.0
        %1067 = vmatprep.subr.mxu0 0.0
        %1068 = vmatpush1.msra.mxu0 0.0
        %1069 = vmatprep.subr.mxu0 0.0
        %1070 = vmatpush1.msra.mxu0 0.0
        %1071 = vmatprep.subr.mxu0 0.0
        %1072 = vmatpush1.msra.mxu0 0.0
        %1073 = vmatprep.subr.mxu0 0.0
        %1074 = vmatpush1.msra.mxu0 0.0
        %1075 = vmatprep.subr.mxu0 0.0
        %1076 = vmatpush1.msra.mxu0 0.0
        %1077 = vmatprep.subr.mxu0 0.0
        %1078 = vmatpush1.msra.mxu0 0.0
        %1079 = vmatprep.subr.mxu0 0.0
        %1080 = vmatpush1.msra.mxu0 0.0
        %1081 = vmatprep.mubr.f32.mxu0 0.0
        %1082 = vmatmul.mubr.f32.gmra.mrb[0].mxu0 %v1000
        %v1083 = vpop.f32.mrb[0].mxu0
        %v1084 = vadd.f32 0.0, %v1083
        %v1085 = vpop.f32.mrb[0].mxu0
        %1086 = vmatprep.mubr.f32.mxu0 0.0
        %1087 = vmatmul.mubr.f32.gmra.mrb[0].mxu0 %v1003
        %v1088 = vpop.f32.mrb[0].mxu0
        %v1089 = vadd.f32 0.0, %v1088
        %v1090 = vpop.f32.mrb[0].mxu0
        %1091 = vmatprep.mubr.f32.mxu0 0.0
        %1092 = vmatmul.mubr.f32.gmra.mrb[0].mxu0 %v1006
        %v1093 = vpop.f32.mrb[0].mxu0
        %v1094 = vadd.f32 0.0, %v1093
        %v1095 = vpop.f32.mrb[0].mxu0
        %1096 = vmatprep.mubr.f32.mxu0 0.0
        %1097 = vmatmul.mubr.f32.gmra.mrb[0].mxu0 %v1009
        %v1098 = vpop.f32.mrb[0].mxu0
        %v1099 = vadd.f32 0.0, %v1098
        %v1100 = vpop.f32.mrb[0].mxu0
        %1101 = vmatprep.mubr.f32.mxu0 0.0
        %1102 = vmatmul.mubr.f32.gmra.mrb[0].mxu0 %v1012
        %v1103 = vpop.f32.mrb[0].mxu0
        %v1104 = vadd.f32 0.0, %v1103
        %v1105 = vpop.f32.mrb[0].mxu0
        %1106 = vdwg.mxu0
        %v1107 = vadd.f32 %v968, %v1084
        %v1108 = vadd.f32 %v973, %v1089
        %v1109 = vadd.f32 %v978, %v1094
        %v1110 = vadd.f32 %v983, %v1099
        %v1111 = vadd.f32 %v988, %v1104
        %v1112 = vld [vmem:[%s4] sm:$0x1]
        %v1114 = vlaneseq
        %v1115 = vshrl.u32 %v1114, 7
        %v1116 = vsub.s32 0, %v1115
        %v1117 = vrot.slane %v1112, %v1116
        %v1119 = vadd.f32 %v1107, %v1117
        %v1120 = vadd.f32 %v1108, %v1117
        %v1121 = vadd.f32 %v1109, %v1117
        %v1122 = vadd.f32 %v1110, %v1117
        %v1123 = vadd.f32 %v1111, %v1117
        %v1124 = vmax.f32 %v1119, 0.0
        %v1125 = vmax.f32 %v1120, 0.0
        %v1126 = vmax.f32 %v1121, 0.0
        %v1127 = vmax.f32 %v1122, 0.0
        %v1128 = vmax.f32 %v1123, 0.0
        %1129 = vst.msk [vmem:[#allocation3] sm:$0xff] %vm747, %v1124
        %1130 = vst.msk [vmem:[#allocation3 + $0x8] sm:$0xff] %vm747, %v1125
        %1131 = vst.msk [vmem:[#allocation3 + $0x10] sm:$0xff] %vm747, %v1126
        %1132 = vst.msk [vmem:[#allocation3 + $0x18] sm:$0xff] %vm747, %v1127
        %1133 = vst.msk [vmem:[#allocation3 + $0x20] sm:$0x3f] %vm752, %v1128
        %v1134 = vld [vmem:[#allocation3] ss:$2 sm:$0xff]
        %s1135 = scalar_lea.vmem [#allocation3], 16
        %v1136 = vld [vmem:[%s1135] ss:$2 sm:$0xff]
        %s1137 = scalar_lea.vmem [#allocation3], 32
        %v1138 = vld [vmem:[%s1137] ss:$2 sm:$0x1]
        %v1139 = vld [vmem:[%s5] sm:$0xff]
        %v1140 = vld [vmem:[%s5 + $0x8] sm:$0xff]
        %v1141 = vld [vmem:[%s5 + $0x10] sm:$0xff]
        %v1142 = vld [vmem:[%s5 + $0x18] sm:$0xff]
        %v1143 = vld [vmem:[%s5 + $0x20] sm:$0xff]
        %v1144 = vld [vmem:[%s5 + $0x28] sm:$0xff]
        %v1145 = vld [vmem:[%s5 + $0x30] sm:$0x3]
        %s1146 = scalar_lea.vmem [#allocation3], 1
        %v1147 = vld [vmem:[%s1146] ss:$2 sm:$0xff]
        %s1148 = scalar_lea.vmem [#allocation3], 17
        %v1149 = vld [vmem:[%s1148] ss:$2 sm:$0xff]
        %s1150 = scalar_lea.vmem [#allocation3], 33
        %v1151 = vld [vmem:[%s1150] ss:$2 sm:$0x1]
        %s1152 = scalar_lea.vmem %s5, 56
        %v1153 = vld [vmem:[%s1152] sm:$0xff]
        %v1154 = vld [vmem:[%s1152 + $0x8] sm:$0xff]
        %v1155 = vld [vmem:[%s1152 + $0x10] sm:$0xff]
        %v1156 = vld [vmem:[%s1152 + $0x18] sm:$0xff]
        %v1157 = vld [vmem:[%s1152 + $0x20] sm:$0xff]
        %v1158 = vld [vmem:[%s1152 + $0x28] sm:$0xff]
        %v1159 = vld [vmem:[%s1152 + $0x30] sm:$0x3]
        %v1161 = vsel %vm747, %v1147, 0
        %v1164 = vsel %vm747, %v1149, 0
        %v1167 = vsel %vm747, %v1151, 0
        %v1170 = vsel %vm789, %v1159, 0
        %1172 = vmatprep.subr.mxu0 0.0
        %1173 = vmatpush1.msra.mxu0 %v1153
        %1174 = vmatprep.subr.mxu0 0.0
        %1175 = vmatpush1.msra.mxu0 %v1154
        %1176 = vmatprep.subr.mxu0 0.0
        %1177 = vmatpush1.msra.mxu0 %v1155
        %1178 = vmatprep.subr.mxu0 0.0
        %1179 = vmatpush1.msra.mxu0 %v1156
        %1180 = vmatprep.subr.mxu0 0.0
        %1181 = vmatpush1.msra.mxu0 %v1157
        %1182 = vmatprep.subr.mxu0 0.0
        %1183 = vmatpush1.msra.mxu0 %v1158
        %1184 = vmatprep.subr.mxu0 0.0
        %1185 = vmatpush1.msra.mxu0 %v1170
        %1186 = vmatprep.subr.mxu0 0.0
        %1187 = vmatpush1.msra.mxu0 0.0
        %1188 = vmatprep.subr.mxu0 0.0
        %1189 = vmatpush1.msra.mxu0 0.0
        %1190 = vmatprep.subr.mxu0 0.0
        %1191 = vmatpush1.msra.mxu0 0.0
        %1192 = vmatprep.subr.mxu0 0.0
        %1193 = vmatpush1.msra.mxu0 0.0
        %1194 = vmatprep.subr.mxu0 0.0
        %1195 = vmatpush1.msra.mxu0 0.0
        %1196 = vmatprep.subr.mxu0 0.0
        %1197 = vmatpush1.msra.mxu0 0.0
        %1198 = vmatprep.subr.mxu0 0.0
        %1199 = vmatpush1.msra.mxu0 0.0
        %1200 = vmatprep.subr.mxu0 0.0
        %1201 = vmatpush1.msra.mxu0 0.0
        %1202 = vmatprep.subr.mxu0 0.0
        %1203 = vmatpush1.msra.mxu0 0.0
        %1204 = vmatprep.subr.mxu0 0.0
        %1205 = vmatpush1.msra.mxu0 0.0
        %1206 = vmatprep.subr.mxu0 0.0
        %1207 = vmatpush1.msra.mxu0 0.0
        %1208 = vmatprep.subr.mxu0 0.0
        %1209 = vmatpush1.msra.mxu0 0.0
        %1210 = vmatprep.subr.mxu0 0.0
        %1211 = vmatpush1.msra.mxu0 0.0
        %1212 = vmatprep.subr.mxu0 0.0
        %1213 = vmatpush1.msra.mxu0 0.0
        %1214 = vmatprep.subr.mxu0 0.0
        %1215 = vmatpush1.msra.mxu0 0.0
        %1216 = vmatprep.subr.mxu0 0.0
        %1217 = vmatpush1.msra.mxu0 0.0
        %1218 = vmatprep.subr.mxu0 0.0
        %1219 = vmatpush1.msra.mxu0 0.0
        %1220 = vmatprep.subr.mxu0 0.0
        %1221 = vmatpush1.msra.mxu0 0.0
        %1222 = vmatprep.subr.mxu0 0.0
        %1223 = vmatpush1.msra.mxu0 0.0
        %1224 = vmatprep.subr.mxu0 0.0
        %1225 = vmatpush1.msra.mxu0 0.0
        %1226 = vmatprep.subr.mxu0 0.0
        %1227 = vmatpush1.msra.mxu0 0.0
        %1228 = vmatprep.subr.mxu0 0.0
        %1229 = vmatpush1.msra.mxu0 0.0
        %1230 = vmatprep.subr.mxu0 0.0
        %1231 = vmatpush1.msra.mxu0 0.0
        %1232 = vmatprep.subr.mxu0 0.0
        %1233 = vmatpush1.msra.mxu0 0.0
        %1234 = vmatprep.subr.mxu0 0.0
        %1235 = vmatpush1.msra.mxu0 0.0
        %1236 = vmatprep.mubr.f32.mxu0 0.0
        %1237 = vmatmul.mubr.f32.gmra.mrb[0].mxu0 %v1161
        %v1238 = vpop.f32.mrb[0].mxu0
        %v1239 = vadd.f32 0.0, %v1238
        %v1240 = vpop.f32.mrb[0].mxu0
        %1241 = vmatprep.mubr.f32.mxu0 0.0
        %1242 = vmatmul.mubr.f32.gmra.mrb[0].mxu0 %v1164
        %v1243 = vpop.f32.mrb[0].mxu0
        %v1244 = vadd.f32 0.0, %v1243
        %v1245 = vpop.f32.mrb[0].mxu0
        %1246 = vmatprep.mubr.f32.mxu0 0.0
        %1247 = vmatmul.mubr.f32.gmra.mrb[0].mxu0 %v1167
        %v1248 = vpop.f32.mrb[0].mxu0
        %v1249 = vadd.f32 0.0, %v1248
        %v1250 = vpop.f32.mrb[0].mxu0
        %1251 = vdwg.mxu0
        %v1253 = vsel %vm747, %v1134, 0
        %v1256 = vsel %vm747, %v1136, 0
        %v1259 = vsel %vm747, %v1138, 0
        %v1262 = vsel %vm789, %v1145, 0
        %1264 = vmatprep.subr.mxu0 0.0
        %1265 = vmatpush1.msra.mxu0 %v1139
        %1266 = vmatprep.subr.mxu0 0.0
        %1267 = vmatpush1.msra.mxu0 %v1140
        %1268 = vmatprep.subr.mxu0 0.0
        %1269 = vmatpush1.msra.mxu0 %v1141
        %1270 = vmatprep.subr.mxu0 0.0
        %1271 = vmatpush1.msra.mxu0 %v1142
        %1272 = vmatprep.subr.mxu0 0.0
        %1273 = vmatpush1.msra.mxu0 %v1143
        %1274 = vmatprep.subr.mxu0 0.0
        %1275 = vmatpush1.msra.mxu0 %v1144
        %1276 = vmatprep.subr.mxu0 0.0
        %1277 = vmatpush1.msra.mxu0 %v1262
        %1278 = vmatprep.subr.mxu0 0.0
        %1279 = vmatpush1.msra.mxu0 0.0
        %1280 = vmatprep.subr.mxu0 0.0
        %1281 = vmatpush1.msra.mxu0 0.0
        %1282 = vmatprep.subr.mxu0 0.0
        %1283 = vmatpush1.msra.mxu0 0.0
        %1284 = vmatprep.subr.mxu0 0.0
        %1285 = vmatpush1.msra.mxu0 0.0
        %1286 = vmatprep.subr.mxu0 0.0
        %1287 = vmatpush1.msra.mxu0 0.0
        %1288 = vmatprep.subr.mxu0 0.0
        %1289 = vmatpush1.msra.mxu0 0.0
        %1290 = vmatprep.subr.mxu0 0.0
        %1291 = vmatpush1.msra.mxu0 0.0
        %1292 = vmatprep.subr.mxu0 0.0
        %1293 = vmatpush1.msra.mxu0 0.0
        %1294 = vmatprep.subr.mxu0 0.0
        %1295 = vmatpush1.msra.mxu0 0.0
        %1296 = vmatprep.subr.mxu0 0.0
        %1297 = vmatpush1.msra.mxu0 0.0
        %1298 = vmatprep.subr.mxu0 0.0
        %1299 = vmatpush1.msra.mxu0 0.0
        %1300 = vmatprep.subr.mxu0 0.0
        %1301 = vmatpush1.msra.mxu0 0.0
        %1302 = vmatprep.subr.mxu0 0.0
        %1303 = vmatpush1.msra.mxu0 0.0
        %1304 = vmatprep.subr.mxu0 0.0
        %1305 = vmatpush1.msra.mxu0 0.0
        %1306 = vmatprep.subr.mxu0 0.0
        %1307 = vmatpush1.msra.mxu0 0.0
        %1308 = vmatprep.subr.mxu0 0.0
        %1309 = vmatpush1.msra.mxu0 0.0
        %1310 = vmatprep.subr.mxu0 0.0
        %1311 = vmatpush1.msra.mxu0 0.0
        %1312 = vmatprep.subr.mxu0 0.0
        %1313 = vmatpush1.msra.mxu0 0.0
        %1314 = vmatprep.subr.mxu0 0.0
        %1315 = vmatpush1.msra.mxu0 0.0
        %1316 = vmatprep.subr.mxu0 0.0
        %1317 = vmatpush1.msra.mxu0 0.0
        %1318 = vmatprep.subr.mxu0 0.0
        %1319 = vmatpush1.msra.mxu0 0.0
        %1320 = vmatprep.subr.mxu0 0.0
        %1321 = vmatpush1.msra.mxu0 0.0
        %1322 = vmatprep.subr.mxu0 0.0
        %1323 = vmatpush1.msra.mxu0 0.0
        %1324 = vmatprep.subr.mxu0 0.0
        %1325 = vmatpush1.msra.mxu0 0.0
        %1326 = vmatprep.subr.mxu0 0.0
        %1327 = vmatpush1.msra.mxu0 0.0
        %1328 = vmatprep.mubr.f32.mxu0 0.0
        %1329 = vmatmul.mubr.f32.gmra.mrb[0].mxu0 %v1253
        %v1330 = vpop.f32.mrb[0].mxu0
        %v1331 = vadd.f32 %v1239, %v1330
        %v1332 = vpop.f32.mrb[0].mxu0
        %1333 = vmatprep.mubr.f32.mxu0 0.0
        %1334 = vmatmul.mubr.f32.gmra.mrb[0].mxu0 %v1256
        %v1335 = vpop.f32.mrb[0].mxu0
        %v1336 = vadd.f32 %v1244, %v1335
        %v1337 = vpop.f32.mrb[0].mxu0
        %1338 = vmatprep.mubr.f32.mxu0 0.0
        %1339 = vmatmul.mubr.f32.gmra.mrb[0].mxu0 %v1259
        %v1340 = vpop.f32.mrb[0].mxu0
        %v1341 = vadd.f32 %v1249, %v1340
        %v1342 = vpop.f32.mrb[0].mxu0
        %1343 = vdwg.mxu0
        %s1344 = scalar_lea.vmem [#allocation3], 2
        %v1345 = vld [vmem:[%s1344] ss:$2 sm:$0xff]
        %s1346 = scalar_lea.vmem [#allocation3], 18
        %v1347 = vld [vmem:[%s1346] ss:$2 sm:$0xff]
        %s1348 = scalar_lea.vmem [#allocation3], 34
        %v1349 = vld [vmem:[%s1348] ss:$2 sm:$0x1]
        %s1350 = scalar_lea.vmem %s5, 112
        %v1351 = vld [vmem:[%s1350] sm:$0xff]
        %v1352 = vld [vmem:[%s1350 + $0x8] sm:$0xff]
        %v1353 = vld [vmem:[%s1350 + $0x10] sm:$0xff]
        %v1354 = vld [vmem:[%s1350 + $0x18] sm:$0xff]
        %v1355 = vld [vmem:[%s1350 + $0x20] sm:$0xff]
        %v1356 = vld [vmem:[%s1350 + $0x28] sm:$0xff]
        %v1357 = vld [vmem:[%s1350 + $0x30] sm:$0x3]
        %v1359 = vsel %vm747, %v1345, 0
        %v1362 = vsel %vm747, %v1347, 0
        %v1365 = vsel %vm747, %v1349, 0
        %v1368 = vsel %vm789, %v1357, 0
        %1370 = vmatprep.subr.mxu0 0.0
        %1371 = vmatpush1.msra.mxu0 %v1351
        %1372 = vmatprep.subr.mxu0 0.0
        %1373 = vmatpush1.msra.mxu0 %v1352
        %1374 = vmatprep.subr.mxu0 0.0
        %1375 = vmatpush1.msra.mxu0 %v1353
        %1376 = vmatprep.subr.mxu0 0.0
        %1377 = vmatpush1.msra.mxu0 %v1354
        %1378 = vmatprep.subr.mxu0 0.0
        %1379 = vmatpush1.msra.mxu0 %v1355
        %1380 = vmatprep.subr.mxu0 0.0
        %1381 = vmatpush1.msra.mxu0 %v1356
        %1382 = vmatprep.subr.mxu0 0.0
        %1383 = vmatpush1.msra.mxu0 %v1368
        %1384 = vmatprep.subr.mxu0 0.0
        %1385 = vmatpush1.msra.mxu0 0.0
        %1386 = vmatprep.subr.mxu0 0.0
        %1387 = vmatpush1.msra.mxu0 0.0
        %1388 = vmatprep.subr.mxu0 0.0
        %1389 = vmatpush1.msra.mxu0 0.0
        %1390 = vmatprep.subr.mxu0 0.0
        %1391 = vmatpush1.msra.mxu0 0.0
        %1392 = vmatprep.subr.mxu0 0.0
        %1393 = vmatpush1.msra.mxu0 0.0
        %1394 = vmatprep.subr.mxu0 0.0
        %1395 = vmatpush1.msra.mxu0 0.0
        %1396 = vmatprep.subr.mxu0 0.0
        %1397 = vmatpush1.msra.mxu0 0.0
        %1398 = vmatprep.subr.mxu0 0.0
        %1399 = vmatpush1.msra.mxu0 0.0
        %1400 = vmatprep.subr.mxu0 0.0
        %1401 = vmatpush1.msra.mxu0 0.0
        %1402 = vmatprep.subr.mxu0 0.0
        %1403 = vmatpush1.msra.mxu0 0.0
        %1404 = vmatprep.subr.mxu0 0.0
        %1405 = vmatpush1.msra.mxu0 0.0
        %1406 = vmatprep.subr.mxu0 0.0
        %1407 = vmatpush1.msra.mxu0 0.0
        %1408 = vmatprep.subr.mxu0 0.0
        %1409 = vmatpush1.msra.mxu0 0.0
        %1410 = vmatprep.subr.mxu0 0.0
        %1411 = vmatpush1.msra.mxu0 0.0
        %1412 = vmatprep.subr.mxu0 0.0
        %1413 = vmatpush1.msra.mxu0 0.0
        %1414 = vmatprep.subr.mxu0 0.0
        %1415 = vmatpush1.msra.mxu0 0.0
        %1416 = vmatprep.subr.mxu0 0.0
        %1417 = vmatpush1.msra.mxu0 0.0
        %1418 = vmatprep.subr.mxu0 0.0
        %1419 = vmatpush1.msra.mxu0 0.0
        %1420 = vmatprep.subr.mxu0 0.0
        %1421 = vmatpush1.msra.mxu0 0.0
        %1422 = vmatprep.subr.mxu0 0.0
        %1423 = vmatpush1.msra.mxu0 0.0
        %1424 = vmatprep.subr.mxu0 0.0
        %1425 = vmatpush1.msra.mxu0 0.0
        %1426 = vmatprep.subr.mxu0 0.0
        %1427 = vmatpush1.msra.mxu0 0.0
        %1428 = vmatprep.subr.mxu0 0.0
        %1429 = vmatpush1.msra.mxu0 0.0
        %1430 = vmatprep.subr.mxu0 0.0
        %1431 = vmatpush1.msra.mxu0 0.0
        %1432 = vmatprep.subr.mxu0 0.0
        %1433 = vmatpush1.msra.mxu0 0.0
        %1434 = vmatprep.mubr.f32.mxu0 0.0
        %1435 = vmatmul.mubr.f32.gmra.mrb[0].mxu0 %v1359
        %v1436 = vpop.f32.mrb[0].mxu0
        %v1437 = vadd.f32 0.0, %v1436
        %v1438 = vpop.f32.mrb[0].mxu0
        %1439 = vmatprep.mubr.f32.mxu0 0.0
        %1440 = vmatmul.mubr.f32.gmra.mrb[0].mxu0 %v1362
        %v1441 = vpop.f32.mrb[0].mxu0
        %v1442 = vadd.f32 0.0, %v1441
        %v1443 = vpop.f32.mrb[0].mxu0
        %1444 = vmatprep.mubr.f32.mxu0 0.0
        %1445 = vmatmul.mubr.f32.gmra.mrb[0].mxu0 %v1365
        %v1446 = vpop.f32.mrb[0].mxu0
        %v1447 = vadd.f32 0.0, %v1446
        %v1448 = vpop.f32.mrb[0].mxu0
        %1449 = vdwg.mxu0
        %v1450 = vadd.f32 %v1331, %v1437
        %v1451 = vadd.f32 %v1336, %v1442
        %v1452 = vadd.f32 %v1341, %v1447
        %s1453 = scalar_lea.vmem [#allocation3], 3
        %v1454 = vld [vmem:[%s1453] ss:$2 sm:$0xff]
        %s1455 = scalar_lea.vmem [#allocation3], 19
        %v1456 = vld [vmem:[%s1455] ss:$2 sm:$0xff]
        %s1457 = scalar_lea.vmem [#allocation3], 35
        %v1458 = vld [vmem:[%s1457] ss:$2 sm:$0x1]
        %s1459 = scalar_lea.vmem %s5, 168
        %v1460 = vld [vmem:[%s1459] sm:$0xff]
        %v1461 = vld [vmem:[%s1459 + $0x8] sm:$0xff]
        %v1462 = vld [vmem:[%s1459 + $0x10] sm:$0xff]
        %v1463 = vld [vmem:[%s1459 + $0x18] sm:$0xff]
        %v1464 = vld [vmem:[%s1459 + $0x20] sm:$0xff]
        %v1465 = vld [vmem:[%s1459 + $0x28] sm:$0xff]
        %v1466 = vld [vmem:[%s1459 + $0x30] sm:$0x3]
        %v1468 = vsel %vm747, %v1454, 0
        %v1471 = vsel %vm747, %v1456, 0
        %v1474 = vsel %vm747, %v1458, 0
        %v1477 = vsel %vm789, %v1466, 0
        %1479 = vmatprep.subr.mxu0 0.0
        %1480 = vmatpush1.msra.mxu0 %v1460
        %1481 = vmatprep.subr.mxu0 0.0
        %1482 = vmatpush1.msra.mxu0 %v1461
        %1483 = vmatprep.subr.mxu0 0.0
        %1484 = vmatpush1.msra.mxu0 %v1462
        %1485 = vmatprep.subr.mxu0 0.0
        %1486 = vmatpush1.msra.mxu0 %v1463
        %1487 = vmatprep.subr.mxu0 0.0
        %1488 = vmatpush1.msra.mxu0 %v1464
        %1489 = vmatprep.subr.mxu0 0.0
        %1490 = vmatpush1.msra.mxu0 %v1465
        %1491 = vmatprep.subr.mxu0 0.0
        %1492 = vmatpush1.msra.mxu0 %v1477
        %1493 = vmatprep.subr.mxu0 0.0
        %1494 = vmatpush1.msra.mxu0 0.0
        %1495 = vmatprep.subr.mxu0 0.0
        %1496 = vmatpush1.msra.mxu0 0.0
        %1497 = vmatprep.subr.mxu0 0.0
        %1498 = vmatpush1.msra.mxu0 0.0
        %1499 = vmatprep.subr.mxu0 0.0
        %1500 = vmatpush1.msra.mxu0 0.0
        %1501 = vmatprep.subr.mxu0 0.0
        %1502 = vmatpush1.msra.mxu0 0.0
        %1503 = vmatprep.subr.mxu0 0.0
        %1504 = vmatpush1.msra.mxu0 0.0
        %1505 = vmatprep.subr.mxu0 0.0
        %1506 = vmatpush1.msra.mxu0 0.0
        %1507 = vmatprep.subr.mxu0 0.0
        %1508 = vmatpush1.msra.mxu0 0.0
        %1509 = vmatprep.subr.mxu0 0.0
        %1510 = vmatpush1.msra.mxu0 0.0
        %1511 = vmatprep.subr.mxu0 0.0
        %1512 = vmatpush1.msra.mxu0 0.0
        %1513 = vmatprep.subr.mxu0 0.0
        %1514 = vmatpush1.msra.mxu0 0.0
        %1515 = vmatprep.subr.mxu0 0.0
        %1516 = vmatpush1.msra.mxu0 0.0
        %1517 = vmatprep.subr.mxu0 0.0
        %1518 = vmatpush1.msra.mxu0 0.0
        %1519 = vmatprep.subr.mxu0 0.0
        %1520 = vmatpush1.msra.mxu0 0.0
        %1521 = vmatprep.subr.mxu0 0.0
        %1522 = vmatpush1.msra.mxu0 0.0
        %1523 = vmatprep.subr.mxu0 0.0
        %1524 = vmatpush1.msra.mxu0 0.0
        %1525 = vmatprep.subr.mxu0 0.0
        %1526 = vmatpush1.msra.mxu0 0.0
        %1527 = vmatprep.subr.mxu0 0.0
        %1528 = vmatpush1.msra.mxu0 0.0
        %1529 = vmatprep.subr.mxu0 0.0
        %1530 = vmatpush1.msra.mxu0 0.0
        %1531 = vmatprep.subr.mxu0 0.0
        %1532 = vmatpush1.msra.mxu0 0.0
        %1533 = vmatprep.subr.mxu0 0.0
        %1534 = vmatpush1.msra.mxu0 0.0
        %1535 = vmatprep.subr.mxu0 0.0
        %1536 = vmatpush1.msra.mxu0 0.0
        %1537 = vmatprep.subr.mxu0 0.0
        %1538 = vmatpush1.msra.mxu0 0.0
        %1539 = vmatprep.subr.mxu0 0.0
        %1540 = vmatpush1.msra.mxu0 0.0
        %1541 = vmatprep.subr.mxu0 0.0
        %1542 = vmatpush1.msra.mxu0 0.0
        %1543 = vmatprep.mubr.f32.mxu0 0.0
        %1544 = vmatmul.mubr.f32.gmra.mrb[0].mxu0 %v1468
        %v1545 = vpop.f32.mrb[0].mxu0
        %v1546 = vadd.f32 0.0, %v1545
        %v1547 = vpop.f32.mrb[0].mxu0
        %1548 = vmatprep.mubr.f32.mxu0 0.0
        %1549 = vmatmul.mubr.f32.gmra.mrb[0].mxu0 %v1471
        %v1550 = vpop.f32.mrb[0].mxu0
        %v1551 = vadd.f32 0.0, %v1550
        %v1552 = vpop.f32.mrb[0].mxu0
        %1553 = vmatprep.mubr.f32.mxu0 0.0
        %1554 = vmatmul.mubr.f32.gmra.mrb[0].mxu0 %v1474
        %v1555 = vpop.f32.mrb[0].mxu0
        %v1556 = vadd.f32 0.0, %v1555
        %v1557 = vpop.f32.mrb[0].mxu0
        %1558 = vdwg.mxu0
        %v1559 = vadd.f32 %v1450, %v1546
        %v1560 = vadd.f32 %v1451, %v1551
        %v1561 = vadd.f32 %v1452, %v1556
        %s1562 = scalar_lea.vmem [#allocation3], 4
        %v1563 = vld [vmem:[%s1562] ss:$2 sm:$0xff]
        %s1564 = scalar_lea.vmem [#allocation3], 20
        %v1565 = vld [vmem:[%s1564] ss:$2 sm:$0xff]
        %s1566 = scalar_lea.vmem [#allocation3], 36
        %v1567 = vld [vmem:[%s1566] ss:$2 sm:$0x1]
        %s1568 = scalar_lea.vmem %s5, 224
        %v1569 = vld [vmem:[%s1568] sm:$0xff]
        %v1570 = vld [vmem:[%s1568 + $0x8] sm:$0xff]
        %v1571 = vld [vmem:[%s1568 + $0x10] sm:$0xff]
        %v1572 = vld [vmem:[%s1568 + $0x18] sm:$0xff]
        %v1573 = vld [vmem:[%s1568 + $0x20] sm:$0xff]
        %v1574 = vld [vmem:[%s1568 + $0x28] sm:$0xff]
        %v1575 = vld [vmem:[%s1568 + $0x30] sm:$0x3]
        %v1577 = vsel %vm747, %v1563, 0
        %v1580 = vsel %vm747, %v1565, 0
        %v1583 = vsel %vm747, %v1567, 0
        %v1586 = vsel %vm789, %v1575, 0
        %1588 = vmatprep.subr.mxu0 0.0
        %1589 = vmatpush1.msra.mxu0 %v1569
        %1590 = vmatprep.subr.mxu0 0.0
        %1591 = vmatpush1.msra.mxu0 %v1570
        %1592 = vmatprep.subr.mxu0 0.0
        %1593 = vmatpush1.msra.mxu0 %v1571
        %1594 = vmatprep.subr.mxu0 0.0
        %1595 = vmatpush1.msra.mxu0 %v1572
        %1596 = vmatprep.subr.mxu0 0.0
        %1597 = vmatpush1.msra.mxu0 %v1573
        %1598 = vmatprep.subr.mxu0 0.0
        %1599 = vmatpush1.msra.mxu0 %v1574
        %1600 = vmatprep.subr.mxu0 0.0
        %1601 = vmatpush1.msra.mxu0 %v1586
        %1602 = vmatprep.subr.mxu0 0.0
        %1603 = vmatpush1.msra.mxu0 0.0
        %1604 = vmatprep.subr.mxu0 0.0
        %1605 = vmatpush1.msra.mxu0 0.0
        %1606 = vmatprep.subr.mxu0 0.0
        %1607 = vmatpush1.msra.mxu0 0.0
        %1608 = vmatprep.subr.mxu0 0.0
        %1609 = vmatpush1.msra.mxu0 0.0
        %1610 = vmatprep.subr.mxu0 0.0
        %1611 = vmatpush1.msra.mxu0 0.0
        %1612 = vmatprep.subr.mxu0 0.0
        %1613 = vmatpush1.msra.mxu0 0.0
        %1614 = vmatprep.subr.mxu0 0.0
        %1615 = vmatpush1.msra.mxu0 0.0
        %1616 = vmatprep.subr.mxu0 0.0
        %1617 = vmatpush1.msra.mxu0 0.0
        %1618 = vmatprep.subr.mxu0 0.0
        %1619 = vmatpush1.msra.mxu0 0.0
        %1620 = vmatprep.subr.mxu0 0.0
        %1621 = vmatpush1.msra.mxu0 0.0
        %1622 = vmatprep.subr.mxu0 0.0
        %1623 = vmatpush1.msra.mxu0 0.0
        %1624 = vmatprep.subr.mxu0 0.0
        %1625 = vmatpush1.msra.mxu0 0.0
        %1626 = vmatprep.subr.mxu0 0.0
        %1627 = vmatpush1.msra.mxu0 0.0
        %1628 = vmatprep.subr.mxu0 0.0
        %1629 = vmatpush1.msra.mxu0 0.0
        %1630 = vmatprep.subr.mxu0 0.0
        %1631 = vmatpush1.msra.mxu0 0.0
        %1632 = vmatprep.subr.mxu0 0.0
        %1633 = vmatpush1.msra.mxu0 0.0
        %1634 = vmatprep.subr.mxu0 0.0
        %1635 = vmatpush1.msra.mxu0 0.0
        %1636 = vmatprep.subr.mxu0 0.0
        %1637 = vmatpush1.msra.mxu0 0.0
        %1638 = vmatprep.subr.mxu0 0.0
        %1639 = vmatpush1.msra.mxu0 0.0
        %1640 = vmatprep.subr.mxu0 0.0
        %1641 = vmatpush1.msra.mxu0 0.0
        %1642 = vmatprep.subr.mxu0 0.0
        %1643 = vmatpush1.msra.mxu0 0.0
        %1644 = vmatprep.subr.mxu0 0.0
        %1645 = vmatpush1.msra.mxu0 0.0
        %1646 = vmatprep.subr.mxu0 0.0
        %1647 = vmatpush1.msra.mxu0 0.0
        %1648 = vmatprep.subr.mxu0 0.0
        %1649 = vmatpush1.msra.mxu0 0.0
        %1650 = vmatprep.subr.mxu0 0.0
        %1651 = vmatpush1.msra.mxu0 0.0
        %1652 = vmatprep.mubr.f32.mxu0 0.0
        %1653 = vmatmul.mubr.f32.gmra.mrb[0].mxu0 %v1577
        %v1654 = vpop.f32.mrb[0].mxu0
        %v1655 = vadd.f32 0.0, %v1654
        %v1656 = vpop.f32.mrb[0].mxu0
        %1657 = vmatprep.mubr.f32.mxu0 0.0
        %1658 = vmatmul.mubr.f32.gmra.mrb[0].mxu0 %v1580
        %v1659 = vpop.f32.mrb[0].mxu0
        %v1660 = vadd.f32 0.0, %v1659
        %v1661 = vpop.f32.mrb[0].mxu0
        %1662 = vmatprep.mubr.f32.mxu0 0.0
        %1663 = vmatmul.mubr.f32.gmra.mrb[0].mxu0 %v1583
        %v1664 = vpop.f32.mrb[0].mxu0
        %v1665 = vadd.f32 0.0, %v1664
        %v1666 = vpop.f32.mrb[0].mxu0
        %1667 = vdwg.mxu0
        %v1668 = vadd.f32 %v1559, %v1655
        %v1669 = vadd.f32 %v1560, %v1660
        %v1670 = vadd.f32 %v1561, %v1665
        %v1671 = vld [vmem:[%s6] sm:$0x1]
        %v1673 = vlaneseq
        %v1674 = vshrl.u32 %v1673, 7
        %v1675 = vsub.s32 0, %v1674
        %v1676 = vrot.slane %v1671, %v1675
        %v1678 = vadd.f32 %v1668, %v1676
        %v1679 = vadd.f32 %v1669, %v1676
        %v1680 = vadd.f32 %v1670, %v1676
        %v1681 = vmax.f32 %v1678, 0.0
        %v1682 = vmax.f32 %v1679, 0.0
        %v1683 = vmax.f32 %v1680, 0.0
        %v1684 = vld [vmem:[%s7] sm:$0xff]
        %v1685 = vld [vmem:[%s7 + $0x8] sm:$0xff]
        %v1686 = vld [vmem:[%s7 + $0x10] sm:$0xff]
        %v1687 = vld [vmem:[%s7 + $0x18] sm:$0xff]
        %v1688 = vld [vmem:[%s7 + $0x20] sm:$0xff]
        %s1689 = scalar_lea.vmem %s7, 40
        %v1690 = vld [vmem:[%s1689] sm:$0xff]
        %v1691 = vld [vmem:[%s1689 + $0x8] sm:$0xff]
        %v1692 = vld [vmem:[%s1689 + $0x10] sm:$0xff]
        %v1693 = vld [vmem:[%s1689 + $0x18] sm:$0xff]
        %v1694 = vld [vmem:[%s1689 + $0x20] sm:$0xff]
        %vm1697 = vcmask 1046528
        %v1698 = vrot.slane %v1681, 1
        %v1699 = vrot.slane %v1682, 1
        %v1700 = vsel %vm1697, %v1698, %v1699
        %vm1701 = vcmask 326656
        %v1702 = vsel %vm1701, %v1700, 0
        %v1704 = vsel %vm1701, %v1699, 0
        %1706 = vmatprep.subr.mxu0 0.0
        %1707 = vmatpush1.msra.mxu0 %v1690
        %1708 = vmatprep.subr.mxu0 0.0
        %1709 = vmatpush1.msra.mxu0 %v1691
        %1710 = vmatprep.subr.mxu0 0.0
        %1711 = vmatpush1.msra.mxu0 %v1692
        %1712 = vmatprep.subr.mxu0 0.0
        %1713 = vmatpush1.msra.mxu0 %v1693
        %1714 = vmatprep.subr.mxu0 0.0
        %1715 = vmatpush1.msra.mxu0 %v1694
        %1716 = vmatprep.subr.mxu0 0.0
        %1717 = vmatpush1.msra.mxu0 0.0
        %1718 = vmatprep.subr.mxu0 0.0
        %1719 = vmatpush1.msra.mxu0 0.0
        %1720 = vmatprep.subr.mxu0 0.0
        %1721 = vmatpush1.msra.mxu0 0.0
        %1722 = vmatprep.subr.mxu0 0.0
        %1723 = vmatpush1.msra.mxu0 0.0
        %1724 = vmatprep.subr.mxu0 0.0
        %1725 = vmatpush1.msra.mxu0 0.0
        %1726 = vmatprep.subr.mxu0 0.0
        %1727 = vmatpush1.msra.mxu0 0.0
        %1728 = vmatprep.subr.mxu0 0.0
        %1729 = vmatpush1.msra.mxu0 0.0
        %1730 = vmatprep.subr.mxu0 0.0
        %1731 = vmatpush1.msra.mxu0 0.0
        %1732 = vmatprep.subr.mxu0 0.0
        %1733 = vmatpush1.msra.mxu0 0.0
        %1734 = vmatprep.subr.mxu0 0.0
        %1735 = vmatpush1.msra.mxu0 0.0
        %1736 = vmatprep.subr.mxu0 0.0
        %1737 = vmatpush1.msra.mxu0 0.0
        %1738 = vmatprep.subr.mxu0 0.0
        %1739 = vmatpush1.msra.mxu0 0.0
        %1740 = vmatprep.subr.mxu0 0.0
        %1741 = vmatpush1.msra.mxu0 0.0
        %1742 = vmatprep.subr.mxu0 0.0
        %1743 = vmatpush1.msra.mxu0 0.0
        %1744 = vmatprep.subr.mxu0 0.0
        %1745 = vmatpush1.msra.mxu0 0.0
        %1746 = vmatprep.subr.mxu0 0.0
        %1747 = vmatpush1.msra.mxu0 0.0
        %1748 = vmatprep.subr.mxu0 0.0
        %1749 = vmatpush1.msra.mxu0 0.0
        %1750 = vmatprep.subr.mxu0 0.0
        %1751 = vmatpush1.msra.mxu0 0.0
        %1752 = vmatprep.subr.mxu0 0.0
        %1753 = vmatpush1.msra.mxu0 0.0
        %1754 = vmatprep.subr.mxu0 0.0
        %1755 = vmatpush1.msra.mxu0 0.0
        %1756 = vmatprep.subr.mxu0 0.0
        %1757 = vmatpush1.msra.mxu0 0.0
        %1758 = vmatprep.subr.mxu0 0.0
        %1759 = vmatpush1.msra.mxu0 0.0
        %1760 = vmatprep.subr.mxu0 0.0
        %1761 = vmatpush1.msra.mxu0 0.0
        %1762 = vmatprep.subr.mxu0 0.0
        %1763 = vmatpush1.msra.mxu0 0.0
        %1764 = vmatprep.subr.mxu0 0.0
        %1765 = vmatpush1.msra.mxu0 0.0
        %1766 = vmatprep.subr.mxu0 0.0
        %1767 = vmatpush1.msra.mxu0 0.0
        %1768 = vmatprep.subr.mxu0 0.0
        %1769 = vmatpush1.msra.mxu0 0.0
        %1770 = vmatprep.mubr.f32.mxu0 0.0
        %1771 = vmatmul.mubr.f32.gmra.mrb[0].mxu0 %v1702
        %v1772 = vpop.f32.mrb[0].mxu0
        %v1773 = vadd.f32 0.0, %v1772
        %v1774 = vpop.f32.mrb[0].mxu0
        %1775 = vmatprep.mubr.f32.mxu0 0.0
        %1776 = vmatmul.mubr.f32.gmra.mrb[0].mxu0 %v1704
        %v1777 = vpop.f32.mrb[0].mxu0
        %v1778 = vadd.f32 0.0, %v1777
        %v1779 = vpop.f32.mrb[0].mxu0
        %1780 = vdwg.mxu0
        %v1781 = vsel %vm1701, %v1681, 0
        %v1783 = vsel %vm1701, %v1682, 0
        %1785 = vmatprep.subr.mxu0 0.0
        %1786 = vmatpush1.msra.mxu0 %v1684
        %1787 = vmatprep.subr.mxu0 0.0
        %1788 = vmatpush1.msra.mxu0 %v1685
        %1789 = vmatprep.subr.mxu0 0.0
        %1790 = vmatpush1.msra.mxu0 %v1686
        %1791 = vmatprep.subr.mxu0 0.0
        %1792 = vmatpush1.msra.mxu0 %v1687
        %1793 = vmatprep.subr.mxu0 0.0
        %1794 = vmatpush1.msra.mxu0 %v1688
        %1795 = vmatprep.subr.mxu0 0.0
        %1796 = vmatpush1.msra.mxu0 0.0
        %1797 = vmatprep.subr.mxu0 0.0
        %1798 = vmatpush1.msra.mxu0 0.0
        %1799 = vmatprep.subr.mxu0 0.0
        %1800 = vmatpush1.msra.mxu0 0.0
        %1801 = vmatprep.subr.mxu0 0.0
        %1802 = vmatpush1.msra.mxu0 0.0
        %1803 = vmatprep.subr.mxu0 0.0
        %1804 = vmatpush1.msra.mxu0 0.0
        %1805 = vmatprep.subr.mxu0 0.0
        %1806 = vmatpush1.msra.mxu0 0.0
        %1807 = vmatprep.subr.mxu0 0.0
        %1808 = vmatpush1.msra.mxu0 0.0
        %1809 = vmatprep.subr.mxu0 0.0
        %1810 = vmatpush1.msra.mxu0 0.0
        %1811 = vmatprep.subr.mxu0 0.0
        %1812 = vmatpush1.msra.mxu0 0.0
        %1813 = vmatprep.subr.mxu0 0.0
        %1814 = vmatpush1.msra.mxu0 0.0
        %1815 = vmatprep.subr.mxu0 0.0
        %1816 = vmatpush1.msra.mxu0 0.0
        %1817 = vmatprep.subr.mxu0 0.0
        %1818 = vmatpush1.msra.mxu0 0.0
        %1819 = vmatprep.subr.mxu0 0.0
        %1820 = vmatpush1.msra.mxu0 0.0
        %1821 = vmatprep.subr.mxu0 0.0
        %1822 = vmatpush1.msra.mxu0 0.0
        %1823 = vmatprep.subr.mxu0 0.0
        %1824 = vmatpush1.msra.mxu0 0.0
        %1825 = vmatprep.subr.mxu0 0.0
        %1826 = vmatpush1.msra.mxu0 0.0
        %1827 = vmatprep.subr.mxu0 0.0
        %1828 = vmatpush1.msra.mxu0 0.0
        %1829 = vmatprep.subr.mxu0 0.0
        %1830 = vmatpush1.msra.mxu0 0.0
        %1831 = vmatprep.subr.mxu0 0.0
        %1832 = vmatpush1.msra.mxu0 0.0
        %1833 = vmatprep.subr.mxu0 0.0
        %1834 = vmatpush1.msra.mxu0 0.0
        %1835 = vmatprep.subr.mxu0 0.0
        %1836 = vmatpush1.msra.mxu0 0.0
        %1837 = vmatprep.subr.mxu0 0.0
        %1838 = vmatpush1.msra.mxu0 0.0
        %1839 = vmatprep.subr.mxu0 0.0
        %1840 = vmatpush1.msra.mxu0 0.0
        %1841 = vmatprep.subr.mxu0 0.0
        %1842 = vmatpush1.msra.mxu0 0.0
        %1843 = vmatprep.subr.mxu0 0.0
        %1844 = vmatpush1.msra.mxu0 0.0
        %1845 = vmatprep.subr.mxu0 0.0
        %1846 = vmatpush1.msra.mxu0 0.0
        %1847 = vmatprep.subr.mxu0 0.0
        %1848 = vmatpush1.msra.mxu0 0.0
        %1849 = vmatprep.mubr.f32.mxu0 0.0
        %1850 = vmatmul.mubr.f32.gmra.mrb[0].mxu0 %v1781
        %v1851 = vpop.f32.mrb[0].mxu0
        %v1852 = vadd.f32 %v1773, %v1851
        %v1853 = vpop.f32.mrb[0].mxu0
        %1854 = vmatprep.mubr.f32.mxu0 0.0
        %1855 = vmatmul.mubr.f32.gmra.mrb[0].mxu0 %v1783
        %v1856 = vpop.f32.mrb[0].mxu0
        %v1857 = vadd.f32 %v1778, %v1856
        %v1858 = vpop.f32.mrb[0].mxu0
        %1859 = vdwg.mxu0
        %s1860 = scalar_lea.vmem %s7, 80
        %v1861 = vld [vmem:[%s1860] sm:$0xff]
        %v1862 = vld [vmem:[%s1860 + $0x8] sm:$0xff]
        %v1863 = vld [vmem:[%s1860 + $0x10] sm:$0xff]
        %v1864 = vld [vmem:[%s1860 + $0x18] sm:$0xff]
        %v1865 = vld [vmem:[%s1860 + $0x20] sm:$0xff]
        %vm1867 = vcmask 1045504
        %v1868 = vrot.slane %v1681, 2
        %v1869 = vrot.slane %v1682, 2
        %v1870 = vsel %vm1867, %v1868, %v1869
        %v1871 = vrot.slane %v1683, 2
        %v1872 = vsel %vm1867, %v1869, %v1871
        %v1873 = vsel %vm1701, %v1870, 0
        %v1875 = vsel %vm1701, %v1872, 0
        %1877 = vmatprep.subr.mxu0 0.0
        %1878 = vmatpush1.msra.mxu0 %v1861
        %1879 = vmatprep.subr.mxu0 0.0
        %1880 = vmatpush1.msra.mxu0 %v1862
        %1881 = vmatprep.subr.mxu0 0.0
        %1882 = vmatpush1.msra.mxu0 %v1863
        %1883 = vmatprep.subr.mxu0 0.0
        %1884 = vmatpush1.msra.mxu0 %v1864
        %1885 = vmatprep.subr.mxu0 0.0
        %1886 = vmatpush1.msra.mxu0 %v1865
        %1887 = vmatprep.subr.mxu0 0.0
        %1888 = vmatpush1.msra.mxu0 0.0
        %1889 = vmatprep.subr.mxu0 0.0
        %1890 = vmatpush1.msra.mxu0 0.0
        %1891 = vmatprep.subr.mxu0 0.0
        %1892 = vmatpush1.msra.mxu0 0.0
        %1893 = vmatprep.subr.mxu0 0.0
        %1894 = vmatpush1.msra.mxu0 0.0
        %1895 = vmatprep.subr.mxu0 0.0
        %1896 = vmatpush1.msra.mxu0 0.0
        %1897 = vmatprep.subr.mxu0 0.0
        %1898 = vmatpush1.msra.mxu0 0.0
        %1899 = vmatprep.subr.mxu0 0.0
        %1900 = vmatpush1.msra.mxu0 0.0
        %1901 = vmatprep.subr.mxu0 0.0
        %1902 = vmatpush1.msra.mxu0 0.0
        %1903 = vmatprep.subr.mxu0 0.0
        %1904 = vmatpush1.msra.mxu0 0.0
        %1905 = vmatprep.subr.mxu0 0.0
        %1906 = vmatpush1.msra.mxu0 0.0
        %1907 = vmatprep.subr.mxu0 0.0
        %1908 = vmatpush1.msra.mxu0 0.0
        %1909 = vmatprep.subr.mxu0 0.0
        %1910 = vmatpush1.msra.mxu0 0.0
        %1911 = vmatprep.subr.mxu0 0.0
        %1912 = vmatpush1.msra.mxu0 0.0
        %1913 = vmatprep.subr.mxu0 0.0
        %1914 = vmatpush1.msra.mxu0 0.0
        %1915 = vmatprep.subr.mxu0 0.0
        %1916 = vmatpush1.msra.mxu0 0.0
        %1917 = vmatprep.subr.mxu0 0.0
        %1918 = vmatpush1.msra.mxu0 0.0
        %1919 = vmatprep.subr.mxu0 0.0
        %1920 = vmatpush1.msra.mxu0 0.0
        %1921 = vmatprep.subr.mxu0 0.0
        %1922 = vmatpush1.msra.mxu0 0.0
        %1923 = vmatprep.subr.mxu0 0.0
        %1924 = vmatpush1.msra.mxu0 0.0
        %1925 = vmatprep.subr.mxu0 0.0
        %1926 = vmatpush1.msra.mxu0 0.0
        %1927 = vmatprep.subr.mxu0 0.0
        %1928 = vmatpush1.msra.mxu0 0.0
        %1929 = vmatprep.subr.mxu0 0.0
        %1930 = vmatpush1.msra.mxu0 0.0
        %1931 = vmatprep.subr.mxu0 0.0
        %1932 = vmatpush1.msra.mxu0 0.0
        %1933 = vmatprep.subr.mxu0 0.0
        %1934 = vmatpush1.msra.mxu0 0.0
        %1935 = vmatprep.subr.mxu0 0.0
        %1936 = vmatpush1.msra.mxu0 0.0
        %1937 = vmatprep.subr.mxu0 0.0
        %1938 = vmatpush1.msra.mxu0 0.0
        %1939 = vmatprep.subr.mxu0 0.0
        %1940 = vmatpush1.msra.mxu0 0.0
        %1941 = vmatprep.mubr.f32.mxu0 0.0
        %1942 = vmatmul.mubr.f32.gmra.mrb[0].mxu0 %v1873
        %v1943 = vpop.f32.mrb[0].mxu0
        %v1944 = vadd.f32 0.0, %v1943
        %v1945 = vpop.f32.mrb[0].mxu0
        %1946 = vmatprep.mubr.f32.mxu0 0.0
        %1947 = vmatmul.mubr.f32.gmra.mrb[0].mxu0 %v1875
        %v1948 = vpop.f32.mrb[0].mxu0
        %v1949 = vadd.f32 0.0, %v1948
        %v1950 = vpop.f32.mrb[0].mxu0
        %1951 = vdwg.mxu0
        %v1952 = vadd.f32 %v1852, %v1944
        %v1953 = vadd.f32 %v1857, %v1949
        %v1954 = vld [vmem:[%s8] sm:$0x1]
        %v1956 = vlaneseq
        %v1957 = vshrl.u32 %v1956, 7
        %v1958 = vsub.s32 0, %v1957
        %v1959 = vrot.slane %v1954, %v1958
        %v1961 = vadd.f32 %v1952, %v1959
        %v1962 = vadd.f32 %v1953, %v1959
        %v1963 = vmax.f32 %v1961, 0.0
        %v1964 = vmax.f32 %v1962, 0.0
        %v1965 = vld [vmem:[%s10] sm:$0x1]
        %v1966 = vld [vmem:[%s9] sm:$0xff]
        %v1967 = vld [vmem:[%s9 + $0x8] sm:$0xff]
        %v1968 = vld [vmem:[%s9 + $0x10] sm:$0xf]
        %vm1969 = vcmask 162816
        %v1971 = vsel %vm1969, %v1963, 0
        %vm1973 = vcmask 1043456
        %v1975 = vsel %vm1973, %v1968, 0
        %1977 = vmatprep.subr.mxu0 0.0
        %1978 = vmatpush1.msra.mxu0 %v1966
        %1979 = vmatprep.subr.mxu0 0.0
        %1980 = vmatpush1.msra.mxu0 %v1967
        %1981 = vmatprep.subr.mxu0 0.0
        %1982 = vmatpush1.msra.mxu0 %v1975
        %1983 = vmatprep.subr.mxu0 0.0
        %1984 = vmatpush1.msra.mxu0 0.0
        %1985 = vmatprep.subr.mxu0 0.0
        %1986 = vmatpush1.msra.mxu0 0.0
        %1987 = vmatprep.subr.mxu0 0.0
        %1988 = vmatpush1.msra.mxu0 0.0
        %1989 = vmatprep.subr.mxu0 0.0
        %1990 = vmatpush1.msra.mxu0 0.0
        %1991 = vmatprep.subr.mxu0 0.0
        %1992 = vmatpush1.msra.mxu0 0.0
        %1993 = vmatprep.subr.mxu0 0.0
        %1994 = vmatpush1.msra.mxu0 0.0
        %1995 = vmatprep.subr.mxu0 0.0
        %1996 = vmatpush1.msra.mxu0 0.0
        %1997 = vmatprep.subr.mxu0 0.0
        %1998 = vmatpush1.msra.mxu0 0.0
        %1999 = vmatprep.subr.mxu0 0.0
        %2000 = vmatpush1.msra.mxu0 0.0
        %2001 = vmatprep.subr.mxu0 0.0
        %2002 = vmatpush1.msra.mxu0 0.0
        %2003 = vmatprep.subr.mxu0 0.0
        %2004 = vmatpush1.msra.mxu0 0.0
        %2005 = vmatprep.subr.mxu0 0.0
        %2006 = vmatpush1.msra.mxu0 0.0
        %2007 = vmatprep.subr.mxu0 0.0
        %2008 = vmatpush1.msra.mxu0 0.0
        %2009 = vmatprep.subr.mxu0 0.0
        %2010 = vmatpush1.msra.mxu0 0.0
        %2011 = vmatprep.subr.mxu0 0.0
        %2012 = vmatpush1.msra.mxu0 0.0
        %2013 = vmatprep.subr.mxu0 0.0
        %2014 = vmatpush1.msra.mxu0 0.0
        %2015 = vmatprep.subr.mxu0 0.0
        %2016 = vmatpush1.msra.mxu0 0.0
        %2017 = vmatprep.subr.mxu0 0.0
        %2018 = vmatpush1.msra.mxu0 0.0
        %2019 = vmatprep.subr.mxu0 0.0
        %2020 = vmatpush1.msra.mxu0 0.0
        %2021 = vmatprep.subr.mxu0 0.0
        %2022 = vmatpush1.msra.mxu0 0.0
        %2023 = vmatprep.subr.mxu0 0.0
        %2024 = vmatpush1.msra.mxu0 0.0
        %2025 = vmatprep.subr.mxu0 0.0
        %2026 = vmatpush1.msra.mxu0 0.0
        %2027 = vmatprep.subr.mxu0 0.0
        %2028 = vmatpush1.msra.mxu0 0.0
        %2029 = vmatprep.subr.mxu0 0.0
        %2030 = vmatpush1.msra.mxu0 0.0
        %2031 = vmatprep.subr.mxu0 0.0
        %2032 = vmatpush1.msra.mxu0 0.0
        %2033 = vmatprep.subr.mxu0 0.0
        %2034 = vmatpush1.msra.mxu0 0.0
        %2035 = vmatprep.subr.mxu0 0.0
        %2036 = vmatpush1.msra.mxu0 0.0
        %2037 = vmatprep.subr.mxu0 0.0
        %2038 = vmatpush1.msra.mxu0 0.0
        %2039 = vmatprep.subr.mxu0 0.0
        %2040 = vmatpush1.msra.mxu0 0.0
        %2041 = vmatprep.mubr.f32.mxu0 0.0
        %2042 = vmatmul.mubr.f32.gmra.mrb[0].mxu0 %v1971
        %v2043 = vpop.f32.mrb[0].mxu0
        %v2044 = vadd.f32 0.0, %v2043
        %v2045 = vpop.f32.mrb[0].mxu0
        %2046 = vdwg.mxu0
        %v2047 = vadd.f32 %v1965, %v2044
        %s2048 = scalar_lea.vmem %s9, 24
        %v2049 = vld [vmem:[%s2048] sm:$0xff]
        %v2050 = vld [vmem:[%s2048 + $0x8] sm:$0xff]
        %v2051 = vld [vmem:[%s2048 + $0x10] sm:$0xf]
        %v2052 = vrot.slane %v1963, 1
        %v2053 = vsel %vm1969, %v2052, 0
        %v2056 = vsel %vm1973, %v2051, 0
        %2058 = vmatprep.subr.mxu0 0.0
        %2059 = vmatpush1.msra.mxu0 %v2049
        %2060 = vmatprep.subr.mxu0 0.0
        %2061 = vmatpush1.msra.mxu0 %v2050
        %2062 = vmatprep.subr.mxu0 0.0
        %2063 = vmatpush1.msra.mxu0 %v2056
        %2064 = vmatprep.subr.mxu0 0.0
        %2065 = vmatpush1.msra.mxu0 0.0
        %2066 = vmatprep.subr.mxu0 0.0
        %2067 = vmatpush1.msra.mxu0 0.0
        %2068 = vmatprep.subr.mxu0 0.0
        %2069 = vmatpush1.msra.mxu0 0.0
        %2070 = vmatprep.subr.mxu0 0.0
        %2071 = vmatpush1.msra.mxu0 0.0
        %2072 = vmatprep.subr.mxu0 0.0
        %2073 = vmatpush1.msra.mxu0 0.0
        %2074 = vmatprep.subr.mxu0 0.0
        %2075 = vmatpush1.msra.mxu0 0.0
        %2076 = vmatprep.subr.mxu0 0.0
        %2077 = vmatpush1.msra.mxu0 0.0
        %2078 = vmatprep.subr.mxu0 0.0
        %2079 = vmatpush1.msra.mxu0 0.0
        %2080 = vmatprep.subr.mxu0 0.0
        %2081 = vmatpush1.msra.mxu0 0.0
        %2082 = vmatprep.subr.mxu0 0.0
        %2083 = vmatpush1.msra.mxu0 0.0
        %2084 = vmatprep.subr.mxu0 0.0
        %2085 = vmatpush1.msra.mxu0 0.0
        %2086 = vmatprep.subr.mxu0 0.0
        %2087 = vmatpush1.msra.mxu0 0.0
        %2088 = vmatprep.subr.mxu0 0.0
        %2089 = vmatpush1.msra.mxu0 0.0
        %2090 = vmatprep.subr.mxu0 0.0
        %2091 = vmatpush1.msra.mxu0 0.0
        %2092 = vmatprep.subr.mxu0 0.0
        %2093 = vmatpush1.msra.mxu0 0.0
        %2094 = vmatprep.subr.mxu0 0.0
        %2095 = vmatpush1.msra.mxu0 0.0
        %2096 = vmatprep.subr.mxu0 0.0
        %2097 = vmatpush1.msra.mxu0 0.0
        %2098 = vmatprep.subr.mxu0 0.0
        %2099 = vmatpush1.msra.mxu0 0.0
        %2100 = vmatprep.subr.mxu0 0.0
        %2101 = vmatpush1.msra.mxu0 0.0
        %2102 = vmatprep.subr.mxu0 0.0
        %2103 = vmatpush1.msra.mxu0 0.0
        %2104 = vmatprep.subr.mxu0 0.0
        %2105 = vmatpush1.msra.mxu0 0.0
        %2106 = vmatprep.subr.mxu0 0.0
        %2107 = vmatpush1.msra.mxu0 0.0
        %2108 = vmatprep.subr.mxu0 0.0
        %2109 = vmatpush1.msra.mxu0 0.0
        %2110 = vmatprep.subr.mxu0 0.0
        %2111 = vmatpush1.msra.mxu0 0.0
        %2112 = vmatprep.subr.mxu0 0.0
        %2113 = vmatpush1.msra.mxu0 0.0
        %2114 = vmatprep.subr.mxu0 0.0
        %2115 = vmatpush1.msra.mxu0 0.0
        %2116 = vmatprep.subr.mxu0 0.0
        %2117 = vmatpush1.msra.mxu0 0.0
        %2118 = vmatprep.subr.mxu0 0.0
        %2119 = vmatpush1.msra.mxu0 0.0
        %2120 = vmatprep.subr.mxu0 0.0
        %2121 = vmatpush1.msra.mxu0 0.0
        %2122 = vmatprep.mubr.f32.mxu0 0.0
        %2123 = vmatmul.mubr.f32.gmra.mrb[0].mxu0 %v2053
        %v2124 = vpop.f32.mrb[0].mxu0
        %v2125 = vadd.f32 0.0, %v2124
        %v2126 = vpop.f32.mrb[0].mxu0
        %2127 = vdwg.mxu0
        %v2128 = vadd.f32 %v2047, %v2125
        %s2129 = scalar_lea.vmem %s9, 48
        %v2130 = vld [vmem:[%s2129] sm:$0xff]
        %v2131 = vld [vmem:[%s2129 + $0x8] sm:$0xff]
        %v2132 = vld [vmem:[%s2129 + $0x10] sm:$0xf]
        %v2133 = vrot.slane %v1963, 2
        %v2134 = vsel %vm1969, %v2133, 0
        %v2137 = vsel %vm1973, %v2132, 0
        %2139 = vmatprep.subr.mxu0 0.0
        %2140 = vmatpush1.msra.mxu0 %v2130
        %2141 = vmatprep.subr.mxu0 0.0
        %2142 = vmatpush1.msra.mxu0 %v2131
        %2143 = vmatprep.subr.mxu0 0.0
        %2144 = vmatpush1.msra.mxu0 %v2137
        %2145 = vmatprep.subr.mxu0 0.0
        %2146 = vmatpush1.msra.mxu0 0.0
        %2147 = vmatprep.subr.mxu0 0.0
        %2148 = vmatpush1.msra.mxu0 0.0
        %2149 = vmatprep.subr.mxu0 0.0
        %2150 = vmatpush1.msra.mxu0 0.0
        %2151 = vmatprep.subr.mxu0 0.0
        %2152 = vmatpush1.msra.mxu0 0.0
        %2153 = vmatprep.subr.mxu0 0.0
        %2154 = vmatpush1.msra.mxu0 0.0
        %2155 = vmatprep.subr.mxu0 0.0
        %2156 = vmatpush1.msra.mxu0 0.0
        %2157 = vmatprep.subr.mxu0 0.0
        %2158 = vmatpush1.msra.mxu0 0.0
        %2159 = vmatprep.subr.mxu0 0.0
        %2160 = vmatpush1.msra.mxu0 0.0
        %2161 = vmatprep.subr.mxu0 0.0
        %2162 = vmatpush1.msra.mxu0 0.0
        %2163 = vmatprep.subr.mxu0 0.0
        %2164 = vmatpush1.msra.mxu0 0.0
        %2165 = vmatprep.subr.mxu0 0.0
        %2166 = vmatpush1.msra.mxu0 0.0
        %2167 = vmatprep.subr.mxu0 0.0
        %2168 = vmatpush1.msra.mxu0 0.0
        %2169 = vmatprep.subr.mxu0 0.0
        %2170 = vmatpush1.msra.mxu0 0.0
        %2171 = vmatprep.subr.mxu0 0.0
        %2172 = vmatpush1.msra.mxu0 0.0
        %2173 = vmatprep.subr.mxu0 0.0
        %2174 = vmatpush1.msra.mxu0 0.0
        %2175 = vmatprep.subr.mxu0 0.0
        %2176 = vmatpush1.msra.mxu0 0.0
        %2177 = vmatprep.subr.mxu0 0.0
        %2178 = vmatpush1.msra.mxu0 0.0
        %2179 = vmatprep.subr.mxu0 0.0
        %2180 = vmatpush1.msra.mxu0 0.0
        %2181 = vmatprep.subr.mxu0 0.0
        %2182 = vmatpush1.msra.mxu0 0.0
        %2183 = vmatprep.subr.mxu0 0.0
        %2184 = vmatpush1.msra.mxu0 0.0
        %2185 = vmatprep.subr.mxu0 0.0
        %2186 = vmatpush1.msra.mxu0 0.0
        %2187 = vmatprep.subr.mxu0 0.0
        %2188 = vmatpush1.msra.mxu0 0.0
        %2189 = vmatprep.subr.mxu0 0.0
        %2190 = vmatpush1.msra.mxu0 0.0
        %2191 = vmatprep.subr.mxu0 0.0
        %2192 = vmatpush1.msra.mxu0 0.0
        %2193 = vmatprep.subr.mxu0 0.0
        %2194 = vmatpush1.msra.mxu0 0.0
        %2195 = vmatprep.subr.mxu0 0.0
        %2196 = vmatpush1.msra.mxu0 0.0
        %2197 = vmatprep.subr.mxu0 0.0
        %2198 = vmatpush1.msra.mxu0 0.0
        %2199 = vmatprep.subr.mxu0 0.0
        %2200 = vmatpush1.msra.mxu0 0.0
        %2201 = vmatprep.subr.mxu0 0.0
        %2202 = vmatpush1.msra.mxu0 0.0
        %2203 = vmatprep.mubr.f32.mxu0 0.0
        %2204 = vmatmul.mubr.f32.gmra.mrb[0].mxu0 %v2134
        %v2205 = vpop.f32.mrb[0].mxu0
        %v2206 = vadd.f32 0.0, %v2205
        %v2207 = vpop.f32.mrb[0].mxu0
        %2208 = vdwg.mxu0
        %v2209 = vadd.f32 %v2128, %v2206
        %s2210 = scalar_lea.vmem %s9, 72
        %v2211 = vld [vmem:[%s2210] sm:$0xff]
        %v2212 = vld [vmem:[%s2210 + $0x8] sm:$0xff]
        %v2213 = vld [vmem:[%s2210 + $0x10] sm:$0xf]
        %v2214 = vrot.slane %v1963, 3
        %v2215 = vsel %vm1969, %v2214, 0
        %v2218 = vsel %vm1973, %v2213, 0
        %2220 = vmatprep.subr.mxu0 0.0
        %2221 = vmatpush1.msra.mxu0 %v2211
        %2222 = vmatprep.subr.mxu0 0.0
        %2223 = vmatpush1.msra.mxu0 %v2212
        %2224 = vmatprep.subr.mxu0 0.0
        %2225 = vmatpush1.msra.mxu0 %v2218
        %2226 = vmatprep.subr.mxu0 0.0
        %2227 = vmatpush1.msra.mxu0 0.0
        %2228 = vmatprep.subr.mxu0 0.0
        %2229 = vmatpush1.msra.mxu0 0.0
        %2230 = vmatprep.subr.mxu0 0.0
        %2231 = vmatpush1.msra.mxu0 0.0
        %2232 = vmatprep.subr.mxu0 0.0
        %2233 = vmatpush1.msra.mxu0 0.0
        %2234 = vmatprep.subr.mxu0 0.0
        %2235 = vmatpush1.msra.mxu0 0.0
        %2236 = vmatprep.subr.mxu0 0.0
        %2237 = vmatpush1.msra.mxu0 0.0
        %2238 = vmatprep.subr.mxu0 0.0
        %2239 = vmatpush1.msra.mxu0 0.0
        %2240 = vmatprep.subr.mxu0 0.0
        %2241 = vmatpush1.msra.mxu0 0.0
        %2242 = vmatprep.subr.mxu0 0.0
        %2243 = vmatpush1.msra.mxu0 0.0
        %2244 = vmatprep.subr.mxu0 0.0
        %2245 = vmatpush1.msra.mxu0 0.0
        %2246 = vmatprep.subr.mxu0 0.0
        %2247 = vmatpush1.msra.mxu0 0.0
        %2248 = vmatprep.subr.mxu0 0.0
        %2249 = vmatpush1.msra.mxu0 0.0
        %2250 = vmatprep.subr.mxu0 0.0
        %2251 = vmatpush1.msra.mxu0 0.0
        %2252 = vmatprep.subr.mxu0 0.0
        %2253 = vmatpush1.msra.mxu0 0.0
        %2254 = vmatprep.subr.mxu0 0.0
        %2255 = vmatpush1.msra.mxu0 0.0
        %2256 = vmatprep.subr.mxu0 0.0
        %2257 = vmatpush1.msra.mxu0 0.0
        %2258 = vmatprep.subr.mxu0 0.0
        %2259 = vmatpush1.msra.mxu0 0.0
        %2260 = vmatprep.subr.mxu0 0.0
        %2261 = vmatpush1.msra.mxu0 0.0
        %2262 = vmatprep.subr.mxu0 0.0
        %2263 = vmatpush1.msra.mxu0 0.0
        %2264 = vmatprep.subr.mxu0 0.0
        %2265 = vmatpush1.msra.mxu0 0.0
        %2266 = vmatprep.subr.mxu0 0.0
        %2267 = vmatpush1.msra.mxu0 0.0
        %2268 = vmatprep.subr.mxu0 0.0
        %2269 = vmatpush1.msra.mxu0 0.0
        %2270 = vmatprep.subr.mxu0 0.0
        %2271 = vmatpush1.msra.mxu0 0.0
        %2272 = vmatprep.subr.mxu0 0.0
        %2273 = vmatpush1.msra.mxu0 0.0
        %2274 = vmatprep.subr.mxu0 0.0
        %2275 = vmatpush1.msra.mxu0 0.0
        %2276 = vmatprep.subr.mxu0 0.0
        %2277 = vmatpush1.msra.mxu0 0.0
        %2278 = vmatprep.subr.mxu0 0.0
        %2279 = vmatpush1.msra.mxu0 0.0
        %2280 = vmatprep.subr.mxu0 0.0
        %2281 = vmatpush1.msra.mxu0 0.0
        %2282 = vmatprep.subr.mxu0 0.0
        %2283 = vmatpush1.msra.mxu0 0.0
        %2284 = vmatprep.mubr.f32.mxu0 0.0
        %2285 = vmatmul.mubr.f32.gmra.mrb[0].mxu0 %v2215
        %v2286 = vpop.f32.mrb[0].mxu0
        %v2287 = vadd.f32 0.0, %v2286
        %v2288 = vpop.f32.mrb[0].mxu0
        %2289 = vdwg.mxu0
        %v2290 = vadd.f32 %v2209, %v2287
        %s2291 = scalar_lea.vmem %s9, 96
        %v2292 = vld [vmem:[%s2291] sm:$0xff]
        %v2293 = vld [vmem:[%s2291 + $0x8] sm:$0xff]
        %v2294 = vld [vmem:[%s2291 + $0x10] sm:$0xf]
        %v2295 = vrot.slane %v1963, 4
        %v2296 = vsel %vm1969, %v2295, 0
        %v2299 = vsel %vm1973, %v2294, 0
        %2301 = vmatprep.subr.mxu0 0.0
        %2302 = vmatpush1.msra.mxu0 %v2292
        %2303 = vmatprep.subr.mxu0 0.0
        %2304 = vmatpush1.msra.mxu0 %v2293
        %2305 = vmatprep.subr.mxu0 0.0
        %2306 = vmatpush1.msra.mxu0 %v2299
        %2307 = vmatprep.subr.mxu0 0.0
        %2308 = vmatpush1.msra.mxu0 0.0
        %2309 = vmatprep.subr.mxu0 0.0
        %2310 = vmatpush1.msra.mxu0 0.0
        %2311 = vmatprep.subr.mxu0 0.0
        %2312 = vmatpush1.msra.mxu0 0.0
        %2313 = vmatprep.subr.mxu0 0.0
        %2314 = vmatpush1.msra.mxu0 0.0
        %2315 = vmatprep.subr.mxu0 0.0
        %2316 = vmatpush1.msra.mxu0 0.0
        %2317 = vmatprep.subr.mxu0 0.0
        %2318 = vmatpush1.msra.mxu0 0.0
        %2319 = vmatprep.subr.mxu0 0.0
        %2320 = vmatpush1.msra.mxu0 0.0
        %2321 = vmatprep.subr.mxu0 0.0
        %2322 = vmatpush1.msra.mxu0 0.0
        %2323 = vmatprep.subr.mxu0 0.0
        %2324 = vmatpush1.msra.mxu0 0.0
        %2325 = vmatprep.subr.mxu0 0.0
        %2326 = vmatpush1.msra.mxu0 0.0
        %2327 = vmatprep.subr.mxu0 0.0
        %2328 = vmatpush1.msra.mxu0 0.0
        %2329 = vmatprep.subr.mxu0 0.0
        %2330 = vmatpush1.msra.mxu0 0.0
        %2331 = vmatprep.subr.mxu0 0.0
        %2332 = vmatpush1.msra.mxu0 0.0
        %2333 = vmatprep.subr.mxu0 0.0
        %2334 = vmatpush1.msra.mxu0 0.0
        %2335 = vmatprep.subr.mxu0 0.0
        %2336 = vmatpush1.msra.mxu0 0.0
        %2337 = vmatprep.subr.mxu0 0.0
        %2338 = vmatpush1.msra.mxu0 0.0
        %2339 = vmatprep.subr.mxu0 0.0
        %2340 = vmatpush1.msra.mxu0 0.0
        %2341 = vmatprep.subr.mxu0 0.0
        %2342 = vmatpush1.msra.mxu0 0.0
        %2343 = vmatprep.subr.mxu0 0.0
        %2344 = vmatpush1.msra.mxu0 0.0
        %2345 = vmatprep.subr.mxu0 0.0
        %2346 = vmatpush1.msra.mxu0 0.0
        %2347 = vmatprep.subr.mxu0 0.0
        %2348 = vmatpush1.msra.mxu0 0.0
        %2349 = vmatprep.subr.mxu0 0.0
        %2350 = vmatpush1.msra.mxu0 0.0
        %2351 = vmatprep.subr.mxu0 0.0
        %2352 = vmatpush1.msra.mxu0 0.0
        %2353 = vmatprep.subr.mxu0 0.0
        %2354 = vmatpush1.msra.mxu0 0.0
        %2355 = vmatprep.subr.mxu0 0.0
        %2356 = vmatpush1.msra.mxu0 0.0
        %2357 = vmatprep.subr.mxu0 0.0
        %2358 = vmatpush1.msra.mxu0 0.0
        %2359 = vmatprep.subr.mxu0 0.0
        %2360 = vmatpush1.msra.mxu0 0.0
        %2361 = vmatprep.subr.mxu0 0.0
        %2362 = vmatpush1.msra.mxu0 0.0
        %2363 = vmatprep.subr.mxu0 0.0
        %2364 = vmatpush1.msra.mxu0 0.0
        %2365 = vmatprep.mubr.f32.mxu0 0.0
        %2366 = vmatmul.mubr.f32.gmra.mrb[0].mxu0 %v2296
        %v2367 = vpop.f32.mrb[0].mxu0
        %v2368 = vadd.f32 0.0, %v2367
        %v2369 = vpop.f32.mrb[0].mxu0
        %2370 = vdwg.mxu0
        %v2371 = vadd.f32 %v2290, %v2368
        %s2372 = scalar_lea.vmem %s9, 120
        %v2373 = vld [vmem:[%s2372] sm:$0xff]
        %v2374 = vld [vmem:[%s2372 + $0x8] sm:$0xff]
        %v2375 = vld [vmem:[%s2372 + $0x10] sm:$0xf]
        %v2376 = vrot.slane %v1963, 5
        %v2377 = vsel %vm1969, %v2376, 0
        %v2380 = vsel %vm1973, %v2375, 0
        %2382 = vmatprep.subr.mxu0 0.0
        %2383 = vmatpush1.msra.mxu0 %v2373
        %2384 = vmatprep.subr.mxu0 0.0
        %2385 = vmatpush1.msra.mxu0 %v2374
        %2386 = vmatprep.subr.mxu0 0.0
        %2387 = vmatpush1.msra.mxu0 %v2380
        %2388 = vmatprep.subr.mxu0 0.0
        %2389 = vmatpush1.msra.mxu0 0.0
        %2390 = vmatprep.subr.mxu0 0.0
        %2391 = vmatpush1.msra.mxu0 0.0
        %2392 = vmatprep.subr.mxu0 0.0
        %2393 = vmatpush1.msra.mxu0 0.0
        %2394 = vmatprep.subr.mxu0 0.0
        %2395 = vmatpush1.msra.mxu0 0.0
        %2396 = vmatprep.subr.mxu0 0.0
        %2397 = vmatpush1.msra.mxu0 0.0
        %2398 = vmatprep.subr.mxu0 0.0
        %2399 = vmatpush1.msra.mxu0 0.0
        %2400 = vmatprep.subr.mxu0 0.0
        %2401 = vmatpush1.msra.mxu0 0.0
        %2402 = vmatprep.subr.mxu0 0.0
        %2403 = vmatpush1.msra.mxu0 0.0
        %2404 = vmatprep.subr.mxu0 0.0
        %2405 = vmatpush1.msra.mxu0 0.0
        %2406 = vmatprep.subr.mxu0 0.0
        %2407 = vmatpush1.msra.mxu0 0.0
        %2408 = vmatprep.subr.mxu0 0.0
        %2409 = vmatpush1.msra.mxu0 0.0
        %2410 = vmatprep.subr.mxu0 0.0
        %2411 = vmatpush1.msra.mxu0 0.0
        %2412 = vmatprep.subr.mxu0 0.0
        %2413 = vmatpush1.msra.mxu0 0.0
        %2414 = vmatprep.subr.mxu0 0.0
        %2415 = vmatpush1.msra.mxu0 0.0
        %2416 = vmatprep.subr.mxu0 0.0
        %2417 = vmatpush1.msra.mxu0 0.0
        %2418 = vmatprep.subr.mxu0 0.0
        %2419 = vmatpush1.msra.mxu0 0.0
        %2420 = vmatprep.subr.mxu0 0.0
        %2421 = vmatpush1.msra.mxu0 0.0
        %2422 = vmatprep.subr.mxu0 0.0
        %2423 = vmatpush1.msra.mxu0 0.0
        %2424 = vmatprep.subr.mxu0 0.0
        %2425 = vmatpush1.msra.mxu0 0.0
        %2426 = vmatprep.subr.mxu0 0.0
        %2427 = vmatpush1.msra.mxu0 0.0
        %2428 = vmatprep.subr.mxu0 0.0
        %2429 = vmatpush1.msra.mxu0 0.0
        %2430 = vmatprep.subr.mxu0 0.0
        %2431 = vmatpush1.msra.mxu0 0.0
        %2432 = vmatprep.subr.mxu0 0.0
        %2433 = vmatpush1.msra.mxu0 0.0
        %2434 = vmatprep.subr.mxu0 0.0
        %2435 = vmatpush1.msra.mxu0 0.0
        %2436 = vmatprep.subr.mxu0 0.0
        %2437 = vmatpush1.msra.mxu0 0.0
        %2438 = vmatprep.subr.mxu0 0.0
        %2439 = vmatpush1.msra.mxu0 0.0
        %2440 = vmatprep.subr.mxu0 0.0
        %2441 = vmatpush1.msra.mxu0 0.0
        %2442 = vmatprep.subr.mxu0 0.0
        %2443 = vmatpush1.msra.mxu0 0.0
        %2444 = vmatprep.subr.mxu0 0.0
        %2445 = vmatpush1.msra.mxu0 0.0
        %2446 = vmatprep.mubr.f32.mxu0 0.0
        %2447 = vmatmul.mubr.f32.gmra.mrb[0].mxu0 %v2377
        %v2448 = vpop.f32.mrb[0].mxu0
        %v2449 = vadd.f32 0.0, %v2448
        %v2450 = vpop.f32.mrb[0].mxu0
        %2451 = vdwg.mxu0
        %v2452 = vadd.f32 %v2371, %v2449
        %s2453 = scalar_lea.vmem %s9, 144
        %v2454 = vld [vmem:[%s2453] sm:$0xff]
        %v2455 = vld [vmem:[%s2453 + $0x8] sm:$0xff]
        %v2456 = vld [vmem:[%s2453 + $0x10] sm:$0xf]
        %v2457 = vrot.slane %v1963, 6
        %v2458 = vsel %vm1969, %v2457, 0
        %v2461 = vsel %vm1973, %v2456, 0
        %2463 = vmatprep.subr.mxu0 0.0
        %2464 = vmatpush1.msra.mxu0 %v2454
        %2465 = vmatprep.subr.mxu0 0.0
        %2466 = vmatpush1.msra.mxu0 %v2455
        %2467 = vmatprep.subr.mxu0 0.0
        %2468 = vmatpush1.msra.mxu0 %v2461
        %2469 = vmatprep.subr.mxu0 0.0
        %2470 = vmatpush1.msra.mxu0 0.0
        %2471 = vmatprep.subr.mxu0 0.0
        %2472 = vmatpush1.msra.mxu0 0.0
        %2473 = vmatprep.subr.mxu0 0.0
        %2474 = vmatpush1.msra.mxu0 0.0
        %2475 = vmatprep.subr.mxu0 0.0
        %2476 = vmatpush1.msra.mxu0 0.0
        %2477 = vmatprep.subr.mxu0 0.0
        %2478 = vmatpush1.msra.mxu0 0.0
        %2479 = vmatprep.subr.mxu0 0.0
        %2480 = vmatpush1.msra.mxu0 0.0
        %2481 = vmatprep.subr.mxu0 0.0
        %2482 = vmatpush1.msra.mxu0 0.0
        %2483 = vmatprep.subr.mxu0 0.0
        %2484 = vmatpush1.msra.mxu0 0.0
        %2485 = vmatprep.subr.mxu0 0.0
        %2486 = vmatpush1.msra.mxu0 0.0
        %2487 = vmatprep.subr.mxu0 0.0
        %2488 = vmatpush1.msra.mxu0 0.0
        %2489 = vmatprep.subr.mxu0 0.0
        %2490 = vmatpush1.msra.mxu0 0.0
        %2491 = vmatprep.subr.mxu0 0.0
        %2492 = vmatpush1.msra.mxu0 0.0
        %2493 = vmatprep.subr.mxu0 0.0
        %2494 = vmatpush1.msra.mxu0 0.0
        %2495 = vmatprep.subr.mxu0 0.0
        %2496 = vmatpush1.msra.mxu0 0.0
        %2497 = vmatprep.subr.mxu0 0.0
        %2498 = vmatpush1.msra.mxu0 0.0
        %2499 = vmatprep.subr.mxu0 0.0
        %2500 = vmatpush1.msra.mxu0 0.0
        %2501 = vmatprep.subr.mxu0 0.0
        %2502 = vmatpush1.msra.mxu0 0.0
        %2503 = vmatprep.subr.mxu0 0.0
        %2504 = vmatpush1.msra.mxu0 0.0
        %2505 = vmatprep.subr.mxu0 0.0
        %2506 = vmatpush1.msra.mxu0 0.0
        %2507 = vmatprep.subr.mxu0 0.0
        %2508 = vmatpush1.msra.mxu0 0.0
        %2509 = vmatprep.subr.mxu0 0.0
        %2510 = vmatpush1.msra.mxu0 0.0
        %2511 = vmatprep.subr.mxu0 0.0
        %2512 = vmatpush1.msra.mxu0 0.0
        %2513 = vmatprep.subr.mxu0 0.0
        %2514 = vmatpush1.msra.mxu0 0.0
        %2515 = vmatprep.subr.mxu0 0.0
        %2516 = vmatpush1.msra.mxu0 0.0
        %2517 = vmatprep.subr.mxu0 0.0
        %2518 = vmatpush1.msra.mxu0 0.0
        %2519 = vmatprep.subr.mxu0 0.0
        %2520 = vmatpush1.msra.mxu0 0.0
        %2521 = vmatprep.subr.mxu0 0.0
        %2522 = vmatpush1.msra.mxu0 0.0
        %2523 = vmatprep.subr.mxu0 0.0
        %2524 = vmatpush1.msra.mxu0 0.0
        %2525 = vmatprep.subr.mxu0 0.0
        %2526 = vmatpush1.msra.mxu0 0.0
        %2527 = vmatprep.mubr.f32.mxu0 0.0
        %2528 = vmatmul.mubr.f32.gmra.mrb[0].mxu0 %v2458
        %v2529 = vpop.f32.mrb[0].mxu0
        %v2530 = vadd.f32 0.0, %v2529
        %v2531 = vpop.f32.mrb[0].mxu0
        %2532 = vdwg.mxu0
        %v2533 = vadd.f32 %v2452, %v2530
        %s2534 = scalar_lea.vmem %s9, 168
        %v2535 = vld [vmem:[%s2534] sm:$0xff]
        %v2536 = vld [vmem:[%s2534 + $0x8] sm:$0xff]
        %v2537 = vld [vmem:[%s2534 + $0x10] sm:$0xf]
        %v2538 = vrot.slane %v1963, 7
        %v2539 = vsel %vm1969, %v2538, 0
        %v2542 = vsel %vm1973, %v2537, 0
        %2544 = vmatprep.subr.mxu0 0.0
        %2545 = vmatpush1.msra.mxu0 %v2535
        %2546 = vmatprep.subr.mxu0 0.0
        %2547 = vmatpush1.msra.mxu0 %v2536
        %2548 = vmatprep.subr.mxu0 0.0
        %2549 = vmatpush1.msra.mxu0 %v2542
        %2550 = vmatprep.subr.mxu0 0.0
        %2551 = vmatpush1.msra.mxu0 0.0
        %2552 = vmatprep.subr.mxu0 0.0
        %2553 = vmatpush1.msra.mxu0 0.0
        %2554 = vmatprep.subr.mxu0 0.0
        %2555 = vmatpush1.msra.mxu0 0.0
        %2556 = vmatprep.subr.mxu0 0.0
        %2557 = vmatpush1.msra.mxu0 0.0
        %2558 = vmatprep.subr.mxu0 0.0
        %2559 = vmatpush1.msra.mxu0 0.0
        %2560 = vmatprep.subr.mxu0 0.0
        %2561 = vmatpush1.msra.mxu0 0.0
        %2562 = vmatprep.subr.mxu0 0.0
        %2563 = vmatpush1.msra.mxu0 0.0
        %2564 = vmatprep.subr.mxu0 0.0
        %2565 = vmatpush1.msra.mxu0 0.0
        %2566 = vmatprep.subr.mxu0 0.0
        %2567 = vmatpush1.msra.mxu0 0.0
        %2568 = vmatprep.subr.mxu0 0.0
        %2569 = vmatpush1.msra.mxu0 0.0
        %2570 = vmatprep.subr.mxu0 0.0
        %2571 = vmatpush1.msra.mxu0 0.0
        %2572 = vmatprep.subr.mxu0 0.0
        %2573 = vmatpush1.msra.mxu0 0.0
        %2574 = vmatprep.subr.mxu0 0.0
        %2575 = vmatpush1.msra.mxu0 0.0
        %2576 = vmatprep.subr.mxu0 0.0
        %2577 = vmatpush1.msra.mxu0 0.0
        %2578 = vmatprep.subr.mxu0 0.0
        %2579 = vmatpush1.msra.mxu0 0.0
        %2580 = vmatprep.subr.mxu0 0.0
        %2581 = vmatpush1.msra.mxu0 0.0
        %2582 = vmatprep.subr.mxu0 0.0
        %2583 = vmatpush1.msra.mxu0 0.0
        %2584 = vmatprep.subr.mxu0 0.0
        %2585 = vmatpush1.msra.mxu0 0.0
        %2586 = vmatprep.subr.mxu0 0.0
        %2587 = vmatpush1.msra.mxu0 0.0
        %2588 = vmatprep.subr.mxu0 0.0
        %2589 = vmatpush1.msra.mxu0 0.0
        %2590 = vmatprep.subr.mxu0 0.0
        %2591 = vmatpush1.msra.mxu0 0.0
        %2592 = vmatprep.subr.mxu0 0.0
        %2593 = vmatpush1.msra.mxu0 0.0
        %2594 = vmatprep.subr.mxu0 0.0
        %2595 = vmatpush1.msra.mxu0 0.0
        %2596 = vmatprep.subr.mxu0 0.0
        %2597 = vmatpush1.msra.mxu0 0.0
        %2598 = vmatprep.subr.mxu0 0.0
        %2599 = vmatpush1.msra.mxu0 0.0
        %2600 = vmatprep.subr.mxu0 0.0
        %2601 = vmatpush1.msra.mxu0 0.0
        %2602 = vmatprep.subr.mxu0 0.0
        %2603 = vmatpush1.msra.mxu0 0.0
        %2604 = vmatprep.subr.mxu0 0.0
        %2605 = vmatpush1.msra.mxu0 0.0
        %2606 = vmatprep.subr.mxu0 0.0
        %2607 = vmatpush1.msra.mxu0 0.0
        %2608 = vmatprep.mubr.f32.mxu0 0.0
        %2609 = vmatmul.mubr.f32.gmra.mrb[0].mxu0 %v2539
        %v2610 = vpop.f32.mrb[0].mxu0
        %v2611 = vadd.f32 0.0, %v2610
        %v2612 = vpop.f32.mrb[0].mxu0
        %2613 = vdwg.mxu0
        %v2614 = vadd.f32 %v2533, %v2611
        %s2615 = scalar_lea.vmem %s9, 192
        %v2616 = vld [vmem:[%s2615] sm:$0xff]
        %v2617 = vld [vmem:[%s2615 + $0x8] sm:$0xff]
        %v2618 = vld [vmem:[%s2615 + $0x10] sm:$0xf]
        %v2620 = vsel %vm1969, %v1964, 0
        %v2623 = vsel %vm1973, %v2618, 0
        %2625 = vmatprep.subr.mxu0 0.0
        %2626 = vmatpush1.msra.mxu0 %v2616
        %2627 = vmatprep.subr.mxu0 0.0
        %2628 = vmatpush1.msra.mxu0 %v2617
        %2629 = vmatprep.subr.mxu0 0.0
        %2630 = vmatpush1.msra.mxu0 %v2623
        %2631 = vmatprep.subr.mxu0 0.0
        %2632 = vmatpush1.msra.mxu0 0.0
        %2633 = vmatprep.subr.mxu0 0.0
        %2634 = vmatpush1.msra.mxu0 0.0
        %2635 = vmatprep.subr.mxu0 0.0
        %2636 = vmatpush1.msra.mxu0 0.0
        %2637 = vmatprep.subr.mxu0 0.0
        %2638 = vmatpush1.msra.mxu0 0.0
        %2639 = vmatprep.subr.mxu0 0.0
        %2640 = vmatpush1.msra.mxu0 0.0
        %2641 = vmatprep.subr.mxu0 0.0
        %2642 = vmatpush1.msra.mxu0 0.0
        %2643 = vmatprep.subr.mxu0 0.0
        %2644 = vmatpush1.msra.mxu0 0.0
        %2645 = vmatprep.subr.mxu0 0.0
        %2646 = vmatpush1.msra.mxu0 0.0
        %2647 = vmatprep.subr.mxu0 0.0
        %2648 = vmatpush1.msra.mxu0 0.0
        %2649 = vmatprep.subr.mxu0 0.0
        %2650 = vmatpush1.msra.mxu0 0.0
        %2651 = vmatprep.subr.mxu0 0.0
        %2652 = vmatpush1.msra.mxu0 0.0
        %2653 = vmatprep.subr.mxu0 0.0
        %2654 = vmatpush1.msra.mxu0 0.0
        %2655 = vmatprep.subr.mxu0 0.0
        %2656 = vmatpush1.msra.mxu0 0.0
        %2657 = vmatprep.subr.mxu0 0.0
        %2658 = vmatpush1.msra.mxu0 0.0
        %2659 = vmatprep.subr.mxu0 0.0
        %2660 = vmatpush1.msra.mxu0 0.0
        %2661 = vmatprep.subr.mxu0 0.0
        %2662 = vmatpush1.msra.mxu0 0.0
        %2663 = vmatprep.subr.mxu0 0.0
        %2664 = vmatpush1.msra.mxu0 0.0
        %2665 = vmatprep.subr.mxu0 0.0
        %2666 = vmatpush1.msra.mxu0 0.0
        %2667 = vmatprep.subr.mxu0 0.0
        %2668 = vmatpush1.msra.mxu0 0.0
        %2669 = vmatprep.subr.mxu0 0.0
        %2670 = vmatpush1.msra.mxu0 0.0
        %2671 = vmatprep.subr.mxu0 0.0
        %2672 = vmatpush1.msra.mxu0 0.0
        %2673 = vmatprep.subr.mxu0 0.0
        %2674 = vmatpush1.msra.mxu0 0.0
        %2675 = vmatprep.subr.mxu0 0.0
        %2676 = vmatpush1.msra.mxu0 0.0
        %2677 = vmatprep.subr.mxu0 0.0
        %2678 = vmatpush1.msra.mxu0 0.0
        %2679 = vmatprep.subr.mxu0 0.0
        %2680 = vmatpush1.msra.mxu0 0.0
        %2681 = vmatprep.subr.mxu0 0.0
        %2682 = vmatpush1.msra.mxu0 0.0
        %2683 = vmatprep.subr.mxu0 0.0
        %2684 = vmatpush1.msra.mxu0 0.0
        %2685 = vmatprep.subr.mxu0 0.0
        %2686 = vmatpush1.msra.mxu0 0.0
        %2687 = vmatprep.subr.mxu0 0.0
        %2688 = vmatpush1.msra.mxu0 0.0
        %2689 = vmatprep.mubr.f32.mxu0 0.0
        %2690 = vmatmul.mubr.f32.gmra.mrb[0].mxu0 %v2620
        %v2691 = vpop.f32.mrb[0].mxu0
        %v2692 = vadd.f32 0.0, %v2691
        %v2693 = vpop.f32.mrb[0].mxu0
        %2694 = vdwg.mxu0
        %v2695 = vadd.f32 %v2614, %v2692
        %s2696 = scalar_lea.vmem %s9, 216
        %v2697 = vld [vmem:[%s2696] sm:$0xff]
        %v2698 = vld [vmem:[%s2696 + $0x8] sm:$0xff]
        %v2699 = vld [vmem:[%s2696 + $0x10] sm:$0xf]
        %v2700 = vrot.slane %v1964, 1
        %v2701 = vsel %vm1969, %v2700, 0
        %v2704 = vsel %vm1973, %v2699, 0
        %2706 = vmatprep.subr.mxu0 0.0
        %2707 = vmatpush1.msra.mxu0 %v2697
        %2708 = vmatprep.subr.mxu0 0.0
        %2709 = vmatpush1.msra.mxu0 %v2698
        %2710 = vmatprep.subr.mxu0 0.0
        %2711 = vmatpush1.msra.mxu0 %v2704
        %2712 = vmatprep.subr.mxu0 0.0
        %2713 = vmatpush1.msra.mxu0 0.0
        %2714 = vmatprep.subr.mxu0 0.0
        %2715 = vmatpush1.msra.mxu0 0.0
        %2716 = vmatprep.subr.mxu0 0.0
        %2717 = vmatpush1.msra.mxu0 0.0
        %2718 = vmatprep.subr.mxu0 0.0
        %2719 = vmatpush1.msra.mxu0 0.0
        %2720 = vmatprep.subr.mxu0 0.0
        %2721 = vmatpush1.msra.mxu0 0.0
        %2722 = vmatprep.subr.mxu0 0.0
        %2723 = vmatpush1.msra.mxu0 0.0
        %2724 = vmatprep.subr.mxu0 0.0
        %2725 = vmatpush1.msra.mxu0 0.0
        %2726 = vmatprep.subr.mxu0 0.0
        %2727 = vmatpush1.msra.mxu0 0.0
        %2728 = vmatprep.subr.mxu0 0.0
        %2729 = vmatpush1.msra.mxu0 0.0
        %2730 = vmatprep.subr.mxu0 0.0
        %2731 = vmatpush1.msra.mxu0 0.0
        %2732 = vmatprep.subr.mxu0 0.0
        %2733 = vmatpush1.msra.mxu0 0.0
        %2734 = vmatprep.subr.mxu0 0.0
        %2735 = vmatpush1.msra.mxu0 0.0
        %2736 = vmatprep.subr.mxu0 0.0
        %2737 = vmatpush1.msra.mxu0 0.0
        %2738 = vmatprep.subr.mxu0 0.0
        %2739 = vmatpush1.msra.mxu0 0.0
        %2740 = vmatprep.subr.mxu0 0.0
        %2741 = vmatpush1.msra.mxu0 0.0
        %2742 = vmatprep.subr.mxu0 0.0
        %2743 = vmatpush1.msra.mxu0 0.0
        %2744 = vmatprep.subr.mxu0 0.0
        %2745 = vmatpush1.msra.mxu0 0.0
        %2746 = vmatprep.subr.mxu0 0.0
        %2747 = vmatpush1.msra.mxu0 0.0
        %2748 = vmatprep.subr.mxu0 0.0
        %2749 = vmatpush1.msra.mxu0 0.0
        %2750 = vmatprep.subr.mxu0 0.0
        %2751 = vmatpush1.msra.mxu0 0.0
        %2752 = vmatprep.subr.mxu0 0.0
        %2753 = vmatpush1.msra.mxu0 0.0
        %2754 = vmatprep.subr.mxu0 0.0
        %2755 = vmatpush1.msra.mxu0 0.0
        %2756 = vmatprep.subr.mxu0 0.0
        %2757 = vmatpush1.msra.mxu0 0.0
        %2758 = vmatprep.subr.mxu0 0.0
        %2759 = vmatpush1.msra.mxu0 0.0
        %2760 = vmatprep.subr.mxu0 0.0
        %2761 = vmatpush1.msra.mxu0 0.0
        %2762 = vmatprep.subr.mxu0 0.0
        %2763 = vmatpush1.msra.mxu0 0.0
        %2764 = vmatprep.subr.mxu0 0.0
        %2765 = vmatpush1.msra.mxu0 0.0
        %2766 = vmatprep.subr.mxu0 0.0
        %2767 = vmatpush1.msra.mxu0 0.0
        %2768 = vmatprep.subr.mxu0 0.0
        %2769 = vmatpush1.msra.mxu0 0.0
        %2770 = vmatprep.mubr.f32.mxu0 0.0
        %2771 = vmatmul.mubr.f32.gmra.mrb[0].mxu0 %v2701
        %v2772 = vpop.f32.mrb[0].mxu0
        %v2773 = vadd.f32 0.0, %v2772
        %v2774 = vpop.f32.mrb[0].mxu0
        %2775 = vdwg.mxu0
        %v2776 = vadd.f32 %v2695, %v2773
        %s2777 = scalar_lea.vmem %s9, 240
        %v2778 = vld [vmem:[%s2777] sm:$0xff]
        %v2779 = vld [vmem:[%s2777 + $0x8] sm:$0xff]
        %v2780 = vld [vmem:[%s2777 + $0x10] sm:$0xf]
        %v2781 = vrot.slane %v1964, 2
        %v2782 = vsel %vm1969, %v2781, 0
        %v2785 = vsel %vm1973, %v2780, 0
        %2787 = vmatprep.subr.mxu0 0.0
        %2788 = vmatpush1.msra.mxu0 %v2778
        %2789 = vmatprep.subr.mxu0 0.0
        %2790 = vmatpush1.msra.mxu0 %v2779
        %2791 = vmatprep.subr.mxu0 0.0
        %2792 = vmatpush1.msra.mxu0 %v2785
        %2793 = vmatprep.subr.mxu0 0.0
        %2794 = vmatpush1.msra.mxu0 0.0
        %2795 = vmatprep.subr.mxu0 0.0
        %2796 = vmatpush1.msra.mxu0 0.0
        %2797 = vmatprep.subr.mxu0 0.0
        %2798 = vmatpush1.msra.mxu0 0.0
        %2799 = vmatprep.subr.mxu0 0.0
        %2800 = vmatpush1.msra.mxu0 0.0
        %2801 = vmatprep.subr.mxu0 0.0
        %2802 = vmatpush1.msra.mxu0 0.0
        %2803 = vmatprep.subr.mxu0 0.0
        %2804 = vmatpush1.msra.mxu0 0.0
        %2805 = vmatprep.subr.mxu0 0.0
        %2806 = vmatpush1.msra.mxu0 0.0
        %2807 = vmatprep.subr.mxu0 0.0
        %2808 = vmatpush1.msra.mxu0 0.0
        %2809 = vmatprep.subr.mxu0 0.0
        %2810 = vmatpush1.msra.mxu0 0.0
        %2811 = vmatprep.subr.mxu0 0.0
        %2812 = vmatpush1.msra.mxu0 0.0
        %2813 = vmatprep.subr.mxu0 0.0
        %2814 = vmatpush1.msra.mxu0 0.0
        %2815 = vmatprep.subr.mxu0 0.0
        %2816 = vmatpush1.msra.mxu0 0.0
        %2817 = vmatprep.subr.mxu0 0.0
        %2818 = vmatpush1.msra.mxu0 0.0
        %2819 = vmatprep.subr.mxu0 0.0
        %2820 = vmatpush1.msra.mxu0 0.0
        %2821 = vmatprep.subr.mxu0 0.0
        %2822 = vmatpush1.msra.mxu0 0.0
        %2823 = vmatprep.subr.mxu0 0.0
        %2824 = vmatpush1.msra.mxu0 0.0
        %2825 = vmatprep.subr.mxu0 0.0
        %2826 = vmatpush1.msra.mxu0 0.0
        %2827 = vmatprep.subr.mxu0 0.0
        %2828 = vmatpush1.msra.mxu0 0.0
        %2829 = vmatprep.subr.mxu0 0.0
        %2830 = vmatpush1.msra.mxu0 0.0
        %2831 = vmatprep.subr.mxu0 0.0
        %2832 = vmatpush1.msra.mxu0 0.0
        %2833 = vmatprep.subr.mxu0 0.0
        %2834 = vmatpush1.msra.mxu0 0.0
        %2835 = vmatprep.subr.mxu0 0.0
        %2836 = vmatpush1.msra.mxu0 0.0
        %2837 = vmatprep.subr.mxu0 0.0
        %2838 = vmatpush1.msra.mxu0 0.0
        %2839 = vmatprep.subr.mxu0 0.0
        %2840 = vmatpush1.msra.mxu0 0.0
        %2841 = vmatprep.subr.mxu0 0.0
        %2842 = vmatpush1.msra.mxu0 0.0
        %2843 = vmatprep.subr.mxu0 0.0
        %2844 = vmatpush1.msra.mxu0 0.0
        %2845 = vmatprep.subr.mxu0 0.0
        %2846 = vmatpush1.msra.mxu0 0.0
        %2847 = vmatprep.subr.mxu0 0.0
        %2848 = vmatpush1.msra.mxu0 0.0
        %2849 = vmatprep.subr.mxu0 0.0
        %2850 = vmatpush1.msra.mxu0 0.0
        %2851 = vmatprep.mubr.f32.mxu0 0.0
        %2852 = vmatmul.mubr.f32.gmra.mrb[0].mxu0 %v2782
        %v2853 = vpop.f32.mrb[0].mxu0
        %v2854 = vadd.f32 0.0, %v2853
        %v2855 = vpop.f32.mrb[0].mxu0
        %2856 = vdwg.mxu0
        %v2857 = vadd.f32 %v2776, %v2854
        %s2858 = scalar_lea.vmem %s9, 264
        %v2859 = vld [vmem:[%s2858] sm:$0xff]
        %v2860 = vld [vmem:[%s2858 + $0x8] sm:$0xff]
        %v2861 = vld [vmem:[%s2858 + $0x10] sm:$0xf]
        %v2862 = vrot.slane %v1964, 3
        %v2863 = vsel %vm1969, %v2862, 0
        %v2866 = vsel %vm1973, %v2861, 0
        %2868 = vmatprep.subr.mxu0 0.0
        %2869 = vmatpush1.msra.mxu0 %v2859
        %2870 = vmatprep.subr.mxu0 0.0
        %2871 = vmatpush1.msra.mxu0 %v2860
        %2872 = vmatprep.subr.mxu0 0.0
        %2873 = vmatpush1.msra.mxu0 %v2866
        %2874 = vmatprep.subr.mxu0 0.0
        %2875 = vmatpush1.msra.mxu0 0.0
        %2876 = vmatprep.subr.mxu0 0.0
        %2877 = vmatpush1.msra.mxu0 0.0
        %2878 = vmatprep.subr.mxu0 0.0
        %2879 = vmatpush1.msra.mxu0 0.0
        %2880 = vmatprep.subr.mxu0 0.0
        %2881 = vmatpush1.msra.mxu0 0.0
        %2882 = vmatprep.subr.mxu0 0.0
        %2883 = vmatpush1.msra.mxu0 0.0
        %2884 = vmatprep.subr.mxu0 0.0
        %2885 = vmatpush1.msra.mxu0 0.0
        %2886 = vmatprep.subr.mxu0 0.0
        %2887 = vmatpush1.msra.mxu0 0.0
        %2888 = vmatprep.subr.mxu0 0.0
        %2889 = vmatpush1.msra.mxu0 0.0
        %2890 = vmatprep.subr.mxu0 0.0
        %2891 = vmatpush1.msra.mxu0 0.0
        %2892 = vmatprep.subr.mxu0 0.0
        %2893 = vmatpush1.msra.mxu0 0.0
        %2894 = vmatprep.subr.mxu0 0.0
        %2895 = vmatpush1.msra.mxu0 0.0
        %2896 = vmatprep.subr.mxu0 0.0
        %2897 = vmatpush1.msra.mxu0 0.0
        %2898 = vmatprep.subr.mxu0 0.0
        %2899 = vmatpush1.msra.mxu0 0.0
        %2900 = vmatprep.subr.mxu0 0.0
        %2901 = vmatpush1.msra.mxu0 0.0
        %2902 = vmatprep.subr.mxu0 0.0
        %2903 = vmatpush1.msra.mxu0 0.0
        %2904 = vmatprep.subr.mxu0 0.0
        %2905 = vmatpush1.msra.mxu0 0.0
        %2906 = vmatprep.subr.mxu0 0.0
        %2907 = vmatpush1.msra.mxu0 0.0
        %2908 = vmatprep.subr.mxu0 0.0
        %2909 = vmatpush1.msra.mxu0 0.0
        %2910 = vmatprep.subr.mxu0 0.0
        %2911 = vmatpush1.msra.mxu0 0.0
        %2912 = vmatprep.subr.mxu0 0.0
        %2913 = vmatpush1.msra.mxu0 0.0
        %2914 = vmatprep.subr.mxu0 0.0
        %2915 = vmatpush1.msra.mxu0 0.0
        %2916 = vmatprep.subr.mxu0 0.0
        %2917 = vmatpush1.msra.mxu0 0.0
        %2918 = vmatprep.subr.mxu0 0.0
        %2919 = vmatpush1.msra.mxu0 0.0
        %2920 = vmatprep.subr.mxu0 0.0
        %2921 = vmatpush1.msra.mxu0 0.0
        %2922 = vmatprep.subr.mxu0 0.0
        %2923 = vmatpush1.msra.mxu0 0.0
        %2924 = vmatprep.subr.mxu0 0.0
        %2925 = vmatpush1.msra.mxu0 0.0
        %2926 = vmatprep.subr.mxu0 0.0
        %2927 = vmatpush1.msra.mxu0 0.0
        %2928 = vmatprep.subr.mxu0 0.0
        %2929 = vmatpush1.msra.mxu0 0.0
        %2930 = vmatprep.subr.mxu0 0.0
        %2931 = vmatpush1.msra.mxu0 0.0
        %2932 = vmatprep.mubr.f32.mxu0 0.0
        %2933 = vmatmul.mubr.f32.gmra.mrb[0].mxu0 %v2863
        %v2934 = vpop.f32.mrb[0].mxu0
        %v2935 = vadd.f32 0.0, %v2934
        %v2936 = vpop.f32.mrb[0].mxu0
        %2937 = vdwg.mxu0
        %v2938 = vadd.f32 %v2857, %v2935
        %s2939 = scalar_lea.vmem %s9, 288
        %v2940 = vld [vmem:[%s2939] sm:$0xff]
        %v2941 = vld [vmem:[%s2939 + $0x8] sm:$0xff]
        %v2942 = vld [vmem:[%s2939 + $0x10] sm:$0xf]
        %v2943 = vrot.slane %v1964, 4
        %v2944 = vsel %vm1969, %v2943, 0
        %v2947 = vsel %vm1973, %v2942, 0
        %2949 = vmatprep.subr.mxu0 0.0
        %2950 = vmatpush1.msra.mxu0 %v2940
        %2951 = vmatprep.subr.mxu0 0.0
        %2952 = vmatpush1.msra.mxu0 %v2941
        %2953 = vmatprep.subr.mxu0 0.0
        %2954 = vmatpush1.msra.mxu0 %v2947
        %2955 = vmatprep.subr.mxu0 0.0
        %2956 = vmatpush1.msra.mxu0 0.0
        %2957 = vmatprep.subr.mxu0 0.0
        %2958 = vmatpush1.msra.mxu0 0.0
        %2959 = vmatprep.subr.mxu0 0.0
        %2960 = vmatpush1.msra.mxu0 0.0
        %2961 = vmatprep.subr.mxu0 0.0
        %2962 = vmatpush1.msra.mxu0 0.0
        %2963 = vmatprep.subr.mxu0 0.0
        %2964 = vmatpush1.msra.mxu0 0.0
        %2965 = vmatprep.subr.mxu0 0.0
        %2966 = vmatpush1.msra.mxu0 0.0
        %2967 = vmatprep.subr.mxu0 0.0
        %2968 = vmatpush1.msra.mxu0 0.0
        %2969 = vmatprep.subr.mxu0 0.0
        %2970 = vmatpush1.msra.mxu0 0.0
        %2971 = vmatprep.subr.mxu0 0.0
        %2972 = vmatpush1.msra.mxu0 0.0
        %2973 = vmatprep.subr.mxu0 0.0
        %2974 = vmatpush1.msra.mxu0 0.0
        %2975 = vmatprep.subr.mxu0 0.0
        %2976 = vmatpush1.msra.mxu0 0.0
        %2977 = vmatprep.subr.mxu0 0.0
        %2978 = vmatpush1.msra.mxu0 0.0
        %2979 = vmatprep.subr.mxu0 0.0
        %2980 = vmatpush1.msra.mxu0 0.0
        %2981 = vmatprep.subr.mxu0 0.0
        %2982 = vmatpush1.msra.mxu0 0.0
        %2983 = vmatprep.subr.mxu0 0.0
        %2984 = vmatpush1.msra.mxu0 0.0
        %2985 = vmatprep.subr.mxu0 0.0
        %2986 = vmatpush1.msra.mxu0 0.0
        %2987 = vmatprep.subr.mxu0 0.0
        %2988 = vmatpush1.msra.mxu0 0.0
        %2989 = vmatprep.subr.mxu0 0.0
        %2990 = vmatpush1.msra.mxu0 0.0
        %2991 = vmatprep.subr.mxu0 0.0
        %2992 = vmatpush1.msra.mxu0 0.0
        %2993 = vmatprep.subr.mxu0 0.0
        %2994 = vmatpush1.msra.mxu0 0.0
        %2995 = vmatprep.subr.mxu0 0.0
        %2996 = vmatpush1.msra.mxu0 0.0
        %2997 = vmatprep.subr.mxu0 0.0
        %2998 = vmatpush1.msra.mxu0 0.0
        %2999 = vmatprep.subr.mxu0 0.0
        %3000 = vmatpush1.msra.mxu0 0.0
        %3001 = vmatprep.subr.mxu0 0.0
        %3002 = vmatpush1.msra.mxu0 0.0
        %3003 = vmatprep.subr.mxu0 0.0
        %3004 = vmatpush1.msra.mxu0 0.0
        %3005 = vmatprep.subr.mxu0 0.0
        %3006 = vmatpush1.msra.mxu0 0.0
        %3007 = vmatprep.subr.mxu0 0.0
        %3008 = vmatpush1.msra.mxu0 0.0
        %3009 = vmatprep.subr.mxu0 0.0
        %3010 = vmatpush1.msra.mxu0 0.0
        %3011 = vmatprep.subr.mxu0 0.0
        %3012 = vmatpush1.msra.mxu0 0.0
        %3013 = vmatprep.mubr.f32.mxu0 0.0
        %3014 = vmatmul.mubr.f32.gmra.mrb[0].mxu0 %v2944
        %v3015 = vpop.f32.mrb[0].mxu0
        %v3016 = vadd.f32 0.0, %v3015
        %v3017 = vpop.f32.mrb[0].mxu0
        %3018 = vdwg.mxu0
        %v3019 = vadd.f32 %v2938, %v3016
        %s3020 = scalar_lea.vmem %s9, 312
        %v3021 = vld [vmem:[%s3020] sm:$0xff]
        %v3022 = vld [vmem:[%s3020 + $0x8] sm:$0xff]
        %v3023 = vld [vmem:[%s3020 + $0x10] sm:$0xf]
        %v3024 = vrot.slane %v1964, 5
        %v3025 = vsel %vm1969, %v3024, 0
        %v3028 = vsel %vm1973, %v3023, 0
        %3030 = vmatprep.subr.mxu0 0.0
        %3031 = vmatpush1.msra.mxu0 %v3021
        %3032 = vmatprep.subr.mxu0 0.0
        %3033 = vmatpush1.msra.mxu0 %v3022
        %3034 = vmatprep.subr.mxu0 0.0
        %3035 = vmatpush1.msra.mxu0 %v3028
        %3036 = vmatprep.subr.mxu0 0.0
        %3037 = vmatpush1.msra.mxu0 0.0
        %3038 = vmatprep.subr.mxu0 0.0
        %3039 = vmatpush1.msra.mxu0 0.0
        %3040 = vmatprep.subr.mxu0 0.0
        %3041 = vmatpush1.msra.mxu0 0.0
        %3042 = vmatprep.subr.mxu0 0.0
        %3043 = vmatpush1.msra.mxu0 0.0
        %3044 = vmatprep.subr.mxu0 0.0
        %3045 = vmatpush1.msra.mxu0 0.0
        %3046 = vmatprep.subr.mxu0 0.0
        %3047 = vmatpush1.msra.mxu0 0.0
        %3048 = vmatprep.subr.mxu0 0.0
        %3049 = vmatpush1.msra.mxu0 0.0
        %3050 = vmatprep.subr.mxu0 0.0
        %3051 = vmatpush1.msra.mxu0 0.0
        %3052 = vmatprep.subr.mxu0 0.0
        %3053 = vmatpush1.msra.mxu0 0.0
        %3054 = vmatprep.subr.mxu0 0.0
        %3055 = vmatpush1.msra.mxu0 0.0
        %3056 = vmatprep.subr.mxu0 0.0
        %3057 = vmatpush1.msra.mxu0 0.0
        %3058 = vmatprep.subr.mxu0 0.0
        %3059 = vmatpush1.msra.mxu0 0.0
        %3060 = vmatprep.subr.mxu0 0.0
        %3061 = vmatpush1.msra.mxu0 0.0
        %3062 = vmatprep.subr.mxu0 0.0
        %3063 = vmatpush1.msra.mxu0 0.0
        %3064 = vmatprep.subr.mxu0 0.0
        %3065 = vmatpush1.msra.mxu0 0.0
        %3066 = vmatprep.subr.mxu0 0.0
        %3067 = vmatpush1.msra.mxu0 0.0
        %3068 = vmatprep.subr.mxu0 0.0
        %3069 = vmatpush1.msra.mxu0 0.0
        %3070 = vmatprep.subr.mxu0 0.0
        %3071 = vmatpush1.msra.mxu0 0.0
        %3072 = vmatprep.subr.mxu0 0.0
        %3073 = vmatpush1.msra.mxu0 0.0
        %3074 = vmatprep.subr.mxu0 0.0
        %3075 = vmatpush1.msra.mxu0 0.0
        %3076 = vmatprep.subr.mxu0 0.0
        %3077 = vmatpush1.msra.mxu0 0.0
        %3078 = vmatprep.subr.mxu0 0.0
        %3079 = vmatpush1.msra.mxu0 0.0
        %3080 = vmatprep.subr.mxu0 0.0
        %3081 = vmatpush1.msra.mxu0 0.0
        %3082 = vmatprep.subr.mxu0 0.0
        %3083 = vmatpush1.msra.mxu0 0.0
        %3084 = vmatprep.subr.mxu0 0.0
        %3085 = vmatpush1.msra.mxu0 0.0
        %3086 = vmatprep.subr.mxu0 0.0
        %3087 = vmatpush1.msra.mxu0 0.0
        %3088 = vmatprep.subr.mxu0 0.0
        %3089 = vmatpush1.msra.mxu0 0.0
        %3090 = vmatprep.subr.mxu0 0.0
        %3091 = vmatpush1.msra.mxu0 0.0
        %3092 = vmatprep.subr.mxu0 0.0
        %3093 = vmatpush1.msra.mxu0 0.0
        %3094 = vmatprep.mubr.f32.mxu0 0.0
        %3095 = vmatmul.mubr.f32.gmra.mrb[0].mxu0 %v3025
        %v3096 = vpop.f32.mrb[0].mxu0
        %v3097 = vadd.f32 0.0, %v3096
        %v3098 = vpop.f32.mrb[0].mxu0
        %3099 = vdwg.mxu0
        %v3100 = vadd.f32 %v3019, %v3097
        %s3101 = scalar_lea.vmem %s9, 336
        %v3102 = vld [vmem:[%s3101] sm:$0xff]
        %v3103 = vld [vmem:[%s3101 + $0x8] sm:$0xff]
        %v3104 = vld [vmem:[%s3101 + $0x10] sm:$0xf]
        %v3105 = vrot.slane %v1964, 6
        %v3106 = vsel %vm1969, %v3105, 0
        %v3109 = vsel %vm1973, %v3104, 0
        %3111 = vmatprep.subr.mxu0 0.0
        %3112 = vmatpush1.msra.mxu0 %v3102
        %3113 = vmatprep.subr.mxu0 0.0
        %3114 = vmatpush1.msra.mxu0 %v3103
        %3115 = vmatprep.subr.mxu0 0.0
        %3116 = vmatpush1.msra.mxu0 %v3109
        %3117 = vmatprep.subr.mxu0 0.0
        %3118 = vmatpush1.msra.mxu0 0.0
        %3119 = vmatprep.subr.mxu0 0.0
        %3120 = vmatpush1.msra.mxu0 0.0
        %3121 = vmatprep.subr.mxu0 0.0
        %3122 = vmatpush1.msra.mxu0 0.0
        %3123 = vmatprep.subr.mxu0 0.0
        %3124 = vmatpush1.msra.mxu0 0.0
        %3125 = vmatprep.subr.mxu0 0.0
        %3126 = vmatpush1.msra.mxu0 0.0
        %3127 = vmatprep.subr.mxu0 0.0
        %3128 = vmatpush1.msra.mxu0 0.0
        %3129 = vmatprep.subr.mxu0 0.0
        %3130 = vmatpush1.msra.mxu0 0.0
        %3131 = vmatprep.subr.mxu0 0.0
        %3132 = vmatpush1.msra.mxu0 0.0
        %3133 = vmatprep.subr.mxu0 0.0
        %3134 = vmatpush1.msra.mxu0 0.0
        %3135 = vmatprep.subr.mxu0 0.0
        %3136 = vmatpush1.msra.mxu0 0.0
        %3137 = vmatprep.subr.mxu0 0.0
        %3138 = vmatpush1.msra.mxu0 0.0
        %3139 = vmatprep.subr.mxu0 0.0
        %3140 = vmatpush1.msra.mxu0 0.0
        %3141 = vmatprep.subr.mxu0 0.0
        %3142 = vmatpush1.msra.mxu0 0.0
        %3143 = vmatprep.subr.mxu0 0.0
        %3144 = vmatpush1.msra.mxu0 0.0
        %3145 = vmatprep.subr.mxu0 0.0
        %3146 = vmatpush1.msra.mxu0 0.0
        %3147 = vmatprep.subr.mxu0 0.0
        %3148 = vmatpush1.msra.mxu0 0.0
        %3149 = vmatprep.subr.mxu0 0.0
        %3150 = vmatpush1.msra.mxu0 0.0
        %3151 = vmatprep.subr.mxu0 0.0
        %3152 = vmatpush1.msra.mxu0 0.0
        %3153 = vmatprep.subr.mxu0 0.0
        %3154 = vmatpush1.msra.mxu0 0.0
        %3155 = vmatprep.subr.mxu0 0.0
        %3156 = vmatpush1.msra.mxu0 0.0
        %3157 = vmatprep.subr.mxu0 0.0
        %3158 = vmatpush1.msra.mxu0 0.0
        %3159 = vmatprep.subr.mxu0 0.0
        %3160 = vmatpush1.msra.mxu0 0.0
        %3161 = vmatprep.subr.mxu0 0.0
        %3162 = vmatpush1.msra.mxu0 0.0
        %3163 = vmatprep.subr.mxu0 0.0
        %3164 = vmatpush1.msra.mxu0 0.0
        %3165 = vmatprep.subr.mxu0 0.0
        %3166 = vmatpush1.msra.mxu0 0.0
        %3167 = vmatprep.subr.mxu0 0.0
        %3168 = vmatpush1.msra.mxu0 0.0
        %3169 = vmatprep.subr.mxu0 0.0
        %3170 = vmatpush1.msra.mxu0 0.0
        %3171 = vmatprep.subr.mxu0 0.0
        %3172 = vmatpush1.msra.mxu0 0.0
        %3173 = vmatprep.subr.mxu0 0.0
        %3174 = vmatpush1.msra.mxu0 0.0
        %3175 = vmatprep.mubr.f32.mxu0 0.0
        %3176 = vmatmul.mubr.f32.gmra.mrb[0].mxu0 %v3106
        %v3177 = vpop.f32.mrb[0].mxu0
        %v3178 = vadd.f32 0.0, %v3177
        %v3179 = vpop.f32.mrb[0].mxu0
        %3180 = vdwg.mxu0
        %v3181 = vadd.f32 %v3100, %v3178
        %3182 = vst.msk [vmem:[%s378] sm:$0x1] %vm745, %v3181
        %s3183 = sand.u32 %s269, 1
        %s3184 = scalar_lea.sflag [#allocation5], %s3183
        %s3185 = sand.u32 %s269, 1
        %s3186 = scalar_lea.vmem [#allocation4], %s3185
        // Predicated region
        $region65: #{tpu_custom_call.1} parent=63 // pred_check
          %p3187 = pneg %p279
        $region66: #{tpu_custom_call.1} parent=63 // pred_check_branch
          %3189 = sbr.rel (%p3187) target = $region68
        $region67: #{tpu_custom_call.1} parent=63 // pred_region
          %s3191 = ssub.s32 16, 16
          %3192 = vsyncadd %s3184, %s3191
          %s3193 = smul.addr %s25, 16
          %s3194 = scalar_lea.hbm %s11, %s3193
          %s3196 = sshll.u32 %s3186, 4
          %s3197 = int_to_ptr.vmem [resolvable:$true] %s3196
          %3199 = dma.vmem_to_hbm [thread:$0]  %s3197, 16, %s3194, %s3184
        $region68: #{tpu_custom_call.1} parent=63 // pred_fallthru
          _
      $region64: #{tpu_custom_call.1} parent=5 // pred_fallthru
        _
      %p3200 = scmp.le.s32.totalorder 2, %s20
      // Predicated region
      $region69: #{tpu_custom_call.1} parent=5 // pred_check
        %p3201 = pneg %p3200
      $region70: #{tpu_custom_call.1} parent=5 // pred_check_branch
        %3203 = sbr.rel (%p3201) target = $region72
      $region71: #{tpu_custom_call.1} parent=5 // pred_region
        %s3204 = ssub.s32 %s20, 2
        // Predicated region
        $region73: #{tpu_custom_call.1} parent=71 // pred_check
          %p3205 = pneg %p285
        $region74: #{tpu_custom_call.1} parent=71 // pred_check_branch
          %3207 = sbr.rel (%p3205) target = $region76
        $region75: #{tpu_custom_call.1} parent=71 // pred_region
          %s3208 = sand.u32 %s270, 1
          %s3209 = scalar_lea.sflag [#allocation5], %s3208
          %s3210 = sand.u32 %s270, 1
          %s3211 = scalar_lea.vmem [#allocation4], %s3210
          %3212 = dma.done %s3209, 16
        $region76: #{tpu_custom_call.1} parent=71 // pred_fallthru
          _
      $region72: #{tpu_custom_call.1} parent=5 // pred_fallthru
        _
    $region6: #{tpu_custom_call.1} parent=1 // loop_footer
      %s24 = sadd.s32 1, %s20
    $region7: #{tpu_custom_call.1} parent=1 // loop_footer_branch
      %19 = sbr.rel target = $region3
    $region8: #{tpu_custom_call.1} parent=1 // loop_exit
      _
    %3213 = vsyncpa [#allocation5], 1
    %s3214 = scalar_lea.sflag [#allocation5], 1
    %3215 = vsyncpa %s3214, 1

</llo_original>
